<compile_context>
chip_gen: v7x
topology: tpu7x:2x2x1
jax: 0.10.0
libtpu: 0.0.40
codegen_flags: <defaults>
</compile_context>

<pallas_src>
import functools

import jax
import jax.numpy as jnp
from jax import lax
from jax.experimental import pallas as pl
from jax.experimental.pallas import tpu as pltpu

_TM_MAX = 512                    # row tile (sublane) — big tiles amortize grid overhead
_LANE = 128                      # lane-dense output-channel padding
_VMEM_LIMIT = 48 * 1024 * 1024   # explicit scoped-VMEM budget (fits v7x 64 MiB/TC)


def _round_up(x, m):
    return (x + m - 1) // m * m


def _row_tile(m):
    return min(_TM_MAX, _round_up(max(m, 8), 8))


# ----------------------------- Pallas kernels -----------------------------

def _tap_gemm_kernel(x_ref, w_ref, s_ref, b_ref, o_ref, acc_ref):
    """One conv tap as a GEMM: acc += x_tap @ w_tap; fused BN affine + ReLU at
    the last tap.  Grid = (M_tiles, KK) with the tap axis last ("arbitrary")."""
    t = pl.program_id(1)

    @pl.when(t == 0)
    def _():
        acc_ref[...] = jnp.zeros_like(acc_ref)

    acc_ref[...] += jnp.dot(x_ref[0], w_ref[0],
                            preferred_element_type=jnp.float32)

    @pl.when(t == pl.num_programs(1) - 1)
    def _():
        y = jnp.maximum(acc_ref[...] * s_ref[...] + b_ref[...], 0.0)
        o_ref[...] = y.astype(o_ref.dtype)


def _tap_gemm_pool_kernel(x_ref, w_ref, s_ref, b_ref, co_ref, po_ref,
                          acc_ref, mx_ref):
    """branch3x3 conv fused with the 3x3/2 max-pool: both consume the same tap
    stream, so the tap block is read from HBM exactly once."""
    t = pl.program_id(1)

    @pl.when(t == 0)
    def _():
        acc_ref[...] = jnp.zeros_like(acc_ref)
        mx_ref[...] = jnp.full(mx_ref.shape, -jnp.inf, dtype=mx_ref.dtype)

    x = x_ref[0]
    acc_ref[...] += jnp.dot(x, w_ref[0], preferred_element_type=jnp.float32)
    mx_ref[...] = jnp.maximum(mx_ref[...], x.astype(jnp.float32))

    @pl.when(t == pl.num_programs(1) - 1)
    def _():
        y = jnp.maximum(acc_ref[...] * s_ref[...] + b_ref[...], 0.0)
        co_ref[...] = y.astype(co_ref.dtype)
        po_ref[...] = mx_ref[...].astype(po_ref.dtype)


# --------------------------- pallas_call wrappers ---------------------------

def conv_bn_relu(taps, w, scale, bias, tm, out_dtype=jnp.float32):
    """taps: (KK, Mp, Cin) bf16, w: (KK, Cin, Coutp) bf16 -> (Mp, Coutp)."""
    kk, mp, cin = taps.shape
    coutp = w.shape[-1]
    flops = 2 * mp * cin * coutp * kk
    bytes_accessed = (taps.size * 2 + w.size * 2 + scale.size * 8
                      + mp * coutp * jnp.dtype(out_dtype).itemsize)
    return pl.pallas_call(
        _tap_gemm_kernel,
        out_shape=jax.ShapeDtypeStruct((mp, coutp), out_dtype),
        grid=(mp // tm, kk),
        in_specs=[
            pl.BlockSpec((1, tm, cin), lambda i, t: (t, i, 0)),
            pl.BlockSpec((1, cin, coutp), lambda i, t: (t, 0, 0)),
            pl.BlockSpec((1, coutp), lambda i, t: (0, 0)),
            pl.BlockSpec((1, coutp), lambda i, t: (0, 0)),
        ],
        out_specs=pl.BlockSpec((tm, coutp), lambda i, t: (i, 0)),
        scratch_shapes=[pltpu.VMEM((tm, coutp), jnp.float32)],
        compiler_params=pltpu.CompilerParams(
            dimension_semantics=("parallel", "arbitrary"),
            vmem_limit_bytes=_VMEM_LIMIT),
        cost_estimate=pl.CostEstimate(flops=flops, transcendentals=0,
                                      bytes_accessed=bytes_accessed),
    )(taps, w, scale, bias)


def conv_bn_relu_pool(taps, w, scale, bias, tm):
    """Fused conv(3x3/2)+BN+ReLU and max-pool(3x3/2) over the same tap stack."""
    kk, mp, cin = taps.shape
    coutp = w.shape[-1]
    flops = 2 * mp * cin * coutp * kk
    bytes_accessed = (taps.size * 2 + w.size * 2 + scale.size * 8
                      + mp * coutp * 4 + mp * cin * 4)
    return pl.pallas_call(
        _tap_gemm_pool_kernel,
        out_shape=(jax.ShapeDtypeStruct((mp, coutp), jnp.float32),
                   jax.ShapeDtypeStruct((mp, cin), jnp.float32)),
        grid=(mp // tm, kk),
        in_specs=[
            pl.BlockSpec((1, tm, cin), lambda i, t: (t, i, 0)),
            pl.BlockSpec((1, cin, coutp), lambda i, t: (t, 0, 0)),
            pl.BlockSpec((1, coutp), lambda i, t: (0, 0)),
            pl.BlockSpec((1, coutp), lambda i, t: (0, 0)),
        ],
        out_specs=[
            pl.BlockSpec((tm, coutp), lambda i, t: (i, 0)),
            pl.BlockSpec((tm, cin), lambda i, t: (i, 0)),
        ],
        scratch_shapes=[pltpu.VMEM((tm, coutp), jnp.float32),
                        pltpu.VMEM((tm, cin), jnp.float32)],
        compiler_params=pltpu.CompilerParams(
            dimension_semantics=("parallel", "arbitrary"),
            vmem_limit_bytes=_VMEM_LIMIT),
        cost_estimate=pl.CostEstimate(flops=flops, transcendentals=0,
                                      bytes_accessed=bytes_accessed),
    )(taps, w, scale, bias)


# ------------------------------- JAX glue ----------------------------------

def _tap_stack(x, k, stride):
    """(N,H,W,C) -> bf16 tap stack (K*K, Mp, C), true M, row tile, (N,Ho,Wo)."""
    n, h, w, c = x.shape
    ho = (h - k) // stride + 1
    wo = (w - k) // stride + 1
    m = n * ho * wo
    views = []
    for kh in range(k):
        for kw in range(k):
            v = lax.slice(
                x, (0, kh, kw, 0),
                (n, kh + stride * (ho - 1) + 1, kw + stride * (wo - 1) + 1, c),
                (1, stride, stride, 1))
            views.append(v.reshape(m, c))
    taps = jnp.stack(views, axis=0).astype(jnp.bfloat16)  # (KK, M, C)
    tm = _row_tile(m)
    mp = _round_up(m, tm)
    if mp != m:
        taps = jnp.pad(taps, ((0, 0), (0, mp - m), (0, 0)))
    return taps, m, tm, (n, ho, wo)


def mixed6a_forward(x_nchw, params, *, outch):
    x = jnp.transpose(x_nchw, (0, 2, 3, 1)).astype(jnp.bfloat16)  # NCHW -> NHWC
    n, h, w, cin = x.shape

    # ---- branch3x3 (3x3 conv, stride 2) fused with the 3x3/2 max-pool -------
    taps1, m1, tm1, (_, ho, wo) = _tap_stack(x, 3, 2)
    b3x3, bpool = conv_bn_relu_pool(taps1, params["w_b3"], params["s_b3"],
                                    params["bi_b3"], tm1)
    b3x3 = b3x3[:m1, :outch].reshape(n, ho, wo, outch)
    bpool = bpool[:m1].reshape(n, ho, wo, cin)

    # ---- branch3x3dbl: 1x1 -> 3x3 (pad 1) -> 3x3 stride 2 (bf16 intermediates)
    m0 = n * h * w
    tm0 = _row_tile(m0)
    mp0 = _round_up(m0, tm0)
    t0 = x.reshape(1, m0, cin)
    if mp0 != m0:
        t0 = jnp.pad(t0, ((0, 0), (0, mp0 - m0), (0, 0)))
    y1 = conv_bn_relu(t0, params["w_d1"], params["s_d1"], params["bi_d1"],
                      tm0, out_dtype=jnp.bfloat16)
    y1 = y1[:m0, :64].reshape(n, h, w, 64)
    y1p = jnp.pad(y1, ((0, 0), (1, 1), (1, 1), (0, 0)))

    taps2, m2, tm2, _ = _tap_stack(y1p, 3, 1)
    y2 = conv_bn_relu(taps2, params["w_d2"], params["s_d2"], params["bi_d2"],
                      tm2, out_dtype=jnp.bfloat16)
    y2 = y2[:m2, :96].reshape(n, h, w, 96)

    taps3, m3, tm3, _ = _tap_stack(y2, 3, 2)
    bdbl = conv_bn_relu(taps3, params["w_d3"], params["s_d3"], params["bi_d3"],
                        tm3)
    bdbl = bdbl[:m3, :96].reshape(n, ho, wo, 96)

    out = jnp.concatenate([b3x3, bdbl, bpool], axis=-1)  # torch.cat(..., dim=1)
    return jnp.transpose(out, (0, 3, 1, 2))              # NHWC -> NCHW


# --------------------------- deterministic params ---------------------------

def _conv_w(key, cout, cin, k, coutp):
    w = 0.1 * jax.random.normal(key, (cout, cin, k, k), jnp.float32)   # OIHW
    w = jnp.transpose(w, (2, 3, 1, 0)).reshape(k * k, cin, cout)       # (KK,Cin,Cout)
    w = jnp.pad(w, ((0, 0), (0, 0), (0, coutp - cout)))                # lane-dense Cout
    return w.astype(jnp.bfloat16)


def _bn_fold(c, cp, eps=1e-5):
    i = jnp.arange(c, dtype=jnp.float32)
    gamma = 1.0 + 0.01 * i
    beta = 0.02 * i
    rmean = 0.01 * i
    rvar = 1.0 + 0.05 * i
    scale = gamma * lax.rsqrt(rvar + eps)
    bias = beta - rmean * scale
    return (jnp.pad(scale, (0, cp - c)).reshape(1, cp),
            jnp.pad(bias, (0, cp - c)).reshape(1, cp))


def init_params(key, inch, outch):
    ks = jax.random.split(key, 4)
    cp = max(_LANE, _round_up(outch, _LANE))
    p = {}
    p["w_b3"] = _conv_w(ks[0], outch, inch, 3, cp)
    p["s_b3"], p["bi_b3"] = _bn_fold(outch, cp)
    p["w_d1"] = _conv_w(ks[1], 64, inch, 1, _LANE)
    p["s_d1"], p["bi_d1"] = _bn_fold(64, _LANE)
    p["w_d2"] = _conv_w(ks[2], 96, 64, 3, _LANE)
    p["s_d2"], p["bi_d2"] = _bn_fold(96, _LANE)
    p["w_d3"] = _conv_w(ks[3], 96, 96, 3, _LANE)
    p["s_d3"], p["bi_d3"] = _bn_fold(96, _LANE)
    return p


if __name__ == "__main__":
    inch, outch = 4, 8
    key = jax.random.PRNGKey(0)
    kx, kp = jax.random.split(key)
    x = jax.random.normal(kx, (2, inch, 16, 16), jnp.float32)  # NCHW like PyTorch
    params = init_params(kp, inch, outch)
    fwd = jax.jit(functools.partial(mixed6a_forward, outch=outch))
    y = fwd(x, params)
    jax.block_until_ready(y)
    assert y.shape == (2, outch + 96 + inch, 7, 7), y.shape
    print("KERNEL_OK")
</pallas_src>

<mosaic_0001>
module attributes {stable_mosaic.version = 11 : i64} {
  func.func @_tap_gemm_kernel(%arg0: i32, %arg1: i32, %arg2: memref<1x512x4xbf16, #tpu.memory_space<vmem>>, %arg3: memref<1x4x128xbf16, #tpu.memory_space<vmem>>, %arg4: memref<1x128xf32, #tpu.memory_space<vmem>>, %arg5: memref<1x128xf32, #tpu.memory_space<vmem>>, %arg6: memref<512x128xbf16, #tpu.memory_space<vmem>>, %arg7: memref<512x128xf32, #tpu.memory_space<vmem>>) attributes {dimension_semantics = [#tpu.dimension_semantics<parallel>, #tpu.dimension_semantics<arbitrary>], iteration_bounds = array<i64: 1, 1>, scalar_prefetch = 0 : i64, scratch_operands = 1 : i64, tpu.core_type = #tpu.core_type<tc>, window_params = [{transform_indices = @transform_0, window_bounds = array<i64: 1, 512, 4>}, {transform_indices = @transform_1, window_bounds = array<i64: 1, 4, 128>}, {pipeline_mode = #tpu.pipeline_mode<synchronous>, transform_indices = @transform_2, window_bounds = array<i64: 1, 128>}, {pipeline_mode = #tpu.pipeline_mode<synchronous>, transform_indices = @transform_3, window_bounds = array<i64: 1, 128>}, {transform_indices = @transform_4, window_bounds = array<i64: 512, 128>}]} {
    %c0_i32 = arith.constant 0 : i32
    %0 = arith.cmpi eq, %arg1, %c0_i32 : i32
    %1 = arith.extui %0 : i1 to i32
    %c0_i32_0 = arith.constant 0 : i32
    %2 = arith.cmpi ne, %1, %c0_i32_0 : i32
    scf.if %2 {
      %cst_12 = arith.constant 0.000000e+00 : f32
      %14 = vector.broadcast %cst_12 : f32 to vector<512x128xf32>
      %c0_13 = arith.constant 0 : index
      %c0_14 = arith.constant 0 : index
      %15 = vector.load %arg7[%c0_13, %c0_14] : memref<512x128xf32, #tpu.memory_space<vmem>>, vector<512x128xf32>
      tpu.vector_store %arg7[%c0_13, %c0_14], %14 {strides = array<i32>} : memref<512x128xf32, #tpu.memory_space<vmem>>, vector<512x128xf32>,
    } else {
    }
    %c0 = arith.constant 0 : index
    %c0_1 = arith.constant 0 : index
    %3 = vector.load %arg7[%c0, %c0_1] : memref<512x128xf32, #tpu.memory_space<vmem>>, vector<512x128xf32>
    %c0_2 = arith.constant 0 : index
    %c0_3 = arith.constant 0 : index
    %c0_4 = arith.constant 0 : index
    %4 = vector.load %arg2[%c0_2, %c0_3, %c0_4] : memref<1x512x4xbf16, #tpu.memory_space<vmem>>, vector<1x512x4xbf16>
    %5 = vector.shape_cast %4 : vector<1x512x4xbf16> to vector<512x4xbf16>
    %c0_5 = arith.constant 0 : index
    %c0_6 = arith.constant 0 : index
    %c0_7 = arith.constant 0 : index
    %6 = vector.load %arg3[%c0_5, %c0_6, %c0_7] : memref<1x4x128xbf16, #tpu.memory_space<vmem>>, vector<1x4x128xbf16>
    %7 = vector.shape_cast %6 : vector<1x4x128xbf16> to vector<4x128xbf16>
    %cst = arith.constant dense<0.000000e+00> : vector<512x128xf32>
    %8 = tpu.matmul %5, %7, %cst {dimension_numbers = #tpu.dot_dimension_numbers<[1], [0], [0], [1], [0, 0, 1, 1], [], []>} : vector<512x4xbf16>, vector<4x128xbf16>, vector<512x128xf32> -> vector<512x128xf32>
    %9 = arith.addf %3, %8 : vector<512x128xf32>
    %c0_8 = arith.constant 0 : index
    %c0_9 = arith.constant 0 : index
    %10 = vector.load %arg7[%c0_8, %c0_9] : memref<512x128xf32, #tpu.memory_space<vmem>>, vector<512x128xf32>
    tpu.vector_store %arg7[%c0_8, %c0_9], %9 {strides = array<i32>} : memref<512x128xf32, #tpu.memory_space<vmem>>, vector<512x128xf32>,
    %c0_i32_10 = arith.constant 0 : i32
    %11 = arith.cmpi eq, %arg1, %c0_i32_10 : i32
    %12 = arith.extui %11 : i1 to i32
    %c0_i32_11 = arith.constant 0 : i32
    %13 = arith.cmpi ne, %12, %c0_i32_11 : i32
    scf.if %13 {
      %c0_12 = arith.constant 0 : index
      %c0_13 = arith.constant 0 : index
      %14 = vector.load %arg7[%c0_12, %c0_13] : memref<512x128xf32, #tpu.memory_space<vmem>>, vector<512x128xf32>
      %c0_14 = arith.constant 0 : index
      %c0_15 = arith.constant 0 : index
      %15 = vector.load %arg4[%c0_14, %c0_15] : memref<1x128xf32, #tpu.memory_space<vmem>>, vector<1x128xf32>
      %16 = vector.broadcast %15 : vector<1x128xf32> to vector<512x128xf32>
      %17 = arith.mulf %14, %16 : vector<512x128xf32>
      %c0_16 = arith.constant 0 : index
      %c0_17 = arith.constant 0 : index
      %18 = vector.load %arg5[%c0_16, %c0_17] : memref<1x128xf32, #tpu.memory_space<vmem>>, vector<1x128xf32>
      %19 = vector.broadcast %18 : vector<1x128xf32> to vector<512x128xf32>
      %20 = arith.addf %17, %19 : vector<512x128xf32>
      %cst_18 = arith.constant 0.000000e+00 : f32
      %21 = vector.broadcast %cst_18 : f32 to vector<512x128xf32>
      %22 = arith.maximumf %20, %21 : vector<512x128xf32>
      %23 = arith.truncf %22 : vector<512x128xf32> to vector<512x128xbf16>
      %c0_19 = arith.constant 0 : index
      %c0_20 = arith.constant 0 : index
      %24 = vector.load %arg6[%c0_19, %c0_20] : memref<512x128xbf16, #tpu.memory_space<vmem>>, vector<512x128xbf16>
      tpu.vector_store %arg6[%c0_19, %c0_20], %23 {strides = array<i32>} : memref<512x128xbf16, #tpu.memory_space<vmem>>, vector<512x128xbf16>,
    } else {
    }
    return
  }
  func.func @transform_0(%arg0: i32, %arg1: i32) -> (i32, i32, i32) {
    %c0_i32 = arith.constant 0 : i32
    %c0_i32_0 = arith.constant 0 : i32
    return %arg1, %arg0, %c0_i32 : i32, i32, i32
  }
  func.func @transform_1(%arg0: i32, %arg1: i32) -> (i32, i32, i32) {
    %c0_i32 = arith.constant 0 : i32
    %c0_i32_0 = arith.constant 0 : i32
    %c0_i32_1 = arith.constant 0 : i32
    return %arg1, %c0_i32, %c0_i32_0 : i32, i32, i32
  }
  func.func @transform_2(%arg0: i32, %arg1: i32) -> (i32, i32) {
    %c0_i32 = arith.constant 0 : i32
    %c0_i32_0 = arith.constant 0 : i32
    %c0_i32_1 = arith.constant 0 : i32
    return %c0_i32, %c0_i32_0 : i32, i32
  }
  func.func @transform_3(%arg0: i32, %arg1: i32) -> (i32, i32) {
    %c0_i32 = arith.constant 0 : i32
    %c0_i32_0 = arith.constant 0 : i32
    %c0_i32_1 = arith.constant 0 : i32
    return %c0_i32, %c0_i32_0 : i32, i32
  }
  func.func @transform_4(%arg0: i32, %arg1: i32) -> (i32, i32) {
    %c0_i32 = arith.constant 0 : i32
    %c0_i32_0 = arith.constant 0 : i32
    return %arg0, %c0_i32 : i32, i32
  }
}

module attributes {stable_mosaic.version = 11 : i64} {
  func.func @_tap_gemm_kernel(%arg0: i32, %arg1: i32, %arg2: memref<1x512x64xbf16, #tpu.memory_space<vmem>>, %arg3: memref<1x64x128xbf16, #tpu.memory_space<vmem>>, %arg4: memref<1x128xf32, #tpu.memory_space<vmem>>, %arg5: memref<1x128xf32, #tpu.memory_space<vmem>>, %arg6: memref<512x128xbf16, #tpu.memory_space<vmem>>, %arg7: memref<512x128xf32, #tpu.memory_space<vmem>>) attributes {dimension_semantics = [#tpu.dimension_semantics<parallel>, #tpu.dimension_semantics<arbitrary>], iteration_bounds = array<i64: 1, 9>, scalar_prefetch = 0 : i64, scratch_operands = 1 : i64, tpu.core_type = #tpu.core_type<tc>, window_params = [{transform_indices = @transform_0, window_bounds = array<i64: 1, 512, 64>}, {transform_indices = @transform_1, window_bounds = array<i64: 1, 64, 128>}, {pipeline_mode = #tpu.pipeline_mode<synchronous>, transform_indices = @transform_2, window_bounds = array<i64: 1, 128>}, {pipeline_mode = #tpu.pipeline_mode<synchronous>, transform_indices = @transform_3, window_bounds = array<i64: 1, 128>}, {transform_indices = @transform_4, window_bounds = array<i64: 512, 128>}]} {
    %c0_i32 = arith.constant 0 : i32
    %0 = arith.cmpi eq, %arg1, %c0_i32 : i32
    %1 = arith.extui %0 : i1 to i32
    %c0_i32_0 = arith.constant 0 : i32
    %2 = arith.cmpi ne, %1, %c0_i32_0 : i32
    scf.if %2 {
      %cst_11 = arith.constant 0.000000e+00 : f32
      %14 = vector.broadcast %cst_11 : f32 to vector<512x128xf32>
      %c0_12 = arith.constant 0 : index
      %c0_13 = arith.constant 0 : index
      %15 = vector.load %arg7[%c0_12, %c0_13] : memref<512x128xf32, #tpu.memory_space<vmem>>, vector<512x128xf32>
      tpu.vector_store %arg7[%c0_12, %c0_13], %14 {strides = array<i32>} : memref<512x128xf32, #tpu.memory_space<vmem>>, vector<512x128xf32>,
    } else {
    }
    %c0 = arith.constant 0 : index
    %c0_1 = arith.constant 0 : index
    %3 = vector.load %arg7[%c0, %c0_1] : memref<512x128xf32, #tpu.memory_space<vmem>>, vector<512x128xf32>
    %c0_2 = arith.constant 0 : index
    %c0_3 = arith.constant 0 : index
    %c0_4 = arith.constant 0 : index
    %4 = vector.load %arg2[%c0_2, %c0_3, %c0_4] : memref<1x512x64xbf16, #tpu.memory_space<vmem>>, vector<1x512x64xbf16>
    %5 = vector.shape_cast %4 : vector<1x512x64xbf16> to vector<512x64xbf16>
    %c0_5 = arith.constant 0 : index
    %c0_6 = arith.constant 0 : index
    %c0_7 = arith.constant 0 : index
    %6 = vector.load %arg3[%c0_5, %c0_6, %c0_7] : memref<1x64x128xbf16, #tpu.memory_space<vmem>>, vector<1x64x128xbf16>
    %7 = vector.shape_cast %6 : vector<1x64x128xbf16> to vector<64x128xbf16>
    %cst = arith.constant dense<0.000000e+00> : vector<512x128xf32>
    %8 = tpu.matmul %5, %7, %cst {dimension_numbers = #tpu.dot_dimension_numbers<[1], [0], [0], [1], [0, 0, 1, 1], [], []>} : vector<512x64xbf16>, vector<64x128xbf16>, vector<512x128xf32> -> vector<512x128xf32>
    %9 = arith.addf %3, %8 : vector<512x128xf32>
    %c0_8 = arith.constant 0 : index
    %c0_9 = arith.constant 0 : index
    %10 = vector.load %arg7[%c0_8, %c0_9] : memref<512x128xf32, #tpu.memory_space<vmem>>, vector<512x128xf32>
    tpu.vector_store %arg7[%c0_8, %c0_9], %9 {strides = array<i32>} : memref<512x128xf32, #tpu.memory_space<vmem>>, vector<512x128xf32>,
    %c8_i32 = arith.constant 8 : i32
    %11 = arith.cmpi eq, %arg1, %c8_i32 : i32
    %12 = arith.extui %11 : i1 to i32
    %c0_i32_10 = arith.constant 0 : i32
    %13 = arith.cmpi ne, %12, %c0_i32_10 : i32
    scf.if %13 {
      %c0_11 = arith.constant 0 : index
      %c0_12 = arith.constant 0 : index
      %14 = vector.load %arg7[%c0_11, %c0_12] : memref<512x128xf32, #tpu.memory_space<vmem>>, vector<512x128xf32>
      %c0_13 = arith.constant 0 : index
      %c0_14 = arith.constant 0 : index
      %15 = vector.load %arg4[%c0_13, %c0_14] : memref<1x128xf32, #tpu.memory_space<vmem>>, vector<1x128xf32>
      %16 = vector.broadcast %15 : vector<1x128xf32> to vector<512x128xf32>
      %17 = arith.mulf %14, %16 : vector<512x128xf32>
      %c0_15 = arith.constant 0 : index
      %c0_16 = arith.constant 0 : index
      %18 = vector.load %arg5[%c0_15, %c0_16] : memref<1x128xf32, #tpu.memory_space<vmem>>, vector<1x128xf32>
      %19 = vector.broadcast %18 : vector<1x128xf32> to vector<512x128xf32>
      %20 = arith.addf %17, %19 : vector<512x128xf32>
      %cst_17 = arith.constant 0.000000e+00 : f32
      %21 = vector.broadcast %cst_17 : f32 to vector<512x128xf32>
      %22 = arith.maximumf %20, %21 : vector<512x128xf32>
      %23 = arith.truncf %22 : vector<512x128xf32> to vector<512x128xbf16>
      %c0_18 = arith.constant 0 : index
      %c0_19 = arith.constant 0 : index
      %24 = vector.load %arg6[%c0_18, %c0_19] : memref<512x128xbf16, #tpu.memory_space<vmem>>, vector<512x128xbf16>
      tpu.vector_store %arg6[%c0_18, %c0_19], %23 {strides = array<i32>} : memref<512x128xbf16, #tpu.memory_space<vmem>>, vector<512x128xbf16>,
    } else {
    }
    return
  }
  func.func @transform_0(%arg0: i32, %arg1: i32) -> (i32, i32, i32) {
    %c0_i32 = arith.constant 0 : i32
    %c0_i32_0 = arith.constant 0 : i32
    return %arg1, %arg0, %c0_i32 : i32, i32, i32
  }
  func.func @transform_1(%arg0: i32, %arg1: i32) -> (i32, i32, i32) {
    %c0_i32 = arith.constant 0 : i32
    %c0_i32_0 = arith.constant 0 : i32
    %c0_i32_1 = arith.constant 0 : i32
    return %arg1, %c0_i32, %c0_i32_0 : i32, i32, i32
  }
  func.func @transform_2(%arg0: i32, %arg1: i32) -> (i32, i32) {
    %c0_i32 = arith.constant 0 : i32
    %c0_i32_0 = arith.constant 0 : i32
    %c0_i32_1 = arith.constant 0 : i32
    return %c0_i32, %c0_i32_0 : i32, i32
  }
  func.func @transform_3(%arg0: i32, %arg1: i32) -> (i32, i32) {
    %c0_i32 = arith.constant 0 : i32
    %c0_i32_0 = arith.constant 0 : i32
    %c0_i32_1 = arith.constant 0 : i32
    return %c0_i32, %c0_i32_0 : i32, i32
  }
  func.func @transform_4(%arg0: i32, %arg1: i32) -> (i32, i32) {
    %c0_i32 = arith.constant 0 : i32
    %c0_i32_0 = arith.constant 0 : i32
    return %arg0, %c0_i32 : i32, i32
  }
}

module attributes {stable_mosaic.version = 11 : i64} {
  func.func @_tap_gemm_kernel(%arg0: i32, %arg1: i32, %arg2: memref<1x104x96xbf16, #tpu.memory_space<vmem>>, %arg3: memref<1x96x128xbf16, #tpu.memory_space<vmem>>, %arg4: memref<1x128xf32, #tpu.memory_space<vmem>>, %arg5: memref<1x128xf32, #tpu.memory_space<vmem>>, %arg6: memref<104x128xf32, #tpu.memory_space<vmem>>, %arg7: memref<104x128xf32, #tpu.memory_space<vmem>>) attributes {dimension_semantics = [#tpu.dimension_semantics<parallel>, #tpu.dimension_semantics<arbitrary>], iteration_bounds = array<i64: 1, 9>, scalar_prefetch = 0 : i64, scratch_operands = 1 : i64, tpu.core_type = #tpu.core_type<tc>, window_params = [{transform_indices = @transform_0, window_bounds = array<i64: 1, 104, 96>}, {transform_indices = @transform_1, window_bounds = array<i64: 1, 96, 128>}, {pipeline_mode = #tpu.pipeline_mode<synchronous>, transform_indices = @transform_2, window_bounds = array<i64: 1, 128>}, {pipeline_mode = #tpu.pipeline_mode<synchronous>, transform_indices = @transform_3, window_bounds = array<i64: 1, 128>}, {transform_indices = @transform_4, window_bounds = array<i64: 104, 128>}]} {
    %c0_i32 = arith.constant 0 : i32
    %0 = arith.cmpi eq, %arg1, %c0_i32 : i32
    %1 = arith.extui %0 : i1 to i32
    %c0_i32_0 = arith.constant 0 : i32
    %2 = arith.cmpi ne, %1, %c0_i32_0 : i32
    scf.if %2 {
      %cst_11 = arith.constant 0.000000e+00 : f32
      %14 = vector.broadcast %cst_11 : f32 to vector<104x128xf32>
      %c0_12 = arith.constant 0 : index
      %c0_13 = arith.constant 0 : index
      %15 = vector.load %arg7[%c0_12, %c0_13] : memref<104x128xf32, #tpu.memory_space<vmem>>, vector<104x128xf32>
      tpu.vector_store %arg7[%c0_12, %c0_13], %14 {strides = array<i32>} : memref<104x128xf32, #tpu.memory_space<vmem>>, vector<104x128xf32>,
    } else {
    }
    %c0 = arith.constant 0 : index
    %c0_1 = arith.constant 0 : index
    %3 = vector.load %arg7[%c0, %c0_1] : memref<104x128xf32, #tpu.memory_space<vmem>>, vector<104x128xf32>
    %c0_2 = arith.constant 0 : index
    %c0_3 = arith.constant 0 : index
    %c0_4 = arith.constant 0 : index
    %4 = vector.load %arg2[%c0_2, %c0_3, %c0_4] : memref<1x104x96xbf16, #tpu.memory_space<vmem>>, vector<1x104x96xbf16>
    %5 = vector.shape_cast %4 : vector<1x104x96xbf16> to vector<104x96xbf16>
    %c0_5 = arith.constant 0 : index
    %c0_6 = arith.constant 0 : index
    %c0_7 = arith.constant 0 : index
    %6 = vector.load %arg3[%c0_5, %c0_6, %c0_7] : memref<1x96x128xbf16, #tpu.memory_space<vmem>>, vector<1x96x128xbf16>
    %7 = vector.shape_cast %6 : vector<1x96x128xbf16> to vector<96x128xbf16>
    %cst = arith.constant dense<0.000000e+00> : vector<104x128xf32>
    %8 = tpu.matmul %5, %7, %cst {dimension_numbers = #tpu.dot_dimension_numbers<[1], [0], [0], [1], [0, 0, 1, 1], [], []>} : vector<104x96xbf16>, vector<96x128xbf16>, vector<104x128xf32> -> vector<104x128xf32>
    %9 = arith.addf %3, %8 : vector<104x128xf32>
    %c0_8 = arith.constant 0 : index
    %c0_9 = arith.constant 0 : index
    %10 = vector.load %arg7[%c0_8, %c0_9] : memref<104x128xf32, #tpu.memory_space<vmem>>, vector<104x128xf32>
    tpu.vector_store %arg7[%c0_8, %c0_9], %9 {strides = array<i32>} : memref<104x128xf32, #tpu.memory_space<vmem>>, vector<104x128xf32>,
    %c8_i32 = arith.constant 8 : i32
    %11 = arith.cmpi eq, %arg1, %c8_i32 : i32
    %12 = arith.extui %11 : i1 to i32
    %c0_i32_10 = arith.constant 0 : i32
    %13 = arith.cmpi ne, %12, %c0_i32_10 : i32
    scf.if %13 {
      %c0_11 = arith.constant 0 : index
      %c0_12 = arith.constant 0 : index
      %14 = vector.load %arg7[%c0_11, %c0_12] : memref<104x128xf32, #tpu.memory_space<vmem>>, vector<104x128xf32>
      %c0_13 = arith.constant 0 : index
      %c0_14 = arith.constant 0 : index
      %15 = vector.load %arg4[%c0_13, %c0_14] : memref<1x128xf32, #tpu.memory_space<vmem>>, vector<1x128xf32>
      %16 = vector.broadcast %15 : vector<1x128xf32> to vector<104x128xf32>
      %17 = arith.mulf %14, %16 : vector<104x128xf32>
      %c0_15 = arith.constant 0 : index
      %c0_16 = arith.constant 0 : index
      %18 = vector.load %arg5[%c0_15, %c0_16] : memref<1x128xf32, #tpu.memory_space<vmem>>, vector<1x128xf32>
      %19 = vector.broadcast %18 : vector<1x128xf32> to vector<104x128xf32>
      %20 = arith.addf %17, %19 : vector<104x128xf32>
      %cst_17 = arith.constant 0.000000e+00 : f32
      %21 = vector.broadcast %cst_17 : f32 to vector<104x128xf32>
      %22 = arith.maximumf %20, %21 : vector<104x128xf32>
      %c0_18 = arith.constant 0 : index
      %c0_19 = arith.constant 0 : index
      %23 = vector.load %arg6[%c0_18, %c0_19] : memref<104x128xf32, #tpu.memory_space<vmem>>, vector<104x128xf32>
      tpu.vector_store %arg6[%c0_18, %c0_19], %22 {strides = array<i32>} : memref<104x128xf32, #tpu.memory_space<vmem>>, vector<104x128xf32>,
    } else {
    }
    return
  }
  func.func @transform_0(%arg0: i32, %arg1: i32) -> (i32, i32, i32) {
    %c0_i32 = arith.constant 0 : i32
    %c0_i32_0 = arith.constant 0 : i32
    return %arg1, %arg0, %c0_i32 : i32, i32, i32
  }
  func.func @transform_1(%arg0: i32, %arg1: i32) -> (i32, i32, i32) {
    %c0_i32 = arith.constant 0 : i32
    %c0_i32_0 = arith.constant 0 : i32
    %c0_i32_1 = arith.constant 0 : i32
    return %arg1, %c0_i32, %c0_i32_0 : i32, i32, i32
  }
  func.func @transform_2(%arg0: i32, %arg1: i32) -> (i32, i32) {
    %c0_i32 = arith.constant 0 : i32
    %c0_i32_0 = arith.constant 0 : i32
    %c0_i32_1 = arith.constant 0 : i32
    return %c0_i32, %c0_i32_0 : i32, i32
  }
  func.func @transform_3(%arg0: i32, %arg1: i32) -> (i32, i32) {
    %c0_i32 = arith.constant 0 : i32
    %c0_i32_0 = arith.constant 0 : i32
    %c0_i32_1 = arith.constant 0 : i32
    return %c0_i32, %c0_i32_0 : i32, i32
  }
  func.func @transform_4(%arg0: i32, %arg1: i32) -> (i32, i32) {
    %c0_i32 = arith.constant 0 : i32
    %c0_i32_0 = arith.constant 0 : i32
    return %arg0, %c0_i32 : i32, i32
  }
}

module attributes {stable_mosaic.version = 11 : i64} {
  func.func @_tap_gemm_pool_kernel(%arg0: i32, %arg1: i32, %arg2: memref<1x104x4xbf16, #tpu.memory_space<vmem>>, %arg3: memref<1x4x128xbf16, #tpu.memory_space<vmem>>, %arg4: memref<1x128xf32, #tpu.memory_space<vmem>>, %arg5: memref<1x128xf32, #tpu.memory_space<vmem>>, %arg6: memref<104x128xf32, #tpu.memory_space<vmem>>, %arg7: memref<104x4xf32, #tpu.memory_space<vmem>>, %arg8: memref<104x128xf32, #tpu.memory_space<vmem>>, %arg9: memref<104x4xf32, #tpu.memory_space<vmem>>) attributes {dimension_semantics = [#tpu.dimension_semantics<parallel>, #tpu.dimension_semantics<arbitrary>], iteration_bounds = array<i64: 1, 9>, scalar_prefetch = 0 : i64, scratch_operands = 2 : i64, tpu.core_type = #tpu.core_type<tc>, window_params = [{transform_indices = @transform_0, window_bounds = array<i64: 1, 104, 4>}, {transform_indices = @transform_1, window_bounds = array<i64: 1, 4, 128>}, {pipeline_mode = #tpu.pipeline_mode<synchronous>, transform_indices = @transform_2, window_bounds = array<i64: 1, 128>}, {pipeline_mode = #tpu.pipeline_mode<synchronous>, transform_indices = @transform_3, window_bounds = array<i64: 1, 128>}, {transform_indices = @transform_4, window_bounds = array<i64: 104, 128>}, {transform_indices = @transform_5, window_bounds = array<i64: 104, 4>}]} {
    %c0_i32 = arith.constant 0 : i32
    %0 = arith.cmpi eq, %arg1, %c0_i32 : i32
    %1 = arith.extui %0 : i1 to i32
    %c0_i32_0 = arith.constant 0 : i32
    %2 = arith.cmpi ne, %1, %c0_i32_0 : i32
    scf.if %2 {
      %cst_15 = arith.constant 0.000000e+00 : f32
      %18 = vector.broadcast %cst_15 : f32 to vector<104x128xf32>
      %c0_16 = arith.constant 0 : index
      %c0_17 = arith.constant 0 : index
      %19 = vector.load %arg8[%c0_16, %c0_17] : memref<104x128xf32, #tpu.memory_space<vmem>>, vector<104x128xf32>
      tpu.vector_store %arg8[%c0_16, %c0_17], %18 {strides = array<i32>} : memref<104x128xf32, #tpu.memory_space<vmem>>, vector<104x128xf32>,
      %cst_18 = arith.constant 0xFF800000 : f32
      %20 = vector.broadcast %cst_18 : f32 to vector<104x4xf32>
      %c0_19 = arith.constant 0 : index
      %c0_20 = arith.constant 0 : index
      %21 = vector.load %arg9[%c0_19, %c0_20] : memref<104x4xf32, #tpu.memory_space<vmem>>, vector<104x4xf32>
      tpu.vector_store %arg9[%c0_19, %c0_20], %20 {strides = array<i32>} : memref<104x4xf32, #tpu.memory_space<vmem>>, vector<104x4xf32>,
    } else {
    }
    %c0 = arith.constant 0 : index
    %c0_1 = arith.constant 0 : index
    %c0_2 = arith.constant 0 : index
    %3 = vector.load %arg2[%c0, %c0_1, %c0_2] : memref<1x104x4xbf16, #tpu.memory_space<vmem>>, vector<1x104x4xbf16>
    %4 = vector.shape_cast %3 : vector<1x104x4xbf16> to vector<104x4xbf16>
    %c0_3 = arith.constant 0 : index
    %c0_4 = arith.constant 0 : index
    %5 = vector.load %arg8[%c0_3, %c0_4] : memref<104x128xf32, #tpu.memory_space<vmem>>, vector<104x128xf32>
    %c0_5 = arith.constant 0 : index
    %c0_6 = arith.constant 0 : index
    %c0_7 = arith.constant 0 : index
    %6 = vector.load %arg3[%c0_5, %c0_6, %c0_7] : memref<1x4x128xbf16, #tpu.memory_space<vmem>>, vector<1x4x128xbf16>
    %7 = vector.shape_cast %6 : vector<1x4x128xbf16> to vector<4x128xbf16>
    %cst = arith.constant dense<0.000000e+00> : vector<104x128xf32>
    %8 = tpu.matmul %4, %7, %cst {dimension_numbers = #tpu.dot_dimension_numbers<[1], [0], [0], [1], [0, 0, 1, 1], [], []>} : vector<104x4xbf16>, vector<4x128xbf16>, vector<104x128xf32> -> vector<104x128xf32>
    %9 = arith.addf %5, %8 : vector<104x128xf32>
    %c0_8 = arith.constant 0 : index
    %c0_9 = arith.constant 0 : index
    %10 = vector.load %arg8[%c0_8, %c0_9] : memref<104x128xf32, #tpu.memory_space<vmem>>, vector<104x128xf32>
    tpu.vector_store %arg8[%c0_8, %c0_9], %9 {strides = array<i32>} : memref<104x128xf32, #tpu.memory_space<vmem>>, vector<104x128xf32>,
    %c0_10 = arith.constant 0 : index
    %c0_11 = arith.constant 0 : index
    %11 = vector.load %arg9[%c0_10, %c0_11] : memref<104x4xf32, #tpu.memory_space<vmem>>, vector<104x4xf32>
    %12 = arith.extf %4 : vector<104x4xbf16> to vector<104x4xf32>
    %13 = arith.maximumf %11, %12 : vector<104x4xf32>
    %c0_12 = arith.constant 0 : index
    %c0_13 = arith.constant 0 : index
    %14 = vector.load %arg9[%c0_12, %c0_13] : memref<104x4xf32, #tpu.memory_space<vmem>>, vector<104x4xf32>
    tpu.vector_store %arg9[%c0_12, %c0_13], %13 {strides = array<i32>} : memref<104x4xf32, #tpu.memory_space<vmem>>, vector<104x4xf32>,
    %c8_i32 = arith.constant 8 : i32
    %15 = arith.cmpi eq, %arg1, %c8_i32 : i32
    %16 = arith.extui %15 : i1 to i32
    %c0_i32_14 = arith.constant 0 : i32
    %17 = arith.cmpi ne, %16, %c0_i32_14 : i32
    scf.if %17 {
      %c0_15 = arith.constant 0 : index
      %c0_16 = arith.constant 0 : index
      %18 = vector.load %arg8[%c0_15, %c0_16] : memref<104x128xf32, #tpu.memory_space<vmem>>, vector<104x128xf32>
      %c0_17 = arith.constant 0 : index
      %c0_18 = arith.constant 0 : index
      %19 = vector.load %arg4[%c0_17, %c0_18] : memref<1x128xf32, #tpu.memory_space<vmem>>, vector<1x128xf32>
      %20 = vector.broadcast %19 : vector<1x128xf32> to vector<104x128xf32>
      %21 = arith.mulf %18, %20 : vector<104x128xf32>
      %c0_19 = arith.constant 0 : index
      %c0_20 = arith.constant 0 : index
      %22 = vector.load %arg5[%c0_19, %c0_20] : memref<1x128xf32, #tpu.memory_space<vmem>>, vector<1x128xf32>
      %23 = vector.broadcast %22 : vector<1x128xf32> to vector<104x128xf32>
      %24 = arith.addf %21, %23 : vector<104x128xf32>
      %cst_21 = arith.constant 0.000000e+00 : f32
      %25 = vector.broadcast %cst_21 : f32 to vector<104x128xf32>
      %26 = arith.maximumf %24, %25 : vector<104x128xf32>
      %c0_22 = arith.constant 0 : index
      %c0_23 = arith.constant 0 : index
      %27 = vector.load %arg6[%c0_22, %c0_23] : memref<104x128xf32, #tpu.memory_space<vmem>>, vector<104x128xf32>
      tpu.vector_store %arg6[%c0_22, %c0_23], %26 {strides = array<i32>} : memref<104x128xf32, #tpu.memory_space<vmem>>, vector<104x128xf32>,
      %c0_24 = arith.constant 0 : index
      %c0_25 = arith.constant 0 : index
      %28 = vector.load %arg9[%c0_24, %c0_25] : memref<104x4xf32, #tpu.memory_space<vmem>>, vector<104x4xf32>
      %c0_26 = arith.constant 0 : index
      %c0_27 = arith.constant 0 : index
      %29 = vector.load %arg7[%c0_26, %c0_27] : memref<104x4xf32, #tpu.memory_space<vmem>>, vector<104x4xf32>
      tpu.vector_store %arg7[%c0_26, %c0_27], %28 {strides = array<i32>} : memref<104x4xf32, #tpu.memory_space<vmem>>, vector<104x4xf32>,
    } else {
    }
    return
  }
  func.func @transform_0(%arg0: i32, %arg1: i32) -> (i32, i32, i32) {
    %c0_i32 = arith.constant 0 : i32
    %c0_i32_0 = arith.constant 0 : i32
    return %arg1, %arg0, %c0_i32 : i32, i32, i32
  }
  func.func @transform_1(%arg0: i32, %arg1: i32) -> (i32, i32, i32) {
    %c0_i32 = arith.constant 0 : i32
    %c0_i32_0 = arith.constant 0 : i32
    %c0_i32_1 = arith.constant 0 : i32
    return %arg1, %c0_i32, %c0_i32_0 : i32, i32, i32
  }
  func.func @transform_2(%arg0: i32, %arg1: i32) -> (i32, i32) {
    %c0_i32 = arith.constant 0 : i32
    %c0_i32_0 = arith.constant 0 : i32
    %c0_i32_1 = arith.constant 0 : i32
    return %c0_i32, %c0_i32_0 : i32, i32
  }
  func.func @transform_3(%arg0: i32, %arg1: i32) -> (i32, i32) {
    %c0_i32 = arith.constant 0 : i32
    %c0_i32_0 = arith.constant 0 : i32
    %c0_i32_1 = arith.constant 0 : i32
    return %c0_i32, %c0_i32_0 : i32, i32
  }
  func.func @transform_4(%arg0: i32, %arg1: i32) -> (i32, i32) {
    %c0_i32 = arith.constant 0 : i32
    %c0_i32_0 = arith.constant 0 : i32
    return %arg0, %c0_i32 : i32, i32
  }
  func.func @transform_5(%arg0: i32, %arg1: i32) -> (i32, i32) {
    %c0_i32 = arith.constant 0 : i32
    %c0_i32_0 = arith.constant 0 : i32
    return %arg0, %c0_i32 : i32, i32
  }
}

</mosaic_0001>

<llo_original>
// kernel: mixed6a_forward.5
$region0: #{mixed6a_forward.5}
  #allocation0 [shape = 'u32[]', space=smem, size = 0x4, offset = 0x4, fixed_abs, tag = 'smem constant byte address 0x4 - core index']
  #allocation1 [shape = 'u32[144,128]{1,0:T(1,128)}', space=vmem, size = 0x12000, scoped, tag = 'internal scratch']
  #allocation2 [shape = 'f32[512,128]{1,0:T(8,128)}', space=vmem, size = 0x40000, scoped, tag = 'scratch operand']
  %s0 = inlined_call_operand.vmem [shape: bf16[1,512,4], index: 0, kind: input, shape index: {}]
  %s1 = inlined_call_operand.hbm [shape: bf16[1,4,128], index: 1, kind: input, shape index: {}]
  %s2 = inlined_call_operand.hbm [shape: f32[1,128], index: 2, kind: input, shape index: {}]
  %s3 = inlined_call_operand.hbm [shape: f32[1,128], index: 3, kind: input, shape index: {}]
  %s4 = inlined_call_operand.vmem [shape: bf16[512,128], index: 4, kind: output, shape index: {}]
  %s5 = sld [smem:[#allocation0]]
  $region46: #{mixed6a_forward.5} parent=0
    _
  %s7 = ssub.s32 1, %s5
  %s8 = scalar_select 0, %s7, %s5
  $region1: #{mixed6a_forward.5} parent=0
    #allocation3 [shape = 'u8[1024]{0}', space=vmem, size = 0x400, scoped, tag = 'input window, operand 1, single buffered']
    #allocation4 [shape = 's32[1]{0}', space=sflag, size = 0x4, scoped, tag = 'scoped memory for mixed6a_forward.5']
    #allocation5 [shape = 'u8[512]{0}', space=vmem, size = 0x400, scoped, tag = 'input window, operand 2, single buffered']
    #allocation6 [shape = 's32[1]{0}', space=sflag, size = 0x4, scoped, tag = 'scoped memory for mixed6a_forward.5']
    #allocation7 [shape = 'u8[512]{0}', space=vmem, size = 0x400, scoped, tag = 'input window, operand 3, single buffered']
    %9 = vsyncpa [#allocation4], 0
    %10 = vsyncpa [#allocation6], 0
    // Predicated region
    $region2: #{mixed6a_forward.5} parent=1 // pred_check
      _
    $region3: #{mixed6a_forward.5} parent=1 // pred_check_branch
      %12 = sbr.rel (0) target = $region5
    $region4: #{mixed6a_forward.5} parent=1 // pred_region
      _
    $region5: #{mixed6a_forward.5} parent=1 // pred_fallthru
      _
    // Predicated region
    $region6: #{mixed6a_forward.5} parent=1 // pred_check
      _
    $region7: #{mixed6a_forward.5} parent=1 // pred_check_branch
      %14 = sbr.rel (0) target = $region9
    $region8: #{mixed6a_forward.5} parent=1 // pred_region
      %s16 = ssub.s32 32, 32
      %17 = vsyncadd [#allocation4], %s16
      %s19 = sshll.u32 [#allocation3], 4
      %s20 = int_to_ptr.vmem [resolvable:$true] %s19
      %22 = dma.hbm_to_vmem [thread:$0]  %s1, 32, %s20, [#allocation4]
    $region9: #{mixed6a_forward.5} parent=1 // pred_fallthru
      _
    // Predicated region
    $region10: #{mixed6a_forward.5} parent=1 // pred_check
      _
    $region11: #{mixed6a_forward.5} parent=1 // pred_check_branch
      %24 = sbr.rel (0) target = $region13
    $region12: #{mixed6a_forward.5} parent=1 // pred_region
      %s26 = ssub.s32 16, 16
      %27 = vsyncadd [#allocation6], %s26
      %s29 = sshll.u32 [#allocation5], 4
      %s30 = int_to_ptr.vmem [resolvable:$true] %s29
      %32 = dma.hbm_to_vmem [thread:$0]  %s2, 16, %s30, [#allocation6]
    $region13: #{mixed6a_forward.5} parent=1 // pred_fallthru
      _
    // Predicated region
    $region14: #{mixed6a_forward.5} parent=1 // pred_check
      _
    $region15: #{mixed6a_forward.5} parent=1 // pred_check_branch
      %34 = sbr.rel (0) target = $region17
    $region16: #{mixed6a_forward.5} parent=1 // pred_region
      %s36 = ssub.s32 16, 16
      %37 = vsyncadd [#allocation6], %s36
      %s39 = sshll.u32 [#allocation7], 4
      %s40 = int_to_ptr.vmem [resolvable:$true] %s39
      %42 = dma.hbm_to_vmem [thread:$0]  %s3, 16, %s40, [#allocation6]
    $region17: #{mixed6a_forward.5} parent=1 // pred_fallthru
      _
    // Predicated region
    $region18: #{mixed6a_forward.5} parent=1 // pred_check
      _
    $region19: #{mixed6a_forward.5} parent=1 // pred_check_branch
      %44 = sbr.rel (0) target = $region21
    $region20: #{mixed6a_forward.5} parent=1 // pred_region
      %45 = dma.done [#allocation4], 32
    $region21: #{mixed6a_forward.5} parent=1 // pred_fallthru
      _
    // Predicated region
    $region22: #{mixed6a_forward.5} parent=1 // pred_check
      _
    $region23: #{mixed6a_forward.5} parent=1 // pred_check_branch
      %47 = sbr.rel (0) target = $region25
    $region24: #{mixed6a_forward.5} parent=1 // pred_region
      %48 = dma.done [#allocation6], 16
    $region25: #{mixed6a_forward.5} parent=1 // pred_fallthru
      _
    // Predicated region
    $region26: #{mixed6a_forward.5} parent=1 // pred_check
      _
    $region27: #{mixed6a_forward.5} parent=1 // pred_check_branch
      %50 = sbr.rel (0) target = $region29
    $region28: #{mixed6a_forward.5} parent=1 // pred_region
      %51 = dma.done [#allocation6], 16
    $region29: #{mixed6a_forward.5} parent=1 // pred_fallthru
      _
    %p53 = scmp.eq.s32.totalorder 0, 0
    // Predicated region
    $region30: #{mixed6a_forward.5} parent=1 // pred_check
      %p54 = pneg %p53
    $region31: #{mixed6a_forward.5} parent=1 // pred_check_branch
      %56 = sbr.rel (%p54) target = $region33
    $region32: #{mixed6a_forward.5} parent=1 // pred_region
      %57 = vst [vmem:[#allocation2] sm:$0xff] 0.0
      %58 = vst [vmem:[#allocation2 + $0x8] sm:$0xff] 0.0
      %59 = vst [vmem:[#allocation2 + $0x10] sm:$0xff] 0.0
      %60 = vst [vmem:[#allocation2 + $0x18] sm:$0xff] 0.0
      %61 = vst [vmem:[#allocation2 + $0x20] sm:$0xff] 0.0
      %62 = vst [vmem:[#allocation2 + $0x28] sm:$0xff] 0.0
      %63 = vst [vmem:[#allocation2 + $0x30] sm:$0xff] 0.0
      %64 = vst [vmem:[#allocation2 + $0x38] sm:$0xff] 0.0
      %65 = vst [vmem:[#allocation2 + $0x40] sm:$0xff] 0.0
      %66 = vst [vmem:[#allocation2 + $0x48] sm:$0xff] 0.0
      %67 = vst [vmem:[#allocation2 + $0x50] sm:$0xff] 0.0
      %68 = vst [vmem:[#allocation2 + $0x58] sm:$0xff] 0.0
      %69 = vst [vmem:[#allocation2 + $0x60] sm:$0xff] 0.0
      %70 = vst [vmem:[#allocation2 + $0x68] sm:$0xff] 0.0
      %71 = vst [vmem:[#allocation2 + $0x70] sm:$0xff] 0.0
      %72 = vst [vmem:[#allocation2 + $0x78] sm:$0xff] 0.0
      %73 = vst [vmem:[#allocation2 + $0x80] sm:$0xff] 0.0
      %74 = vst [vmem:[#allocation2 + $0x88] sm:$0xff] 0.0
      %75 = vst [vmem:[#allocation2 + $0x90] sm:$0xff] 0.0
      %76 = vst [vmem:[#allocation2 + $0x98] sm:$0xff] 0.0
      %77 = vst [vmem:[#allocation2 + $0xa0] sm:$0xff] 0.0
      %78 = vst [vmem:[#allocation2 + $0xa8] sm:$0xff] 0.0
      %79 = vst [vmem:[#allocation2 + $0xb0] sm:$0xff] 0.0
      %80 = vst [vmem:[#allocation2 + $0xb8] sm:$0xff] 0.0
      %81 = vst [vmem:[#allocation2 + $0xc0] sm:$0xff] 0.0
      %82 = vst [vmem:[#allocation2 + $0xc8] sm:$0xff] 0.0
      %83 = vst [vmem:[#allocation2 + $0xd0] sm:$0xff] 0.0
      %84 = vst [vmem:[#allocation2 + $0xd8] sm:$0xff] 0.0
      %85 = vst [vmem:[#allocation2 + $0xe0] sm:$0xff] 0.0
      %86 = vst [vmem:[#allocation2 + $0xe8] sm:$0xff] 0.0
      %87 = vst [vmem:[#allocation2 + $0xf0] sm:$0xff] 0.0
      %88 = vst [vmem:[#allocation2 + $0xf8] sm:$0xff] 0.0
      %89 = vst [vmem:[#allocation2 + $0x100] sm:$0xff] 0.0
      %90 = vst [vmem:[#allocation2 + $0x108] sm:$0xff] 0.0
      %91 = vst [vmem:[#allocation2 + $0x110] sm:$0xff] 0.0
      %92 = vst [vmem:[#allocation2 + $0x118] sm:$0xff] 0.0
      %93 = vst [vmem:[#allocation2 + $0x120] sm:$0xff] 0.0
      %94 = vst [vmem:[#allocation2 + $0x128] sm:$0xff] 0.0
      %95 = vst [vmem:[#allocation2 + $0x130] sm:$0xff] 0.0
      %96 = vst [vmem:[#allocation2 + $0x138] sm:$0xff] 0.0
      %97 = vst [vmem:[#allocation2 + $0x140] sm:$0xff] 0.0
      %98 = vst [vmem:[#allocation2 + $0x148] sm:$0xff] 0.0
      %99 = vst [vmem:[#allocation2 + $0x150] sm:$0xff] 0.0
      %100 = vst [vmem:[#allocation2 + $0x158] sm:$0xff] 0.0
      %101 = vst [vmem:[#allocation2 + $0x160] sm:$0xff] 0.0
      %102 = vst [vmem:[#allocation2 + $0x168] sm:$0xff] 0.0
      %103 = vst [vmem:[#allocation2 + $0x170] sm:$0xff] 0.0
      %104 = vst [vmem:[#allocation2 + $0x178] sm:$0xff] 0.0
      %105 = vst [vmem:[#allocation2 + $0x180] sm:$0xff] 0.0
      %106 = vst [vmem:[#allocation2 + $0x188] sm:$0xff] 0.0
      %107 = vst [vmem:[#allocation2 + $0x190] sm:$0xff] 0.0
      %108 = vst [vmem:[#allocation2 + $0x198] sm:$0xff] 0.0
      %109 = vst [vmem:[#allocation2 + $0x1a0] sm:$0xff] 0.0
      %110 = vst [vmem:[#allocation2 + $0x1a8] sm:$0xff] 0.0
      %111 = vst [vmem:[#allocation2 + $0x1b0] sm:$0xff] 0.0
      %112 = vst [vmem:[#allocation2 + $0x1b8] sm:$0xff] 0.0
      %113 = vst [vmem:[#allocation2 + $0x1c0] sm:$0xff] 0.0
      %114 = vst [vmem:[#allocation2 + $0x1c8] sm:$0xff] 0.0
      %115 = vst [vmem:[#allocation2 + $0x1d0] sm:$0xff] 0.0
      %116 = vst [vmem:[#allocation2 + $0x1d8] sm:$0xff] 0.0
      %117 = vst [vmem:[#allocation2 + $0x1e0] sm:$0xff] 0.0
      %118 = vst [vmem:[#allocation2 + $0x1e8] sm:$0xff] 0.0
      %119 = vst [vmem:[#allocation2 + $0x1f0] sm:$0xff] 0.0
      %120 = vst [vmem:[#allocation2 + $0x1f8] sm:$0xff] 0.0
    $region33: #{mixed6a_forward.5} parent=1 // pred_fallthru
      _
    %v121 = vld [vmem:[#allocation2] sm:$0xff]
    %v122 = vld [vmem:[#allocation2 + $0x8] sm:$0xff]
    %v123 = vld [vmem:[#allocation2 + $0x10] sm:$0xff]
    %v124 = vld [vmem:[#allocation2 + $0x18] sm:$0xff]
    %v125 = vld [vmem:[#allocation2 + $0x20] sm:$0xff]
    %v126 = vld [vmem:[#allocation2 + $0x28] sm:$0xff]
    %v127 = vld [vmem:[#allocation2 + $0x30] sm:$0xff]
    %v128 = vld [vmem:[#allocation2 + $0x38] sm:$0xff]
    %v129 = vld [vmem:[#allocation2 + $0x40] sm:$0xff]
    %v130 = vld [vmem:[#allocation2 + $0x48] sm:$0xff]
    %v131 = vld [vmem:[#allocation2 + $0x50] sm:$0xff]
    %v132 = vld [vmem:[#allocation2 + $0x58] sm:$0xff]
    %v133 = vld [vmem:[#allocation2 + $0x60] sm:$0xff]
    %v134 = vld [vmem:[#allocation2 + $0x68] sm:$0xff]
    %v135 = vld [vmem:[#allocation2 + $0x70] sm:$0xff]
    %v136 = vld [vmem:[#allocation2 + $0x78] sm:$0xff]
    %v137 = vld [vmem:[#allocation2 + $0x80] sm:$0xff]
    %v138 = vld [vmem:[#allocation2 + $0x88] sm:$0xff]
    %v139 = vld [vmem:[#allocation2 + $0x90] sm:$0xff]
    %v140 = vld [vmem:[#allocation2 + $0x98] sm:$0xff]
    %v141 = vld [vmem:[#allocation2 + $0xa0] sm:$0xff]
    %v142 = vld [vmem:[#allocation2 + $0xa8] sm:$0xff]
    %v143 = vld [vmem:[#allocation2 + $0xb0] sm:$0xff]
    %v144 = vld [vmem:[#allocation2 + $0xb8] sm:$0xff]
    %v145 = vld [vmem:[#allocation2 + $0xc0] sm:$0xff]
    %v146 = vld [vmem:[#allocation2 + $0xc8] sm:$0xff]
    %v147 = vld [vmem:[#allocation2 + $0xd0] sm:$0xff]
    %v148 = vld [vmem:[#allocation2 + $0xd8] sm:$0xff]
    %v149 = vld [vmem:[#allocation2 + $0xe0] sm:$0xff]
    %v150 = vld [vmem:[#allocation2 + $0xe8] sm:$0xff]
    %v151 = vld [vmem:[#allocation2 + $0xf0] sm:$0xff]
    %v152 = vld [vmem:[#allocation2 + $0xf8] sm:$0xff]
    %v153 = vld [vmem:[#allocation2 + $0x100] sm:$0xff]
    %v154 = vld [vmem:[#allocation2 + $0x108] sm:$0xff]
    %v155 = vld [vmem:[#allocation2 + $0x110] sm:$0xff]
    %v156 = vld [vmem:[#allocation2 + $0x118] sm:$0xff]
    %v157 = vld [vmem:[#allocation2 + $0x120] sm:$0xff]
    %v158 = vld [vmem:[#allocation2 + $0x128] sm:$0xff]
    %v159 = vld [vmem:[#allocation2 + $0x130] sm:$0xff]
    %v160 = vld [vmem:[#allocation2 + $0x138] sm:$0xff]
    %v161 = vld [vmem:[#allocation2 + $0x140] sm:$0xff]
    %v162 = vld [vmem:[#allocation2 + $0x148] sm:$0xff]
    %v163 = vld [vmem:[#allocation2 + $0x150] sm:$0xff]
    %v164 = vld [vmem:[#allocation2 + $0x158] sm:$0xff]
    %v165 = vld [vmem:[#allocation2 + $0x160] sm:$0xff]
    %v166 = vld [vmem:[#allocation2 + $0x168] sm:$0xff]
    %v167 = vld [vmem:[#allocation2 + $0x170] sm:$0xff]
    %v168 = vld [vmem:[#allocation2 + $0x178] sm:$0xff]
    %v169 = vld [vmem:[#allocation2 + $0x180] sm:$0xff]
    %v170 = vld [vmem:[#allocation2 + $0x188] sm:$0xff]
    %v171 = vld [vmem:[#allocation2 + $0x190] sm:$0xff]
    %v172 = vld [vmem:[#allocation2 + $0x198] sm:$0xff]
    %v173 = vld [vmem:[#allocation2 + $0x1a0] sm:$0xff]
    %v174 = vld [vmem:[#allocation2 + $0x1a8] sm:$0xff]
    %v175 = vld [vmem:[#allocation2 + $0x1b0] sm:$0xff]
    %v176 = vld [vmem:[#allocation2 + $0x1b8] sm:$0xff]
    %v177 = vld [vmem:[#allocation2 + $0x1c0] sm:$0xff]
    %v178 = vld [vmem:[#allocation2 + $0x1c8] sm:$0xff]
    %v179 = vld [vmem:[#allocation2 + $0x1d0] sm:$0xff]
    %v180 = vld [vmem:[#allocation2 + $0x1d8] sm:$0xff]
    %v181 = vld [vmem:[#allocation2 + $0x1e0] sm:$0xff]
    %v182 = vld [vmem:[#allocation2 + $0x1e8] sm:$0xff]
    %v183 = vld [vmem:[#allocation2 + $0x1f0] sm:$0xff]
    %v184 = vld [vmem:[#allocation2 + $0x1f8] sm:$0xff]
    %v185 = vld [vmem:[%s0] sm:$0xf]
    %v186 = vld [vmem:[%s0 + $0x4] sm:$0xf]
    %v187 = vld [vmem:[%s0 + $0x8] sm:$0xf]
    %v188 = vld [vmem:[%s0 + $0xc] sm:$0xf]
    %v189 = vld [vmem:[%s0 + $0x10] sm:$0xf]
    %v190 = vld [vmem:[%s0 + $0x14] sm:$0xf]
    %v191 = vld [vmem:[%s0 + $0x18] sm:$0xf]
    %v192 = vld [vmem:[%s0 + $0x1c] sm:$0xf]
    %v193 = vld [vmem:[%s0 + $0x20] sm:$0xf]
    %v194 = vld [vmem:[%s0 + $0x24] sm:$0xf]
    %v195 = vld [vmem:[%s0 + $0x28] sm:$0xf]
    %v196 = vld [vmem:[%s0 + $0x2c] sm:$0xf]
    %v197 = vld [vmem:[%s0 + $0x30] sm:$0xf]
    %v198 = vld [vmem:[%s0 + $0x34] sm:$0xf]
    %v199 = vld [vmem:[%s0 + $0x38] sm:$0xf]
    %v200 = vld [vmem:[%s0 + $0x3c] sm:$0xf]
    %v201 = vld [vmem:[%s0 + $0x40] sm:$0xf]
    %v202 = vld [vmem:[%s0 + $0x44] sm:$0xf]
    %v203 = vld [vmem:[%s0 + $0x48] sm:$0xf]
    %v204 = vld [vmem:[%s0 + $0x4c] sm:$0xf]
    %v205 = vld [vmem:[%s0 + $0x50] sm:$0xf]
    %v206 = vld [vmem:[%s0 + $0x54] sm:$0xf]
    %v207 = vld [vmem:[%s0 + $0x58] sm:$0xf]
    %v208 = vld [vmem:[%s0 + $0x5c] sm:$0xf]
    %v209 = vld [vmem:[%s0 + $0x60] sm:$0xf]
    %v210 = vld [vmem:[%s0 + $0x64] sm:$0xf]
    %v211 = vld [vmem:[%s0 + $0x68] sm:$0xf]
    %v212 = vld [vmem:[%s0 + $0x6c] sm:$0xf]
    %v213 = vld [vmem:[%s0 + $0x70] sm:$0xf]
    %v214 = vld [vmem:[%s0 + $0x74] sm:$0xf]
    %v215 = vld [vmem:[%s0 + $0x78] sm:$0xf]
    %v216 = vld [vmem:[%s0 + $0x7c] sm:$0xf]
    %v217 = vld [vmem:[%s0 + $0x80] sm:$0xf]
    %v218 = vld [vmem:[%s0 + $0x84] sm:$0xf]
    %v219 = vld [vmem:[%s0 + $0x88] sm:$0xf]
    %v220 = vld [vmem:[%s0 + $0x8c] sm:$0xf]
    %v221 = vld [vmem:[%s0 + $0x90] sm:$0xf]
    %v222 = vld [vmem:[%s0 + $0x94] sm:$0xf]
    %v223 = vld [vmem:[%s0 + $0x98] sm:$0xf]
    %v224 = vld [vmem:[%s0 + $0x9c] sm:$0xf]
    %v225 = vld [vmem:[%s0 + $0xa0] sm:$0xf]
    %v226 = vld [vmem:[%s0 + $0xa4] sm:$0xf]
    %v227 = vld [vmem:[%s0 + $0xa8] sm:$0xf]
    %v228 = vld [vmem:[%s0 + $0xac] sm:$0xf]
    %v229 = vld [vmem:[%s0 + $0xb0] sm:$0xf]
    %v230 = vld [vmem:[%s0 + $0xb4] sm:$0xf]
    %v231 = vld [vmem:[%s0 + $0xb8] sm:$0xf]
    %v232 = vld [vmem:[%s0 + $0xbc] sm:$0xf]
    %v233 = vld [vmem:[%s0 + $0xc0] sm:$0xf]
    %v234 = vld [vmem:[%s0 + $0xc4] sm:$0xf]
    %v235 = vld [vmem:[%s0 + $0xc8] sm:$0xf]
    %v236 = vld [vmem:[%s0 + $0xcc] sm:$0xf]
    %v237 = vld [vmem:[%s0 + $0xd0] sm:$0xf]
    %v238 = vld [vmem:[%s0 + $0xd4] sm:$0xf]
    %v239 = vld [vmem:[%s0 + $0xd8] sm:$0xf]
    %v240 = vld [vmem:[%s0 + $0xdc] sm:$0xf]
    %v241 = vld [vmem:[%s0 + $0xe0] sm:$0xf]
    %v242 = vld [vmem:[%s0 + $0xe4] sm:$0xf]
    %v243 = vld [vmem:[%s0 + $0xe8] sm:$0xf]
    %v244 = vld [vmem:[%s0 + $0xec] sm:$0xf]
    %v245 = vld [vmem:[%s0 + $0xf0] sm:$0xf]
    %v246 = vld [vmem:[%s0 + $0xf4] sm:$0xf]
    %v247 = vld [vmem:[%s0 + $0xf8] sm:$0xf]
    %v248 = vld [vmem:[%s0 + $0xfc] sm:$0xf]
    %v249 = vld [vmem:[#allocation3] sm:$0x3]
    %v314 = vunpack.c.l.b16 %v185
    %v315 = vunpack.c.l.b16 %v186
    %v316 = vunpack.c.l.b16 %v187
    %v317 = vunpack.c.l.b16 %v188
    %v318 = vunpack.c.l.b16 %v189
    %v319 = vunpack.c.l.b16 %v190
    %v320 = vunpack.c.l.b16 %v191
    %v321 = vunpack.c.l.b16 %v192
    %v322 = vunpack.c.l.b16 %v193
    %v323 = vunpack.c.l.b16 %v194
    %v324 = vunpack.c.l.b16 %v195
    %v325 = vunpack.c.l.b16 %v196
    %v326 = vunpack.c.l.b16 %v197
    %v327 = vunpack.c.l.b16 %v198
    %v328 = vunpack.c.l.b16 %v199
    %v329 = vunpack.c.l.b16 %v200
    %v330 = vunpack.c.l.b16 %v201
    %v331 = vunpack.c.l.b16 %v202
    %v332 = vunpack.c.l.b16 %v203
    %v333 = vunpack.c.l.b16 %v204
    %v334 = vunpack.c.l.b16 %v205
    %v335 = vunpack.c.l.b16 %v206
    %v336 = vunpack.c.l.b16 %v207
    %v337 = vunpack.c.l.b16 %v208
    %v338 = vunpack.c.l.b16 %v209
    %v339 = vunpack.c.l.b16 %v210
    %v340 = vunpack.c.l.b16 %v211
    %v341 = vunpack.c.l.b16 %v212
    %v342 = vunpack.c.l.b16 %v213
    %v343 = vunpack.c.l.b16 %v214
    %v344 = vunpack.c.l.b16 %v215
    %v345 = vunpack.c.l.b16 %v216
    %v346 = vunpack.c.l.b16 %v217
    %v347 = vunpack.c.l.b16 %v218
    %v348 = vunpack.c.l.b16 %v219
    %v349 = vunpack.c.l.b16 %v220
    %v350 = vunpack.c.l.b16 %v221
    %v351 = vunpack.c.l.b16 %v222
    %v352 = vunpack.c.l.b16 %v223
    %v353 = vunpack.c.l.b16 %v224
    %v354 = vunpack.c.l.b16 %v225
    %v355 = vunpack.c.l.b16 %v226
    %v356 = vunpack.c.l.b16 %v227
    %v357 = vunpack.c.l.b16 %v228
    %v358 = vunpack.c.l.b16 %v229
    %v359 = vunpack.c.l.b16 %v230
    %v360 = vunpack.c.l.b16 %v231
    %v361 = vunpack.c.l.b16 %v232
    %v362 = vunpack.c.l.b16 %v233
    %v363 = vunpack.c.l.b16 %v234
    %v364 = vunpack.c.l.b16 %v235
    %v365 = vunpack.c.l.b16 %v236
    %v366 = vunpack.c.l.b16 %v237
    %v367 = vunpack.c.l.b16 %v238
    %v368 = vunpack.c.l.b16 %v239
    %v369 = vunpack.c.l.b16 %v240
    %v370 = vunpack.c.l.b16 %v241
    %v371 = vunpack.c.l.b16 %v242
    %v372 = vunpack.c.l.b16 %v243
    %v373 = vunpack.c.l.b16 %v244
    %v374 = vunpack.c.l.b16 %v245
    %v375 = vunpack.c.l.b16 %v246
    %v376 = vunpack.c.l.b16 %v247
    %v377 = vunpack.c.l.b16 %v248
    %v378 = vpack.c.b16 %v315, %v314
    %v379 = vpack.c.b16 %v317, %v316
    %v380 = vpack.c.b16 %v319, %v318
    %v381 = vpack.c.b16 %v321, %v320
    %v382 = vpack.c.b16 %v323, %v322
    %v383 = vpack.c.b16 %v325, %v324
    %v384 = vpack.c.b16 %v327, %v326
    %v385 = vpack.c.b16 %v329, %v328
    %v386 = vpack.c.b16 %v331, %v330
    %v387 = vpack.c.b16 %v333, %v332
    %v388 = vpack.c.b16 %v335, %v334
    %v389 = vpack.c.b16 %v337, %v336
    %v390 = vpack.c.b16 %v339, %v338
    %v391 = vpack.c.b16 %v341, %v340
    %v392 = vpack.c.b16 %v343, %v342
    %v393 = vpack.c.b16 %v345, %v344
    %v394 = vpack.c.b16 %v347, %v346
    %v395 = vpack.c.b16 %v349, %v348
    %v396 = vpack.c.b16 %v351, %v350
    %v397 = vpack.c.b16 %v353, %v352
    %v398 = vpack.c.b16 %v355, %v354
    %v399 = vpack.c.b16 %v357, %v356
    %v400 = vpack.c.b16 %v359, %v358
    %v401 = vpack.c.b16 %v361, %v360
    %v402 = vpack.c.b16 %v363, %v362
    %v403 = vpack.c.b16 %v365, %v364
    %v404 = vpack.c.b16 %v367, %v366
    %v405 = vpack.c.b16 %v369, %v368
    %v406 = vpack.c.b16 %v371, %v370
    %v407 = vpack.c.b16 %v373, %v372
    %v408 = vpack.c.b16 %v375, %v374
    %v409 = vpack.c.b16 %v377, %v376
    %vm410 = vcmask 31744
    %v412 = vsel %vm410, %v378, 0
    %v415 = vsel %vm410, %v379, 0
    %v418 = vsel %vm410, %v380, 0
    %v421 = vsel %vm410, %v381, 0
    %v424 = vsel %vm410, %v382, 0
    %v427 = vsel %vm410, %v383, 0
    %v430 = vsel %vm410, %v384, 0
    %v433 = vsel %vm410, %v385, 0
    %v436 = vsel %vm410, %v386, 0
    %v439 = vsel %vm410, %v387, 0
    %v442 = vsel %vm410, %v388, 0
    %v445 = vsel %vm410, %v389, 0
    %v448 = vsel %vm410, %v390, 0
    %v451 = vsel %vm410, %v391, 0
    %v454 = vsel %vm410, %v392, 0
    %v457 = vsel %vm410, %v393, 0
    %v460 = vsel %vm410, %v394, 0
    %v463 = vsel %vm410, %v395, 0
    %v466 = vsel %vm410, %v396, 0
    %v469 = vsel %vm410, %v397, 0
    %v472 = vsel %vm410, %v398, 0
    %v475 = vsel %vm410, %v399, 0
    %v478 = vsel %vm410, %v400, 0
    %v481 = vsel %vm410, %v401, 0
    %v484 = vsel %vm410, %v402, 0
    %v487 = vsel %vm410, %v403, 0
    %v490 = vsel %vm410, %v404, 0
    %v493 = vsel %vm410, %v405, 0
    %v496 = vsel %vm410, %v406, 0
    %v499 = vsel %vm410, %v407, 0
    %v502 = vsel %vm410, %v408, 0
    %v505 = vsel %vm410, %v409, 0
    %vm507 = vcmask 1041408
    %v509 = vsel %vm507, %v249, 0
    %511 = vmatprep.subr.bf16.mxu0 0
    %512 = vmatpush1.bf16.msra.mxu0 %v509
    %513 = vmatprep.subr.bf16.mxu0 0
    %514 = vmatpush1.bf16.msra.mxu0 0
    %515 = vmatprep.subr.bf16.mxu0 0
    %516 = vmatpush1.bf16.msra.mxu0 0
    %517 = vmatprep.subr.bf16.mxu0 0
    %518 = vmatpush1.bf16.msra.mxu0 0
    %519 = vmatprep.subr.bf16.mxu0 0
    %520 = vmatpush1.bf16.msra.mxu0 0
    %521 = vmatprep.subr.bf16.mxu0 0
    %522 = vmatpush1.bf16.msra.mxu0 0
    %523 = vmatprep.subr.bf16.mxu0 0
    %524 = vmatpush1.bf16.msra.mxu0 0
    %525 = vmatprep.subr.bf16.mxu0 0
    %526 = vmatpush1.bf16.msra.mxu0 0
    %527 = vmatprep.subr.bf16.mxu0 0
    %528 = vmatpush1.bf16.msra.mxu0 0
    %529 = vmatprep.subr.bf16.mxu0 0
    %530 = vmatpush1.bf16.msra.mxu0 0
    %531 = vmatprep.subr.bf16.mxu0 0
    %532 = vmatpush1.bf16.msra.mxu0 0
    %533 = vmatprep.subr.bf16.mxu0 0
    %534 = vmatpush1.bf16.msra.mxu0 0
    %535 = vmatprep.subr.bf16.mxu0 0
    %536 = vmatpush1.bf16.msra.mxu0 0
    %537 = vmatprep.subr.bf16.mxu0 0
    %538 = vmatpush1.bf16.msra.mxu0 0
    %539 = vmatprep.subr.bf16.mxu0 0
    %540 = vmatpush1.bf16.msra.mxu0 0
    %541 = vmatprep.subr.bf16.mxu0 0
    %542 = vmatpush1.bf16.msra.mxu0 0
    %543 = vmatprep.mubr.bf16.mxu0 0
    %544 = vmatmul.mubr.bf16.gmra.mrb[0].mxu0 %v412
    %v545 = vpop.f32.mrb[0].mxu0
    %v546 = vadd.f32 0.0, %v545
    %v547 = vpop.f32.mrb[0].mxu0
    %v548 = vpop.f32.mrb[0].mxu0
    %v549 = vadd.f32 0.0, %v548
    %v550 = vpop.f32.mrb[0].mxu0
    %551 = vmatprep.mubr.bf16.mxu0 0
    %552 = vmatmul.mubr.bf16.gmra.mrb[0].mxu0 %v415
    %v553 = vpop.f32.mrb[0].mxu0
    %v554 = vadd.f32 0.0, %v553
    %v555 = vpop.f32.mrb[0].mxu0
    %v556 = vpop.f32.mrb[0].mxu0
    %v557 = vadd.f32 0.0, %v556
    %v558 = vpop.f32.mrb[0].mxu0
    %559 = vmatprep.mubr.bf16.mxu0 0
    %560 = vmatmul.mubr.bf16.gmra.mrb[0].mxu0 %v418
    %v561 = vpop.f32.mrb[0].mxu0
    %v562 = vadd.f32 0.0, %v561
    %v563 = vpop.f32.mrb[0].mxu0
    %v564 = vpop.f32.mrb[0].mxu0
    %v565 = vadd.f32 0.0, %v564
    %v566 = vpop.f32.mrb[0].mxu0
    %567 = vmatprep.mubr.bf16.mxu0 0
    %568 = vmatmul.mubr.bf16.gmra.mrb[0].mxu0 %v421
    %v569 = vpop.f32.mrb[0].mxu0
    %v570 = vadd.f32 0.0, %v569
    %v571 = vpop.f32.mrb[0].mxu0
    %v572 = vpop.f32.mrb[0].mxu0
    %v573 = vadd.f32 0.0, %v572
    %v574 = vpop.f32.mrb[0].mxu0
    %575 = vmatprep.mubr.bf16.mxu0 0
    %576 = vmatmul.mubr.bf16.gmra.mrb[0].mxu0 %v424
    %v577 = vpop.f32.mrb[0].mxu0
    %v578 = vadd.f32 0.0, %v577
    %v579 = vpop.f32.mrb[0].mxu0
    %v580 = vpop.f32.mrb[0].mxu0
    %v581 = vadd.f32 0.0, %v580
    %v582 = vpop.f32.mrb[0].mxu0
    %583 = vmatprep.mubr.bf16.mxu0 0
    %584 = vmatmul.mubr.bf16.gmra.mrb[0].mxu0 %v427
    %v585 = vpop.f32.mrb[0].mxu0
    %v586 = vadd.f32 0.0, %v585
    %v587 = vpop.f32.mrb[0].mxu0
    %v588 = vpop.f32.mrb[0].mxu0
    %v589 = vadd.f32 0.0, %v588
    %v590 = vpop.f32.mrb[0].mxu0
    %591 = vmatprep.mubr.bf16.mxu0 0
    %592 = vmatmul.mubr.bf16.gmra.mrb[0].mxu0 %v430
    %v593 = vpop.f32.mrb[0].mxu0
    %v594 = vadd.f32 0.0, %v593
    %v595 = vpop.f32.mrb[0].mxu0
    %v596 = vpop.f32.mrb[0].mxu0
    %v597 = vadd.f32 0.0, %v596
    %v598 = vpop.f32.mrb[0].mxu0
    %599 = vmatprep.mubr.bf16.mxu0 0
    %600 = vmatmul.mubr.bf16.gmra.mrb[0].mxu0 %v433
    %v601 = vpop.f32.mrb[0].mxu0
    %v602 = vadd.f32 0.0, %v601
    %v603 = vpop.f32.mrb[0].mxu0
    %v604 = vpop.f32.mrb[0].mxu0
    %v605 = vadd.f32 0.0, %v604
    %v606 = vpop.f32.mrb[0].mxu0
    %607 = vmatprep.mubr.bf16.mxu0 0
    %608 = vmatmul.mubr.bf16.gmra.mrb[0].mxu0 %v436
    %v609 = vpop.f32.mrb[0].mxu0
    %v610 = vadd.f32 0.0, %v609
    %v611 = vpop.f32.mrb[0].mxu0
    %v612 = vpop.f32.mrb[0].mxu0
    %v613 = vadd.f32 0.0, %v612
    %v614 = vpop.f32.mrb[0].mxu0
    %615 = vmatprep.mubr.bf16.mxu0 0
    %616 = vmatmul.mubr.bf16.gmra.mrb[0].mxu0 %v439
    %v617 = vpop.f32.mrb[0].mxu0
    %v618 = vadd.f32 0.0, %v617
    %v619 = vpop.f32.mrb[0].mxu0
    %v620 = vpop.f32.mrb[0].mxu0
    %v621 = vadd.f32 0.0, %v620
    %v622 = vpop.f32.mrb[0].mxu0
    %623 = vmatprep.mubr.bf16.mxu0 0
    %624 = vmatmul.mubr.bf16.gmra.mrb[0].mxu0 %v442
    %v625 = vpop.f32.mrb[0].mxu0
    %v626 = vadd.f32 0.0, %v625
    %v627 = vpop.f32.mrb[0].mxu0
    %v628 = vpop.f32.mrb[0].mxu0
    %v629 = vadd.f32 0.0, %v628
    %v630 = vpop.f32.mrb[0].mxu0
    %631 = vmatprep.mubr.bf16.mxu0 0
    %632 = vmatmul.mubr.bf16.gmra.mrb[0].mxu0 %v445
    %v633 = vpop.f32.mrb[0].mxu0
    %v634 = vadd.f32 0.0, %v633
    %v635 = vpop.f32.mrb[0].mxu0
    %v636 = vpop.f32.mrb[0].mxu0
    %v637 = vadd.f32 0.0, %v636
    %v638 = vpop.f32.mrb[0].mxu0
    %639 = vmatprep.mubr.bf16.mxu0 0
    %640 = vmatmul.mubr.bf16.gmra.mrb[0].mxu0 %v448
    %v641 = vpop.f32.mrb[0].mxu0
    %v642 = vadd.f32 0.0, %v641
    %v643 = vpop.f32.mrb[0].mxu0
    %v644 = vpop.f32.mrb[0].mxu0
    %v645 = vadd.f32 0.0, %v644
    %v646 = vpop.f32.mrb[0].mxu0
    %647 = vmatprep.mubr.bf16.mxu0 0
    %648 = vmatmul.mubr.bf16.gmra.mrb[0].mxu0 %v451
    %v649 = vpop.f32.mrb[0].mxu0
    %v650 = vadd.f32 0.0, %v649
    %v651 = vpop.f32.mrb[0].mxu0
    %v652 = vpop.f32.mrb[0].mxu0
    %v653 = vadd.f32 0.0, %v652
    %v654 = vpop.f32.mrb[0].mxu0
    %655 = vmatprep.mubr.bf16.mxu0 0
    %656 = vmatmul.mubr.bf16.gmra.mrb[0].mxu0 %v454
    %v657 = vpop.f32.mrb[0].mxu0
    %v658 = vadd.f32 0.0, %v657
    %v659 = vpop.f32.mrb[0].mxu0
    %v660 = vpop.f32.mrb[0].mxu0
    %v661 = vadd.f32 0.0, %v660
    %v662 = vpop.f32.mrb[0].mxu0
    %663 = vmatprep.mubr.bf16.mxu0 0
    %664 = vmatmul.mubr.bf16.gmra.mrb[0].mxu0 %v457
    %v665 = vpop.f32.mrb[0].mxu0
    %v666 = vadd.f32 0.0, %v665
    %v667 = vpop.f32.mrb[0].mxu0
    %v668 = vpop.f32.mrb[0].mxu0
    %v669 = vadd.f32 0.0, %v668
    %v670 = vpop.f32.mrb[0].mxu0
    %671 = vmatprep.mubr.bf16.mxu0 0
    %672 = vmatmul.mubr.bf16.gmra.mrb[0].mxu0 %v460
    %v673 = vpop.f32.mrb[0].mxu0
    %v674 = vadd.f32 0.0, %v673
    %v675 = vpop.f32.mrb[0].mxu0
    %v676 = vpop.f32.mrb[0].mxu0
    %v677 = vadd.f32 0.0, %v676
    %v678 = vpop.f32.mrb[0].mxu0
    %679 = vmatprep.mubr.bf16.mxu0 0
    %680 = vmatmul.mubr.bf16.gmra.mrb[0].mxu0 %v463
    %v681 = vpop.f32.mrb[0].mxu0
    %v682 = vadd.f32 0.0, %v681
    %v683 = vpop.f32.mrb[0].mxu0
    %v684 = vpop.f32.mrb[0].mxu0
    %v685 = vadd.f32 0.0, %v684
    %v686 = vpop.f32.mrb[0].mxu0
    %687 = vmatprep.mubr.bf16.mxu0 0
    %688 = vmatmul.mubr.bf16.gmra.mrb[0].mxu0 %v466
    %v689 = vpop.f32.mrb[0].mxu0
    %v690 = vadd.f32 0.0, %v689
    %v691 = vpop.f32.mrb[0].mxu0
    %v692 = vpop.f32.mrb[0].mxu0
    %v693 = vadd.f32 0.0, %v692
    %v694 = vpop.f32.mrb[0].mxu0
    %695 = vmatprep.mubr.bf16.mxu0 0
    %696 = vmatmul.mubr.bf16.gmra.mrb[0].mxu0 %v469
    %v697 = vpop.f32.mrb[0].mxu0
    %v698 = vadd.f32 0.0, %v697
    %v699 = vpop.f32.mrb[0].mxu0
    %v700 = vpop.f32.mrb[0].mxu0
    %v701 = vadd.f32 0.0, %v700
    %v702 = vpop.f32.mrb[0].mxu0
    %703 = vmatprep.mubr.bf16.mxu0 0
    %704 = vmatmul.mubr.bf16.gmra.mrb[0].mxu0 %v472
    %v705 = vpop.f32.mrb[0].mxu0
    %v706 = vadd.f32 0.0, %v705
    %v707 = vpop.f32.mrb[0].mxu0
    %v708 = vpop.f32.mrb[0].mxu0
    %v709 = vadd.f32 0.0, %v708
    %v710 = vpop.f32.mrb[0].mxu0
    %711 = vmatprep.mubr.bf16.mxu0 0
    %712 = vmatmul.mubr.bf16.gmra.mrb[0].mxu0 %v475
    %v713 = vpop.f32.mrb[0].mxu0
    %v714 = vadd.f32 0.0, %v713
    %v715 = vpop.f32.mrb[0].mxu0
    %v716 = vpop.f32.mrb[0].mxu0
    %v717 = vadd.f32 0.0, %v716
    %v718 = vpop.f32.mrb[0].mxu0
    %719 = vmatprep.mubr.bf16.mxu0 0
    %720 = vmatmul.mubr.bf16.gmra.mrb[0].mxu0 %v478
    %v721 = vpop.f32.mrb[0].mxu0
    %v722 = vadd.f32 0.0, %v721
    %v723 = vpop.f32.mrb[0].mxu0
    %v724 = vpop.f32.mrb[0].mxu0
    %v725 = vadd.f32 0.0, %v724
    %v726 = vpop.f32.mrb[0].mxu0
    %727 = vmatprep.mubr.bf16.mxu0 0
    %728 = vmatmul.mubr.bf16.gmra.mrb[0].mxu0 %v481
    %v729 = vpop.f32.mrb[0].mxu0
    %v730 = vadd.f32 0.0, %v729
    %v731 = vpop.f32.mrb[0].mxu0
    %v732 = vpop.f32.mrb[0].mxu0
    %v733 = vadd.f32 0.0, %v732
    %v734 = vpop.f32.mrb[0].mxu0
    %735 = vmatprep.mubr.bf16.mxu0 0
    %736 = vmatmul.mubr.bf16.gmra.mrb[0].mxu0 %v484
    %v737 = vpop.f32.mrb[0].mxu0
    %v738 = vadd.f32 0.0, %v737
    %v739 = vpop.f32.mrb[0].mxu0
    %v740 = vpop.f32.mrb[0].mxu0
    %v741 = vadd.f32 0.0, %v740
    %v742 = vpop.f32.mrb[0].mxu0
    %743 = vmatprep.mubr.bf16.mxu0 0
    %744 = vmatmul.mubr.bf16.gmra.mrb[0].mxu0 %v487
    %v745 = vpop.f32.mrb[0].mxu0
    %v746 = vadd.f32 0.0, %v745
    %v747 = vpop.f32.mrb[0].mxu0
    %v748 = vpop.f32.mrb[0].mxu0
    %v749 = vadd.f32 0.0, %v748
    %v750 = vpop.f32.mrb[0].mxu0
    %751 = vmatprep.mubr.bf16.mxu0 0
    %752 = vmatmul.mubr.bf16.gmra.mrb[0].mxu0 %v490
    %v753 = vpop.f32.mrb[0].mxu0
    %v754 = vadd.f32 0.0, %v753
    %v755 = vpop.f32.mrb[0].mxu0
    %v756 = vpop.f32.mrb[0].mxu0
    %v757 = vadd.f32 0.0, %v756
    %v758 = vpop.f32.mrb[0].mxu0
    %759 = vmatprep.mubr.bf16.mxu0 0
    %760 = vmatmul.mubr.bf16.gmra.mrb[0].mxu0 %v493
    %v761 = vpop.f32.mrb[0].mxu0
    %v762 = vadd.f32 0.0, %v761
    %v763 = vpop.f32.mrb[0].mxu0
    %v764 = vpop.f32.mrb[0].mxu0
    %v765 = vadd.f32 0.0, %v764
    %v766 = vpop.f32.mrb[0].mxu0
    %767 = vmatprep.mubr.bf16.mxu0 0
    %768 = vmatmul.mubr.bf16.gmra.mrb[0].mxu0 %v496
    %v769 = vpop.f32.mrb[0].mxu0
    %v770 = vadd.f32 0.0, %v769
    %v771 = vpop.f32.mrb[0].mxu0
    %v772 = vpop.f32.mrb[0].mxu0
    %v773 = vadd.f32 0.0, %v772
    %v774 = vpop.f32.mrb[0].mxu0
    %775 = vmatprep.mubr.bf16.mxu0 0
    %776 = vmatmul.mubr.bf16.gmra.mrb[0].mxu0 %v499
    %v777 = vpop.f32.mrb[0].mxu0
    %v778 = vadd.f32 0.0, %v777
    %v779 = vpop.f32.mrb[0].mxu0
    %v780 = vpop.f32.mrb[0].mxu0
    %v781 = vadd.f32 0.0, %v780
    %v782 = vpop.f32.mrb[0].mxu0
    %783 = vmatprep.mubr.bf16.mxu0 0
    %784 = vmatmul.mubr.bf16.gmra.mrb[0].mxu0 %v502
    %v785 = vpop.f32.mrb[0].mxu0
    %v786 = vadd.f32 0.0, %v785
    %v787 = vpop.f32.mrb[0].mxu0
    %v788 = vpop.f32.mrb[0].mxu0
    %v789 = vadd.f32 0.0, %v788
    %v790 = vpop.f32.mrb[0].mxu0
    %791 = vmatprep.mubr.bf16.mxu0 0
    %792 = vmatmul.mubr.bf16.gmra.mrb[0].mxu0 %v505
    %v793 = vpop.f32.mrb[0].mxu0
    %v794 = vadd.f32 0.0, %v793
    %v795 = vpop.f32.mrb[0].mxu0
    %v796 = vpop.f32.mrb[0].mxu0
    %v797 = vadd.f32 0.0, %v796
    %v798 = vpop.f32.mrb[0].mxu0
    %799 = vdwg.mxu0
    %v800 = vadd.f32 %v121, %v546
    %v801 = vadd.f32 %v122, %v549
    %v802 = vadd.f32 %v123, %v554
    %v803 = vadd.f32 %v124, %v557
    %v804 = vadd.f32 %v125, %v562
    %v805 = vadd.f32 %v126, %v565
    %v806 = vadd.f32 %v127, %v570
    %v807 = vadd.f32 %v128, %v573
    %v808 = vadd.f32 %v129, %v578
    %v809 = vadd.f32 %v130, %v581
    %v810 = vadd.f32 %v131, %v586
    %v811 = vadd.f32 %v132, %v589
    %v812 = vadd.f32 %v133, %v594
    %v813 = vadd.f32 %v134, %v597
    %v814 = vadd.f32 %v135, %v602
    %v815 = vadd.f32 %v136, %v605
    %v816 = vadd.f32 %v137, %v610
    %v817 = vadd.f32 %v138, %v613
    %v818 = vadd.f32 %v139, %v618
    %v819 = vadd.f32 %v140, %v621
    %v820 = vadd.f32 %v141, %v626
    %v821 = vadd.f32 %v142, %v629
    %v822 = vadd.f32 %v143, %v634
    %v823 = vadd.f32 %v144, %v637
    %v824 = vadd.f32 %v145, %v642
    %v825 = vadd.f32 %v146, %v645
    %v826 = vadd.f32 %v147, %v650
    %v827 = vadd.f32 %v148, %v653
    %v828 = vadd.f32 %v149, %v658
    %v829 = vadd.f32 %v150, %v661
    %v830 = vadd.f32 %v151, %v666
    %v831 = vadd.f32 %v152, %v669
    %v832 = vadd.f32 %v153, %v674
    %v833 = vadd.f32 %v154, %v677
    %v834 = vadd.f32 %v155, %v682
    %v835 = vadd.f32 %v156, %v685
    %v836 = vadd.f32 %v157, %v690
    %v837 = vadd.f32 %v158, %v693
    %v838 = vadd.f32 %v159, %v698
    %v839 = vadd.f32 %v160, %v701
    %v840 = vadd.f32 %v161, %v706
    %v841 = vadd.f32 %v162, %v709
    %v842 = vadd.f32 %v163, %v714
    %v843 = vadd.f32 %v164, %v717
    %v844 = vadd.f32 %v165, %v722
    %v845 = vadd.f32 %v166, %v725
    %v846 = vadd.f32 %v167, %v730
    %v847 = vadd.f32 %v168, %v733
    %v848 = vadd.f32 %v169, %v738
    %v849 = vadd.f32 %v170, %v741
    %v850 = vadd.f32 %v171, %v746
    %v851 = vadd.f32 %v172, %v749
    %v852 = vadd.f32 %v173, %v754
    %v853 = vadd.f32 %v174, %v757
    %v854 = vadd.f32 %v175, %v762
    %v855 = vadd.f32 %v176, %v765
    %v856 = vadd.f32 %v177, %v770
    %v857 = vadd.f32 %v178, %v773
    %v858 = vadd.f32 %v179, %v778
    %v859 = vadd.f32 %v180, %v781
    %v860 = vadd.f32 %v181, %v786
    %v861 = vadd.f32 %v182, %v789
    %v862 = vadd.f32 %v183, %v794
    %v863 = vadd.f32 %v184, %v797
    %864 = vst [vmem:[#allocation2] sm:$0xff] %v800
    %865 = vst [vmem:[#allocation2 + $0x8] sm:$0xff] %v801
    %866 = vst [vmem:[#allocation2 + $0x10] sm:$0xff] %v802
    %867 = vst [vmem:[#allocation2 + $0x18] sm:$0xff] %v803
    %868 = vst [vmem:[#allocation2 + $0x20] sm:$0xff] %v804
    %869 = vst [vmem:[#allocation2 + $0x28] sm:$0xff] %v805
    %870 = vst [vmem:[#allocation2 + $0x30] sm:$0xff] %v806
    %871 = vst [vmem:[#allocation2 + $0x38] sm:$0xff] %v807
    %872 = vst [vmem:[#allocation2 + $0x40] sm:$0xff] %v808
    %873 = vst [vmem:[#allocation2 + $0x48] sm:$0xff] %v809
    %874 = vst [vmem:[#allocation2 + $0x50] sm:$0xff] %v810
    %875 = vst [vmem:[#allocation2 + $0x58] sm:$0xff] %v811
    %876 = vst [vmem:[#allocation2 + $0x60] sm:$0xff] %v812
    %877 = vst [vmem:[#allocation2 + $0x68] sm:$0xff] %v813
    %878 = vst [vmem:[#allocation2 + $0x70] sm:$0xff] %v814
    %879 = vst [vmem:[#allocation2 + $0x78] sm:$0xff] %v815
    %880 = vst [vmem:[#allocation2 + $0x80] sm:$0xff] %v816
    %881 = vst [vmem:[#allocation2 + $0x88] sm:$0xff] %v817
    %882 = vst [vmem:[#allocation2 + $0x90] sm:$0xff] %v818
    %883 = vst [vmem:[#allocation2 + $0x98] sm:$0xff] %v819
    %884 = vst [vmem:[#allocation2 + $0xa0] sm:$0xff] %v820
    %885 = vst [vmem:[#allocation2 + $0xa8] sm:$0xff] %v821
    %886 = vst [vmem:[#allocation2 + $0xb0] sm:$0xff] %v822
    %887 = vst [vmem:[#allocation2 + $0xb8] sm:$0xff] %v823
    %888 = vst [vmem:[#allocation2 + $0xc0] sm:$0xff] %v824
    %889 = vst [vmem:[#allocation2 + $0xc8] sm:$0xff] %v825
    %890 = vst [vmem:[#allocation2 + $0xd0] sm:$0xff] %v826
    %891 = vst [vmem:[#allocation2 + $0xd8] sm:$0xff] %v827
    %892 = vst [vmem:[#allocation2 + $0xe0] sm:$0xff] %v828
    %893 = vst [vmem:[#allocation2 + $0xe8] sm:$0xff] %v829
    %894 = vst [vmem:[#allocation2 + $0xf0] sm:$0xff] %v830
    %895 = vst [vmem:[#allocation2 + $0xf8] sm:$0xff] %v831
    %896 = vst [vmem:[#allocation2 + $0x100] sm:$0xff] %v832
    %897 = vst [vmem:[#allocation2 + $0x108] sm:$0xff] %v833
    %898 = vst [vmem:[#allocation2 + $0x110] sm:$0xff] %v834
    %899 = vst [vmem:[#allocation2 + $0x118] sm:$0xff] %v835
    %900 = vst [vmem:[#allocation2 + $0x120] sm:$0xff] %v836
    %901 = vst [vmem:[#allocation2 + $0x128] sm:$0xff] %v837
    %902 = vst [vmem:[#allocation2 + $0x130] sm:$0xff] %v838
    %903 = vst [vmem:[#allocation2 + $0x138] sm:$0xff] %v839
    %904 = vst [vmem:[#allocation2 + $0x140] sm:$0xff] %v840
    %905 = vst [vmem:[#allocation2 + $0x148] sm:$0xff] %v841
    %906 = vst [vmem:[#allocation2 + $0x150] sm:$0xff] %v842
    %907 = vst [vmem:[#allocation2 + $0x158] sm:$0xff] %v843
    %908 = vst [vmem:[#allocation2 + $0x160] sm:$0xff] %v844
    %909 = vst [vmem:[#allocation2 + $0x168] sm:$0xff] %v845
    %910 = vst [vmem:[#allocation2 + $0x170] sm:$0xff] %v846
    %911 = vst [vmem:[#allocation2 + $0x178] sm:$0xff] %v847
    %912 = vst [vmem:[#allocation2 + $0x180] sm:$0xff] %v848
    %913 = vst [vmem:[#allocation2 + $0x188] sm:$0xff] %v849
    %914 = vst [vmem:[#allocation2 + $0x190] sm:$0xff] %v850
    %915 = vst [vmem:[#allocation2 + $0x198] sm:$0xff] %v851
    %916 = vst [vmem:[#allocation2 + $0x1a0] sm:$0xff] %v852
    %917 = vst [vmem:[#allocation2 + $0x1a8] sm:$0xff] %v853
    %918 = vst [vmem:[#allocation2 + $0x1b0] sm:$0xff] %v854
    %919 = vst [vmem:[#allocation2 + $0x1b8] sm:$0xff] %v855
    %920 = vst [vmem:[#allocation2 + $0x1c0] sm:$0xff] %v856
    %921 = vst [vmem:[#allocation2 + $0x1c8] sm:$0xff] %v857
    %922 = vst [vmem:[#allocation2 + $0x1d0] sm:$0xff] %v858
    %923 = vst [vmem:[#allocation2 + $0x1d8] sm:$0xff] %v859
    %924 = vst [vmem:[#allocation2 + $0x1e0] sm:$0xff] %v860
    %925 = vst [vmem:[#allocation2 + $0x1e8] sm:$0xff] %v861
    %926 = vst [vmem:[#allocation2 + $0x1f0] sm:$0xff] %v862
    %927 = vst [vmem:[#allocation2 + $0x1f8] sm:$0xff] %v863
    // Predicated region
    $region34: #{mixed6a_forward.5} parent=1 // pred_check
      %p928 = pneg %p53
    $region35: #{mixed6a_forward.5} parent=1 // pred_check_branch
      %930 = sbr.rel (%p928) target = $region37
    $region36: #{mixed6a_forward.5} parent=1 // pred_region
      %v931 = vld [vmem:[#allocation2] sm:$0xff]
      %v932 = vld [vmem:[#allocation2 + $0x8] sm:$0xff]
      %v933 = vld [vmem:[#allocation2 + $0x10] sm:$0xff]
      %v934 = vld [vmem:[#allocation2 + $0x18] sm:$0xff]
      %v935 = vld [vmem:[#allocation2 + $0x20] sm:$0xff]
      %v936 = vld [vmem:[#allocation2 + $0x28] sm:$0xff]
      %v937 = vld [vmem:[#allocation2 + $0x30] sm:$0xff]
      %v938 = vld [vmem:[#allocation2 + $0x38] sm:$0xff]
      %v939 = vld [vmem:[#allocation2 + $0x40] sm:$0xff]
      %v940 = vld [vmem:[#allocation2 + $0x48] sm:$0xff]
      %v941 = vld [vmem:[#allocation2 + $0x50] sm:$0xff]
      %v942 = vld [vmem:[#allocation2 + $0x58] sm:$0xff]
      %v943 = vld [vmem:[#allocation2 + $0x60] sm:$0xff]
      %v944 = vld [vmem:[#allocation2 + $0x68] sm:$0xff]
      %v945 = vld [vmem:[#allocation2 + $0x70] sm:$0xff]
      %v946 = vld [vmem:[#allocation2 + $0x78] sm:$0xff]
      %v947 = vld [vmem:[#allocation2 + $0x80] sm:$0xff]
      %v948 = vld [vmem:[#allocation2 + $0x88] sm:$0xff]
      %v949 = vld [vmem:[#allocation2 + $0x90] sm:$0xff]
      %v950 = vld [vmem:[#allocation2 + $0x98] sm:$0xff]
      %v951 = vld [vmem:[#allocation2 + $0xa0] sm:$0xff]
      %v952 = vld [vmem:[#allocation2 + $0xa8] sm:$0xff]
      %v953 = vld [vmem:[#allocation2 + $0xb0] sm:$0xff]
      %v954 = vld [vmem:[#allocation2 + $0xb8] sm:$0xff]
      %v955 = vld [vmem:[#allocation2 + $0xc0] sm:$0xff]
      %v956 = vld [vmem:[#allocation2 + $0xc8] sm:$0xff]
      %v957 = vld [vmem:[#allocation2 + $0xd0] sm:$0xff]
      %v958 = vld [vmem:[#allocation2 + $0xd8] sm:$0xff]
      %v959 = vld [vmem:[#allocation2 + $0xe0] sm:$0xff]
      %v960 = vld [vmem:[#allocation2 + $0xe8] sm:$0xff]
      %v961 = vld [vmem:[#allocation2 + $0xf0] sm:$0xff]
      %v962 = vld [vmem:[#allocation2 + $0xf8] sm:$0xff]
      %v963 = vld [vmem:[#allocation2 + $0x100] sm:$0xff]
      %v964 = vld [vmem:[#allocation2 + $0x108] sm:$0xff]
      %v965 = vld [vmem:[#allocation2 + $0x110] sm:$0xff]
      %v966 = vld [vmem:[#allocation2 + $0x118] sm:$0xff]
      %v967 = vld [vmem:[#allocation2 + $0x120] sm:$0xff]
      %v968 = vld [vmem:[#allocation2 + $0x128] sm:$0xff]
      %v969 = vld [vmem:[#allocation2 + $0x130] sm:$0xff]
      %v970 = vld [vmem:[#allocation2 + $0x138] sm:$0xff]
      %v971 = vld [vmem:[#allocation2 + $0x140] sm:$0xff]
      %v972 = vld [vmem:[#allocation2 + $0x148] sm:$0xff]
      %v973 = vld [vmem:[#allocation2 + $0x150] sm:$0xff]
      %v974 = vld [vmem:[#allocation2 + $0x158] sm:$0xff]
      %v975 = vld [vmem:[#allocation2 + $0x160] sm:$0xff]
      %v976 = vld [vmem:[#allocation2 + $0x168] sm:$0xff]
      %v977 = vld [vmem:[#allocation2 + $0x170] sm:$0xff]
      %v978 = vld [vmem:[#allocation2 + $0x178] sm:$0xff]
      %v979 = vld [vmem:[#allocation2 + $0x180] sm:$0xff]
      %v980 = vld [vmem:[#allocation2 + $0x188] sm:$0xff]
      %v981 = vld [vmem:[#allocation2 + $0x190] sm:$0xff]
      %v982 = vld [vmem:[#allocation2 + $0x198] sm:$0xff]
      %v983 = vld [vmem:[#allocation2 + $0x1a0] sm:$0xff]
      %v984 = vld [vmem:[#allocation2 + $0x1a8] sm:$0xff]
      %v985 = vld [vmem:[#allocation2 + $0x1b0] sm:$0xff]
      %v986 = vld [vmem:[#allocation2 + $0x1b8] sm:$0xff]
      %v987 = vld [vmem:[#allocation2 + $0x1c0] sm:$0xff]
      %v988 = vld [vmem:[#allocation2 + $0x1c8] sm:$0xff]
      %v989 = vld [vmem:[#allocation2 + $0x1d0] sm:$0xff]
      %v990 = vld [vmem:[#allocation2 + $0x1d8] sm:$0xff]
      %v991 = vld [vmem:[#allocation2 + $0x1e0] sm:$0xff]
      %v992 = vld [vmem:[#allocation2 + $0x1e8] sm:$0xff]
      %v993 = vld [vmem:[#allocation2 + $0x1f0] sm:$0xff]
      %v994 = vld [vmem:[#allocation2 + $0x1f8] sm:$0xff]
      %v995 = vld [vmem:[#allocation5] sm:$0x1]
      %v997 = vlaneseq
      %v998 = vshrl.u32 %v997, 7
      %v999 = vsub.s32 0, %v998
      %v1000 = vrot.slane %v995, %v999
      %v1002 = vmul.f32 %v931, %v1000
      %v1003 = vmul.f32 %v932, %v1000
      %v1004 = vmul.f32 %v933, %v1000
      %v1005 = vmul.f32 %v934, %v1000
      %v1006 = vmul.f32 %v935, %v1000
      %v1007 = vmul.f32 %v936, %v1000
      %v1008 = vmul.f32 %v937, %v1000
      %v1009 = vmul.f32 %v938, %v1000
      %v1010 = vmul.f32 %v939, %v1000
      %v1011 = vmul.f32 %v940, %v1000
      %v1012 = vmul.f32 %v941, %v1000
      %v1013 = vmul.f32 %v942, %v1000
      %v1014 = vmul.f32 %v943, %v1000
      %v1015 = vmul.f32 %v944, %v1000
      %v1016 = vmul.f32 %v945, %v1000
      %v1017 = vmul.f32 %v946, %v1000
      %v1018 = vmul.f32 %v947, %v1000
      %v1019 = vmul.f32 %v948, %v1000
      %v1020 = vmul.f32 %v949, %v1000
      %v1021 = vmul.f32 %v950, %v1000
      %v1022 = vmul.f32 %v951, %v1000
      %v1023 = vmul.f32 %v952, %v1000
      %v1024 = vmul.f32 %v953, %v1000
      %v1025 = vmul.f32 %v954, %v1000
      %v1026 = vmul.f32 %v955, %v1000
      %v1027 = vmul.f32 %v956, %v1000
      %v1028 = vmul.f32 %v957, %v1000
      %v1029 = vmul.f32 %v958, %v1000
      %v1030 = vmul.f32 %v959, %v1000
      %v1031 = vmul.f32 %v960, %v1000
      %v1032 = vmul.f32 %v961, %v1000
      %v1033 = vmul.f32 %v962, %v1000
      %v1034 = vmul.f32 %v963, %v1000
      %v1035 = vmul.f32 %v964, %v1000
      %v1036 = vmul.f32 %v965, %v1000
      %v1037 = vmul.f32 %v966, %v1000
      %v1038 = vmul.f32 %v967, %v1000
      %v1039 = vmul.f32 %v968, %v1000
      %v1040 = vmul.f32 %v969, %v1000
      %v1041 = vmul.f32 %v970, %v1000
      %v1042 = vmul.f32 %v971, %v1000
      %v1043 = vmul.f32 %v972, %v1000
      %v1044 = vmul.f32 %v973, %v1000
      %v1045 = vmul.f32 %v974, %v1000
      %v1046 = vmul.f32 %v975, %v1000
      %v1047 = vmul.f32 %v976, %v1000
      %v1048 = vmul.f32 %v977, %v1000
      %v1049 = vmul.f32 %v978, %v1000
      %v1050 = vmul.f32 %v979, %v1000
      %v1051 = vmul.f32 %v980, %v1000
      %v1052 = vmul.f32 %v981, %v1000
      %v1053 = vmul.f32 %v982, %v1000
      %v1054 = vmul.f32 %v983, %v1000
      %v1055 = vmul.f32 %v984, %v1000
      %v1056 = vmul.f32 %v985, %v1000
      %v1057 = vmul.f32 %v986, %v1000
      %v1058 = vmul.f32 %v987, %v1000
      %v1059 = vmul.f32 %v988, %v1000
      %v1060 = vmul.f32 %v989, %v1000
      %v1061 = vmul.f32 %v990, %v1000
      %v1062 = vmul.f32 %v991, %v1000
      %v1063 = vmul.f32 %v992, %v1000
      %v1064 = vmul.f32 %v993, %v1000
      %v1065 = vmul.f32 %v994, %v1000
      %v1066 = vld [vmem:[#allocation7] sm:$0x1]
      %v1068 = vlaneseq
      %v1069 = vshrl.u32 %v1068, 7
      %v1070 = vsub.s32 0, %v1069
      %v1071 = vrot.slane %v1066, %v1070
      %v1073 = vadd.f32 %v1002, %v1071
      %v1074 = vadd.f32 %v1003, %v1071
      %v1075 = vadd.f32 %v1004, %v1071
      %v1076 = vadd.f32 %v1005, %v1071
      %v1077 = vadd.f32 %v1006, %v1071
      %v1078 = vadd.f32 %v1007, %v1071
      %v1079 = vadd.f32 %v1008, %v1071
      %v1080 = vadd.f32 %v1009, %v1071
      %v1081 = vadd.f32 %v1010, %v1071
      %v1082 = vadd.f32 %v1011, %v1071
      %v1083 = vadd.f32 %v1012, %v1071
      %v1084 = vadd.f32 %v1013, %v1071
      %v1085 = vadd.f32 %v1014, %v1071
      %v1086 = vadd.f32 %v1015, %v1071
      %v1087 = vadd.f32 %v1016, %v1071
      %v1088 = vadd.f32 %v1017, %v1071
      %v1089 = vadd.f32 %v1018, %v1071
      %v1090 = vadd.f32 %v1019, %v1071
      %v1091 = vadd.f32 %v1020, %v1071
      %v1092 = vadd.f32 %v1021, %v1071
      %v1093 = vadd.f32 %v1022, %v1071
      %v1094 = vadd.f32 %v1023, %v1071
      %v1095 = vadd.f32 %v1024, %v1071
      %v1096 = vadd.f32 %v1025, %v1071
      %v1097 = vadd.f32 %v1026, %v1071
      %v1098 = vadd.f32 %v1027, %v1071
      %v1099 = vadd.f32 %v1028, %v1071
      %v1100 = vadd.f32 %v1029, %v1071
      %v1101 = vadd.f32 %v1030, %v1071
      %v1102 = vadd.f32 %v1031, %v1071
      %v1103 = vadd.f32 %v1032, %v1071
      %v1104 = vadd.f32 %v1033, %v1071
      %v1105 = vadd.f32 %v1034, %v1071
      %v1106 = vadd.f32 %v1035, %v1071
      %v1107 = vadd.f32 %v1036, %v1071
      %v1108 = vadd.f32 %v1037, %v1071
      %v1109 = vadd.f32 %v1038, %v1071
      %v1110 = vadd.f32 %v1039, %v1071
      %v1111 = vadd.f32 %v1040, %v1071
      %v1112 = vadd.f32 %v1041, %v1071
      %v1113 = vadd.f32 %v1042, %v1071
      %v1114 = vadd.f32 %v1043, %v1071
      %v1115 = vadd.f32 %v1044, %v1071
      %v1116 = vadd.f32 %v1045, %v1071
      %v1117 = vadd.f32 %v1046, %v1071
      %v1118 = vadd.f32 %v1047, %v1071
      %v1119 = vadd.f32 %v1048, %v1071
      %v1120 = vadd.f32 %v1049, %v1071
      %v1121 = vadd.f32 %v1050, %v1071
      %v1122 = vadd.f32 %v1051, %v1071
      %v1123 = vadd.f32 %v1052, %v1071
      %v1124 = vadd.f32 %v1053, %v1071
      %v1125 = vadd.f32 %v1054, %v1071
      %v1126 = vadd.f32 %v1055, %v1071
      %v1127 = vadd.f32 %v1056, %v1071
      %v1128 = vadd.f32 %v1057, %v1071
      %v1129 = vadd.f32 %v1058, %v1071
      %v1130 = vadd.f32 %v1059, %v1071
      %v1131 = vadd.f32 %v1060, %v1071
      %v1132 = vadd.f32 %v1061, %v1071
      %v1133 = vadd.f32 %v1062, %v1071
      %v1134 = vadd.f32 %v1063, %v1071
      %v1135 = vadd.f32 %v1064, %v1071
      %v1136 = vadd.f32 %v1065, %v1071
      %v1137 = vmax.f32 %v1073, 0.0
      %v1138 = vmax.f32 %v1074, 0.0
      %v1139 = vmax.f32 %v1075, 0.0
      %v1140 = vmax.f32 %v1076, 0.0
      %v1141 = vmax.f32 %v1077, 0.0
      %v1142 = vmax.f32 %v1078, 0.0
      %v1143 = vmax.f32 %v1079, 0.0
      %v1144 = vmax.f32 %v1080, 0.0
      %v1145 = vmax.f32 %v1081, 0.0
      %v1146 = vmax.f32 %v1082, 0.0
      %v1147 = vmax.f32 %v1083, 0.0
      %v1148 = vmax.f32 %v1084, 0.0
      %v1149 = vmax.f32 %v1085, 0.0
      %v1150 = vmax.f32 %v1086, 0.0
      %v1151 = vmax.f32 %v1087, 0.0
      %v1152 = vmax.f32 %v1088, 0.0
      %v1153 = vmax.f32 %v1089, 0.0
      %v1154 = vmax.f32 %v1090, 0.0
      %v1155 = vmax.f32 %v1091, 0.0
      %v1156 = vmax.f32 %v1092, 0.0
      %v1157 = vmax.f32 %v1093, 0.0
      %v1158 = vmax.f32 %v1094, 0.0
      %v1159 = vmax.f32 %v1095, 0.0
      %v1160 = vmax.f32 %v1096, 0.0
      %v1161 = vmax.f32 %v1097, 0.0
      %v1162 = vmax.f32 %v1098, 0.0
      %v1163 = vmax.f32 %v1099, 0.0
      %v1164 = vmax.f32 %v1100, 0.0
      %v1165 = vmax.f32 %v1101, 0.0
      %v1166 = vmax.f32 %v1102, 0.0
      %v1167 = vmax.f32 %v1103, 0.0
      %v1168 = vmax.f32 %v1104, 0.0
      %v1169 = vmax.f32 %v1105, 0.0
      %v1170 = vmax.f32 %v1106, 0.0
      %v1171 = vmax.f32 %v1107, 0.0
      %v1172 = vmax.f32 %v1108, 0.0
      %v1173 = vmax.f32 %v1109, 0.0
      %v1174 = vmax.f32 %v1110, 0.0
      %v1175 = vmax.f32 %v1111, 0.0
      %v1176 = vmax.f32 %v1112, 0.0
      %v1177 = vmax.f32 %v1113, 0.0
      %v1178 = vmax.f32 %v1114, 0.0
      %v1179 = vmax.f32 %v1115, 0.0
      %v1180 = vmax.f32 %v1116, 0.0
      %v1181 = vmax.f32 %v1117, 0.0
      %v1182 = vmax.f32 %v1118, 0.0
      %v1183 = vmax.f32 %v1119, 0.0
      %v1184 = vmax.f32 %v1120, 0.0
      %v1185 = vmax.f32 %v1121, 0.0
      %v1186 = vmax.f32 %v1122, 0.0
      %v1187 = vmax.f32 %v1123, 0.0
      %v1188 = vmax.f32 %v1124, 0.0
      %v1189 = vmax.f32 %v1125, 0.0
      %v1190 = vmax.f32 %v1126, 0.0
      %v1191 = vmax.f32 %v1127, 0.0
      %v1192 = vmax.f32 %v1128, 0.0
      %v1193 = vmax.f32 %v1129, 0.0
      %v1194 = vmax.f32 %v1130, 0.0
      %v1195 = vmax.f32 %v1131, 0.0
      %v1196 = vmax.f32 %v1132, 0.0
      %v1197 = vmax.f32 %v1133, 0.0
      %v1198 = vmax.f32 %v1134, 0.0
      %v1199 = vmax.f32 %v1135, 0.0
      %v1200 = vmax.f32 %v1136, 0.0
      %v1201 = vpack.c.bf16 %v1138, %v1137
      %v1202 = vpack.c.bf16 %v1140, %v1139
      %v1203 = vpack.c.bf16 %v1142, %v1141
      %v1204 = vpack.c.bf16 %v1144, %v1143
      %v1205 = vpack.c.bf16 %v1146, %v1145
      %v1206 = vpack.c.bf16 %v1148, %v1147
      %v1207 = vpack.c.bf16 %v1150, %v1149
      %v1208 = vpack.c.bf16 %v1152, %v1151
      %v1209 = vpack.c.bf16 %v1154, %v1153
      %v1210 = vpack.c.bf16 %v1156, %v1155
      %v1211 = vpack.c.bf16 %v1158, %v1157
      %v1212 = vpack.c.bf16 %v1160, %v1159
      %v1213 = vpack.c.bf16 %v1162, %v1161
      %v1214 = vpack.c.bf16 %v1164, %v1163
      %v1215 = vpack.c.bf16 %v1166, %v1165
      %v1216 = vpack.c.bf16 %v1168, %v1167
      %v1217 = vpack.c.bf16 %v1170, %v1169
      %v1218 = vpack.c.bf16 %v1172, %v1171
      %v1219 = vpack.c.bf16 %v1174, %v1173
      %v1220 = vpack.c.bf16 %v1176, %v1175
      %v1221 = vpack.c.bf16 %v1178, %v1177
      %v1222 = vpack.c.bf16 %v1180, %v1179
      %v1223 = vpack.c.bf16 %v1182, %v1181
      %v1224 = vpack.c.bf16 %v1184, %v1183
      %v1225 = vpack.c.bf16 %v1186, %v1185
      %v1226 = vpack.c.bf16 %v1188, %v1187
      %v1227 = vpack.c.bf16 %v1190, %v1189
      %v1228 = vpack.c.bf16 %v1192, %v1191
      %v1229 = vpack.c.bf16 %v1194, %v1193
      %v1230 = vpack.c.bf16 %v1196, %v1195
      %v1231 = vpack.c.bf16 %v1198, %v1197
      %v1232 = vpack.c.bf16 %v1200, %v1199
      %v1265 = vunpack.c.l.b16 %v1201
      %v1266 = vunpack.c.h.b16 %v1201
      %v1267 = vunpack.c.l.b16 %v1202
      %v1268 = vunpack.c.h.b16 %v1202
      %v1269 = vunpack.c.l.b16 %v1203
      %v1270 = vunpack.c.h.b16 %v1203
      %v1271 = vunpack.c.l.b16 %v1204
      %v1272 = vunpack.c.h.b16 %v1204
      %v1273 = vunpack.c.l.b16 %v1205
      %v1274 = vunpack.c.h.b16 %v1205
      %v1275 = vunpack.c.l.b16 %v1206
      %v1276 = vunpack.c.h.b16 %v1206
      %v1277 = vunpack.c.l.b16 %v1207
      %v1278 = vunpack.c.h.b16 %v1207
      %v1279 = vunpack.c.l.b16 %v1208
      %v1280 = vunpack.c.h.b16 %v1208
      %v1281 = vunpack.c.l.b16 %v1209
      %v1282 = vunpack.c.h.b16 %v1209
      %v1283 = vunpack.c.l.b16 %v1210
      %v1284 = vunpack.c.h.b16 %v1210
      %v1285 = vunpack.c.l.b16 %v1211
      %v1286 = vunpack.c.h.b16 %v1211
      %v1287 = vunpack.c.l.b16 %v1212
      %v1288 = vunpack.c.h.b16 %v1212
      %v1289 = vunpack.c.l.b16 %v1213
      %v1290 = vunpack.c.h.b16 %v1213
      %v1291 = vunpack.c.l.b16 %v1214
      %v1292 = vunpack.c.h.b16 %v1214
      %v1293 = vunpack.c.l.b16 %v1215
      %v1294 = vunpack.c.h.b16 %v1215
      %v1295 = vunpack.c.l.b16 %v1216
      %v1296 = vunpack.c.h.b16 %v1216
      %v1297 = vunpack.c.l.b16 %v1217
      %v1298 = vunpack.c.h.b16 %v1217
      %v1299 = vunpack.c.l.b16 %v1218
      %v1300 = vunpack.c.h.b16 %v1218
      %v1301 = vunpack.c.l.b16 %v1219
      %v1302 = vunpack.c.h.b16 %v1219
      %v1303 = vunpack.c.l.b16 %v1220
      %v1304 = vunpack.c.h.b16 %v1220
      %v1305 = vunpack.c.l.b16 %v1221
      %v1306 = vunpack.c.h.b16 %v1221
      %v1307 = vunpack.c.l.b16 %v1222
      %v1308 = vunpack.c.h.b16 %v1222
      %v1309 = vunpack.c.l.b16 %v1223
      %v1310 = vunpack.c.h.b16 %v1223
      %v1311 = vunpack.c.l.b16 %v1224
      %v1312 = vunpack.c.h.b16 %v1224
      %v1313 = vunpack.c.l.b16 %v1225
      %v1314 = vunpack.c.h.b16 %v1225
      %v1315 = vunpack.c.l.b16 %v1226
      %v1316 = vunpack.c.h.b16 %v1226
      %v1317 = vunpack.c.l.b16 %v1227
      %v1318 = vunpack.c.h.b16 %v1227
      %v1319 = vunpack.c.l.b16 %v1228
      %v1320 = vunpack.c.h.b16 %v1228
      %v1321 = vunpack.c.l.b16 %v1229
      %v1322 = vunpack.c.h.b16 %v1229
      %v1323 = vunpack.c.l.b16 %v1230
      %v1324 = vunpack.c.h.b16 %v1230
      %v1325 = vunpack.c.l.b16 %v1231
      %v1326 = vunpack.c.h.b16 %v1231
      %v1327 = vunpack.c.l.b16 %v1232
      %v1328 = vunpack.c.h.b16 %v1232
      %v1329 = vpack.c.b16 %v1265, %v1265
      %v1330 = vpack.c.b16 %v1266, %v1266
      %v1331 = vpack.c.b16 %v1267, %v1267
      %v1332 = vpack.c.b16 %v1268, %v1268
      %v1333 = vpack.c.b16 %v1269, %v1269
      %v1334 = vpack.c.b16 %v1270, %v1270
      %v1335 = vpack.c.b16 %v1271, %v1271
      %v1336 = vpack.c.b16 %v1272, %v1272
      %v1337 = vpack.c.b16 %v1273, %v1273
      %v1338 = vpack.c.b16 %v1274, %v1274
      %v1339 = vpack.c.b16 %v1275, %v1275
      %v1340 = vpack.c.b16 %v1276, %v1276
      %v1341 = vpack.c.b16 %v1277, %v1277
      %v1342 = vpack.c.b16 %v1278, %v1278
      %v1343 = vpack.c.b16 %v1279, %v1279
      %v1344 = vpack.c.b16 %v1280, %v1280
      %v1345 = vpack.c.b16 %v1281, %v1281
      %v1346 = vpack.c.b16 %v1282, %v1282
      %v1347 = vpack.c.b16 %v1283, %v1283
      %v1348 = vpack.c.b16 %v1284, %v1284
      %v1349 = vpack.c.b16 %v1285, %v1285
      %v1350 = vpack.c.b16 %v1286, %v1286
      %v1351 = vpack.c.b16 %v1287, %v1287
      %v1352 = vpack.c.b16 %v1288, %v1288
      %v1353 = vpack.c.b16 %v1289, %v1289
      %v1354 = vpack.c.b16 %v1290, %v1290
      %v1355 = vpack.c.b16 %v1291, %v1291
      %v1356 = vpack.c.b16 %v1292, %v1292
      %v1357 = vpack.c.b16 %v1293, %v1293
      %v1358 = vpack.c.b16 %v1294, %v1294
      %v1359 = vpack.c.b16 %v1295, %v1295
      %v1360 = vpack.c.b16 %v1296, %v1296
      %v1361 = vpack.c.b16 %v1297, %v1297
      %v1362 = vpack.c.b16 %v1298, %v1298
      %v1363 = vpack.c.b16 %v1299, %v1299
      %v1364 = vpack.c.b16 %v1300, %v1300
      %v1365 = vpack.c.b16 %v1301, %v1301
      %v1366 = vpack.c.b16 %v1302, %v1302
      %v1367 = vpack.c.b16 %v1303, %v1303
      %v1368 = vpack.c.b16 %v1304, %v1304
      %v1369 = vpack.c.b16 %v1305, %v1305
      %v1370 = vpack.c.b16 %v1306, %v1306
      %v1371 = vpack.c.b16 %v1307, %v1307
      %v1372 = vpack.c.b16 %v1308, %v1308
      %v1373 = vpack.c.b16 %v1309, %v1309
      %v1374 = vpack.c.b16 %v1310, %v1310
      %v1375 = vpack.c.b16 %v1311, %v1311
      %v1376 = vpack.c.b16 %v1312, %v1312
      %v1377 = vpack.c.b16 %v1313, %v1313
      %v1378 = vpack.c.b16 %v1314, %v1314
      %v1379 = vpack.c.b16 %v1315, %v1315
      %v1380 = vpack.c.b16 %v1316, %v1316
      %v1381 = vpack.c.b16 %v1317, %v1317
      %v1382 = vpack.c.b16 %v1318, %v1318
      %v1383 = vpack.c.b16 %v1319, %v1319
      %v1384 = vpack.c.b16 %v1320, %v1320
      %v1385 = vpack.c.b16 %v1321, %v1321
      %v1386 = vpack.c.b16 %v1322, %v1322
      %v1387 = vpack.c.b16 %v1323, %v1323
      %v1388 = vpack.c.b16 %v1324, %v1324
      %v1389 = vpack.c.b16 %v1325, %v1325
      %v1390 = vpack.c.b16 %v1326, %v1326
      %v1391 = vpack.c.b16 %v1327, %v1327
      %v1392 = vpack.c.b16 %v1328, %v1328
      %1457 = vst [vmem:[%s4] sm:$0xf] %v1329
      %1458 = vst [vmem:[%s4 + $0x4] sm:$0xf] %v1330
      %1459 = vst [vmem:[%s4 + $0x8] sm:$0xf] %v1331
      %1460 = vst [vmem:[%s4 + $0xc] sm:$0xf] %v1332
      %1461 = vst [vmem:[%s4 + $0x10] sm:$0xf] %v1333
      %1462 = vst [vmem:[%s4 + $0x14] sm:$0xf] %v1334
      %1463 = vst [vmem:[%s4 + $0x18] sm:$0xf] %v1335
      %1464 = vst [vmem:[%s4 + $0x1c] sm:$0xf] %v1336
      %1465 = vst [vmem:[%s4 + $0x20] sm:$0xf] %v1337
      %1466 = vst [vmem:[%s4 + $0x24] sm:$0xf] %v1338
      %1467 = vst [vmem:[%s4 + $0x28] sm:$0xf] %v1339
      %1468 = vst [vmem:[%s4 + $0x2c] sm:$0xf] %v1340
      %1469 = vst [vmem:[%s4 + $0x30] sm:$0xf] %v1341
      %1470 = vst [vmem:[%s4 + $0x34] sm:$0xf] %v1342
      %1471 = vst [vmem:[%s4 + $0x38] sm:$0xf] %v1343
      %1472 = vst [vmem:[%s4 + $0x3c] sm:$0xf] %v1344
      %1473 = vst [vmem:[%s4 + $0x40] sm:$0xf] %v1345
      %1474 = vst [vmem:[%s4 + $0x44] sm:$0xf] %v1346
      %1475 = vst [vmem:[%s4 + $0x48] sm:$0xf] %v1347
      %1476 = vst [vmem:[%s4 + $0x4c] sm:$0xf] %v1348
      %1477 = vst [vmem:[%s4 + $0x50] sm:$0xf] %v1349
      %1478 = vst [vmem:[%s4 + $0x54] sm:$0xf] %v1350
      %1479 = vst [vmem:[%s4 + $0x58] sm:$0xf] %v1351
      %1480 = vst [vmem:[%s4 + $0x5c] sm:$0xf] %v1352
      %1481 = vst [vmem:[%s4 + $0x60] sm:$0xf] %v1353
      %1482 = vst [vmem:[%s4 + $0x64] sm:$0xf] %v1354
      %1483 = vst [vmem:[%s4 + $0x68] sm:$0xf] %v1355
      %1484 = vst [vmem:[%s4 + $0x6c] sm:$0xf] %v1356
      %1485 = vst [vmem:[%s4 + $0x70] sm:$0xf] %v1357
      %1486 = vst [vmem:[%s4 + $0x74] sm:$0xf] %v1358
      %1487 = vst [vmem:[%s4 + $0x78] sm:$0xf] %v1359
      %1488 = vst [vmem:[%s4 + $0x7c] sm:$0xf] %v1360
      %1489 = vst [vmem:[%s4 + $0x80] sm:$0xf] %v1361
      %1490 = vst [vmem:[%s4 + $0x84] sm:$0xf] %v1362
      %1491 = vst [vmem:[%s4 + $0x88] sm:$0xf] %v1363
      %1492 = vst [vmem:[%s4 + $0x8c] sm:$0xf] %v1364
      %1493 = vst [vmem:[%s4 + $0x90] sm:$0xf] %v1365
      %1494 = vst [vmem:[%s4 + $0x94] sm:$0xf] %v1366
      %1495 = vst [vmem:[%s4 + $0x98] sm:$0xf] %v1367
      %1496 = vst [vmem:[%s4 + $0x9c] sm:$0xf] %v1368
      %1497 = vst [vmem:[%s4 + $0xa0] sm:$0xf] %v1369
      %1498 = vst [vmem:[%s4 + $0xa4] sm:$0xf] %v1370
      %1499 = vst [vmem:[%s4 + $0xa8] sm:$0xf] %v1371
      %1500 = vst [vmem:[%s4 + $0xac] sm:$0xf] %v1372
      %1501 = vst [vmem:[%s4 + $0xb0] sm:$0xf] %v1373
      %1502 = vst [vmem:[%s4 + $0xb4] sm:$0xf] %v1374
      %1503 = vst [vmem:[%s4 + $0xb8] sm:$0xf] %v1375
      %1504 = vst [vmem:[%s4 + $0xbc] sm:$0xf] %v1376
      %1505 = vst [vmem:[%s4 + $0xc0] sm:$0xf] %v1377
      %1506 = vst [vmem:[%s4 + $0xc4] sm:$0xf] %v1378
      %1507 = vst [vmem:[%s4 + $0xc8] sm:$0xf] %v1379
      %1508 = vst [vmem:[%s4 + $0xcc] sm:$0xf] %v1380
      %1509 = vst [vmem:[%s4 + $0xd0] sm:$0xf] %v1381
      %1510 = vst [vmem:[%s4 + $0xd4] sm:$0xf] %v1382
      %1511 = vst [vmem:[%s4 + $0xd8] sm:$0xf] %v1383
      %1512 = vst [vmem:[%s4 + $0xdc] sm:$0xf] %v1384
      %1513 = vst [vmem:[%s4 + $0xe0] sm:$0xf] %v1385
      %1514 = vst [vmem:[%s4 + $0xe4] sm:$0xf] %v1386
      %1515 = vst [vmem:[%s4 + $0xe8] sm:$0xf] %v1387
      %1516 = vst [vmem:[%s4 + $0xec] sm:$0xf] %v1388
      %1517 = vst [vmem:[%s4 + $0xf0] sm:$0xf] %v1389
      %1518 = vst [vmem:[%s4 + $0xf4] sm:$0xf] %v1390
      %1519 = vst [vmem:[%s4 + $0xf8] sm:$0xf] %v1391
      %1520 = vst [vmem:[%s4 + $0xfc] sm:$0xf] %v1392
    $region37: #{mixed6a_forward.5} parent=1 // pred_fallthru
      _
    // Predicated region
    $region38: #{mixed6a_forward.5} parent=1 // pred_check
      _
    $region39: #{mixed6a_forward.5} parent=1 // pred_check_branch
      %1522 = sbr.rel (0) target = $region41
    $region40: #{mixed6a_forward.5} parent=1 // pred_region
      _
    $region41: #{mixed6a_forward.5} parent=1 // pred_fallthru
      _
    // Predicated region
    $region42: #{mixed6a_forward.5} parent=1 // pred_check
      _
    $region43: #{mixed6a_forward.5} parent=1 // pred_check_branch
      %1524 = sbr.rel (0) target = $region45
    $region44: #{mixed6a_forward.5} parent=1 // pred_region
      _
    $region45: #{mixed6a_forward.5} parent=1 // pred_fallthru
      _
    %1525 = vsyncpa [#allocation4], 1
    %1526 = vsyncpa [#allocation6], 1

// kernel: mixed6a_forward.6
$region0: #{mixed6a_forward.6}
  #allocation0 [shape = 'u32[]', space=smem, size = 0x4, offset = 0x4, fixed_abs, tag = 'smem constant byte address 0x4 - core index']
  #allocation1 [shape = 'u32[144,128]{1,0:T(1,128)}', space=vmem, size = 0x12000, scoped, tag = 'internal scratch']
  #allocation2 [shape = 'f32[512,128]{1,0:T(8,128)}', space=vmem, size = 0x40000, scoped, tag = 'scratch operand']
  %s0 = inlined_call_operand.vmem [shape: bf16[9,512,64], index: 0, kind: input, shape index: {}]
  %s1 = inlined_call_operand.vmem [shape: bf16[9,64,128], index: 1, kind: input, shape index: {}]
  %s2 = inlined_call_operand.vmem [shape: f32[1,128], index: 2, kind: input, shape index: {}]
  %s3 = inlined_call_operand.vmem [shape: f32[1,128], index: 3, kind: input, shape index: {}]
  %s4 = inlined_call_operand.vmem [shape: bf16[512,128], index: 4, kind: output, shape index: {}]
  %s5 = sld [smem:[#allocation0]]
  $region57: #{mixed6a_forward.6} parent=0
    _
  %s7 = ssub.s32 1, %s5
  %s8 = scalar_select 0, %s7, %s5
  loop: start=0, step=1, limit=11
  $region2: #{mixed6a_forward.6} parent=0 // loop_pre_header
    _
  $region3: #{mixed6a_forward.6} parent=0 // loop_header
    %s10 = sphi 0, %s14
    %p11 = scmp.ge.s32.totalorder %s10, 11
    %s17 = sphi 0, %s29
    %s18 = sphi 0, %s25
    %s19 = sphi 0, %s17
    %s20 = sphi 0, %s18
    %s21 = sphi 0, %s19
    %s22 = sphi 0, %s20
    %s34 = sphi 0, %s36
    %s37 = sphi 0, %s34
    %s38 = sphi 0, %s37
    %s54 = sphi 0, %s38
    %s60 = sphi 0, %s62
    %s63 = sphi 0, %s60
    %s64 = sphi 0, %s63
    %s80 = sphi 0, %s64
    %s84 = sphi 0, %s84
    %s86 = sphi 0, %s84
    %s87 = sphi 0, %s86
    %s101 = sphi 0, %s87
    %s105 = sphi 0, %s105
    %s107 = sphi 0, %s105
    %s108 = sphi 0, %s107
    %s122 = sphi 0, %s108
    %s128 = sphi 0, %s130
    %s131 = sphi 0, %s128
    %s132 = sphi 0, %s131
    %s148 = sphi 0, %s132
  $region4: #{mixed6a_forward.6} parent=0 // loop_header_branch
    %13 = sbr.rel (%p11) target = $region8
  $region5: #{mixed6a_forward.6} parent=0 // loop_body
    %s15 = ssub.s32 %s10, 1
    %s16 = ssub.s32 %s10, 2
    %s23 = sadd.s32 1, %s18
    %p24 = scmp.ge.s32.totalorder %s23, 9
    %s25 = scalar_select %p24, 0, %s23
    %s26 = sadd.s32 1, %s17
    %s27 = scalar_select %p24, %s26, %s17
    %p28 = scmp.ge.s32.totalorder %s27, 1
    %s29 = scalar_select %p28, 0, %s27
    %s30 = ssub.s32 %s18, %s25
    %s31 = ssub.s32 %s17, %s29
    %s32 = sor.u32 %s30, %s31
    %p33 = scmp.eq.s32.totalorder %s32, 0
    %s35 = sadd.s32 %s34, 1
    %s36 = scalar_select %p33, %s34, %s35
    %p39 = pneg %p33
    %p40 = scmp.eq.s32.totalorder %s10, 8
    %p41 = por %p39, %p40
    %p42 = scmp.ne.s32.totalorder %s34, %s37
    %p43 = scmp.eq.s32.totalorder %s10, 0
    %p44 = por %p42, %p43
    %p45 = scmp.ne.s32.totalorder %s34, %s37
    %p46 = scmp.eq.s32.totalorder %s15, 8
    %p47 = por %p45, %p46
    %p48 = scmp.ne.s32.totalorder %s37, %s38
    %p49 = scmp.eq.s32.totalorder %s15, 0
    %p50 = por %p48, %p49
    %p51 = scmp.ne.s32.totalorder %s37, %s38
    %p52 = scmp.eq.s32.totalorder %s16, 8
    %p53 = por %p51, %p52
    %p55 = scmp.ne.s32.totalorder %s38, %s54
    %p56 = scmp.eq.s32.totalorder %s16, 0
    %p57 = por %p55, %p56
    %s58 = ssub.s32 %s18, %s25
    %p59 = scmp.eq.s32.totalorder %s58, 0
    %s61 = sadd.s32 %s60, 1
    %s62 = scalar_select %p59, %s60, %s61
    %p65 = pneg %p59
    %p66 = scmp.eq.s32.totalorder %s10, 8
    %p67 = por %p65, %p66
    %p68 = scmp.ne.s32.totalorder %s60, %s63
    %p69 = scmp.eq.s32.totalorder %s10, 0
    %p70 = por %p68, %p69
    %p71 = scmp.ne.s32.totalorder %s60, %s63
    %p72 = scmp.eq.s32.totalorder %s15, 8
    %p73 = por %p71, %p72
    %p74 = scmp.ne.s32.totalorder %s63, %s64
    %p75 = scmp.eq.s32.totalorder %s15, 0
    %p76 = por %p74, %p75
    %p77 = scmp.ne.s32.totalorder %s63, %s64
    %p78 = scmp.eq.s32.totalorder %s16, 8
    %p79 = por %p77, %p78
    %p81 = scmp.ne.s32.totalorder %s64, %s80
    %p82 = scmp.eq.s32.totalorder %s16, 0
    %p83 = por %p81, %p82
    %s85 = sadd.s32 %s84, 1
    %p88 = scmp.eq.s32.totalorder %s10, 8
    %p89 = scmp.ne.s32.totalorder %s84, %s86
    %p90 = scmp.eq.s32.totalorder %s10, 0
    %p91 = por %p89, %p90
    %p92 = scmp.ne.s32.totalorder %s84, %s86
    %p93 = scmp.eq.s32.totalorder %s15, 8
    %p94 = por %p92, %p93
    %p95 = scmp.ne.s32.totalorder %s86, %s87
    %p96 = scmp.eq.s32.totalorder %s15, 0
    %p97 = por %p95, %p96
    %p98 = scmp.ne.s32.totalorder %s86, %s87
    %p99 = scmp.eq.s32.totalorder %s16, 8
    %p100 = por %p98, %p99
    %p102 = scmp.ne.s32.totalorder %s87, %s101
    %p103 = scmp.eq.s32.totalorder %s16, 0
    %p104 = por %p102, %p103
    %s106 = sadd.s32 %s105, 1
    %p109 = scmp.eq.s32.totalorder %s10, 8
    %p110 = scmp.ne.s32.totalorder %s105, %s107
    %p111 = scmp.eq.s32.totalorder %s10, 0
    %p112 = por %p110, %p111
    %p113 = scmp.ne.s32.totalorder %s105, %s107
    %p114 = scmp.eq.s32.totalorder %s15, 8
    %p115 = por %p113, %p114
    %p116 = scmp.ne.s32.totalorder %s107, %s108
    %p117 = scmp.eq.s32.totalorder %s15, 0
    %p118 = por %p116, %p117
    %p119 = scmp.ne.s32.totalorder %s107, %s108
    %p120 = scmp.eq.s32.totalorder %s16, 8
    %p121 = por %p119, %p120
    %p123 = scmp.ne.s32.totalorder %s108, %s122
    %p124 = scmp.eq.s32.totalorder %s16, 0
    %p125 = por %p123, %p124
    %s126 = ssub.s32 %s17, %s29
    %p127 = scmp.eq.s32.totalorder %s126, 0
    %s129 = sadd.s32 %s128, 1
    %s130 = scalar_select %p127, %s128, %s129
    %p133 = pneg %p127
    %p134 = scmp.eq.s32.totalorder %s10, 8
    %p135 = por %p133, %p134
    %p136 = scmp.ne.s32.totalorder %s128, %s131
    %p137 = scmp.eq.s32.totalorder %s10, 0
    %p138 = por %p136, %p137
    %p139 = scmp.ne.s32.totalorder %s128, %s131
    %p140 = scmp.eq.s32.totalorder %s15, 8
    %p141 = por %p139, %p140
    %p142 = scmp.ne.s32.totalorder %s131, %s132
    %p143 = scmp.eq.s32.totalorder %s15, 0
    %p144 = por %p142, %p143
    %p145 = scmp.ne.s32.totalorder %s131, %s132
    %p146 = scmp.eq.s32.totalorder %s16, 8
    %p147 = por %p145, %p146
    %p149 = scmp.ne.s32.totalorder %s132, %s148
    %p150 = scmp.eq.s32.totalorder %s16, 0
    %p151 = por %p149, %p150
    %p152 = scmp.le.s32.totalorder 1, %s10
    %p153 = scmp.lt.s32.totalorder %s10, 10
    %p154 = pnand %p152, %p153
    %p155 = pneg %p154
    // Predicated region
    $region9: #{mixed6a_forward.6} parent=5 // pred_check
      _
    $region10: #{mixed6a_forward.6} parent=5 // pred_check_branch
      %157 = sbr.rel (%p154) target = $region12
    $region11: #{mixed6a_forward.6} parent=5 // pred_region
      %s158 = ssub.s32 %s10, 1
      // Predicated region
      $region13: #{mixed6a_forward.6} parent=11 // pred_check
        %p159 = pneg %p97
      $region14: #{mixed6a_forward.6} parent=11 // pred_check_branch
        %161 = sbr.rel (%p159) target = $region16
      $region15: #{mixed6a_forward.6} parent=11 // pred_region
        _
      $region16: #{mixed6a_forward.6} parent=11 // pred_fallthru
        _
      // Predicated region
      $region17: #{mixed6a_forward.6} parent=11 // pred_check
        %p162 = pneg %p118
      $region18: #{mixed6a_forward.6} parent=11 // pred_check_branch
        %164 = sbr.rel (%p162) target = $region20
      $region19: #{mixed6a_forward.6} parent=11 // pred_region
        _
      $region20: #{mixed6a_forward.6} parent=11 // pred_fallthru
        _
    $region12: #{mixed6a_forward.6} parent=5 // pred_fallthru
      _
    %p165 = scmp.lt.s32.totalorder %s10, 9
    // Predicated region
    $region21: #{mixed6a_forward.6} parent=5 // pred_check
      %p166 = pneg %p165
    $region22: #{mixed6a_forward.6} parent=5 // pred_check_branch
      %168 = sbr.rel (%p166) target = $region24
    $region23: #{mixed6a_forward.6} parent=5 // pred_region
      // Predicated region
      $region25: #{mixed6a_forward.6} parent=23 // pred_check
        %p169 = pneg %p44
      $region26: #{mixed6a_forward.6} parent=23 // pred_check_branch
        %171 = sbr.rel (%p169) target = $region28
      $region27: #{mixed6a_forward.6} parent=23 // pred_region
        %s172 = smul.u32 64, %s17
        %p173 = scmp.lt.s32.totalorder %s18, 8
        %s174 = scalar_select %p173, %s18, 8
        %p175 = scmp.lt.s32.totalorder %s172, 63
        %s176 = scalar_select %p175, %s172, 63
        %s177 = smul.addr %s174, 64
        %s178 = sadd.s32 %s176, %s177
        %s179 = smul.addr %s178, 4
        %s180 = scalar_lea.vmem %s0, %s179
        %s181 = smul.u32 64, %s17
      $region28: #{mixed6a_forward.6} parent=23 // pred_fallthru
        _
      // Predicated region
      $region29: #{mixed6a_forward.6} parent=23 // pred_check
        %p182 = pneg %p70
      $region30: #{mixed6a_forward.6} parent=23 // pred_check_branch
        %184 = sbr.rel (%p182) target = $region32
      $region31: #{mixed6a_forward.6} parent=23 // pred_region
        %p185 = scmp.lt.s32.totalorder %s18, 8
        %s186 = scalar_select %p185, %s18, 8
        %s187 = smul.addr %s186, 8
        %s188 = smul.addr %s187, 4
        %s189 = scalar_lea.vmem %s1, %s188
      $region32: #{mixed6a_forward.6} parent=23 // pred_fallthru
        _
    $region24: #{mixed6a_forward.6} parent=5 // pred_fallthru
      _
    %p190 = scmp.le.s32.totalorder 1, %s10
    %p191 = scmp.lt.s32.totalorder %s10, 10
    %p192 = pnand %p190, %p191
    %p193 = pneg %p192
    // Predicated region
    $region33: #{mixed6a_forward.6} parent=5 // pred_check
      _
    $region34: #{mixed6a_forward.6} parent=5 // pred_check_branch
      %195 = sbr.rel (%p192) target = $region36
    $region35: #{mixed6a_forward.6} parent=5 // pred_region
      %s196 = ssub.s32 %s10, 1
      %s197 = smul.u32 64, %s19
      %p198 = scmp.lt.s32.totalorder %s20, 8
      %s199 = scalar_select %p198, %s20, 8
      %p200 = scmp.lt.s32.totalorder %s197, 63
      %s201 = scalar_select %p200, %s197, 63
      %s202 = smul.addr %s199, 64
      %s203 = sadd.s32 %s201, %s202
      %s204 = smul.addr %s203, 4
      %s205 = scalar_lea.vmem %s0, %s204
      %p206 = pneg %p50
      %p207 = pneg %p47
      %p208 = scmp.lt.s32.totalorder %s20, 8
      %s209 = scalar_select %p208, %s20, 8
      %s210 = smul.addr %s209, 8
      %s211 = smul.addr %s210, 4
      %s212 = scalar_lea.vmem %s1, %s211
      %p213 = pneg %p76
      %p214 = pneg %p73
      %p215 = pneg %p97
      %p216 = pneg %p94
      %p217 = pneg %p118
      %p218 = pneg %p115
      %p219 = pneg %p144
      %p220 = pneg %p141
      %s221 = smul.u32 64, %s19
      %p222 = scmp.lt.s32.totalorder %s221, 63
      %s223 = scalar_select %p222, %s221, 63
      %s224 = smul.addr %s223, 4
      %s225 = scalar_lea.vmem %s4, %s224
      %s226 = smul.u32 64, %s19
      %p227 = scmp.lt.s32.totalorder %s20, 8
      %s228 = scalar_select %p227, %s20, 8
      %p229 = scmp.lt.s32.totalorder %s226, 63
      %s230 = scalar_select %p229, %s226, 63
      %s231 = smul.addr %s228, 64
      %s232 = sadd.s32 %s230, %s231
      %s233 = smul.addr %s232, 4
      %s234 = scalar_lea.vmem %s0, %s233
      %s235 = smul.u32 64, %s19
      %p236 = scmp.lt.s32.totalorder %s20, 8
      %s237 = scalar_select %p236, %s20, 8
      %s238 = smul.addr %s237, 8
      %s239 = smul.addr %s238, 4
      %s240 = scalar_lea.vmem %s1, %s239
      %s241 = smul.u32 64, %s19
      %p242 = scmp.lt.s32.totalorder %s241, 63
      %s243 = scalar_select %p242, %s241, 63
      %s244 = smul.addr %s243, 4
      %s245 = scalar_lea.vmem %s4, %s244
      %s246 = smul.u32 64, %s19
      %p248 = scmp.eq.s32.totalorder %s20, 0
      // Predicated region
      $region37: #{mixed6a_forward.6} parent=35 // pred_check
        %p249 = pneg %p248
      $region38: #{mixed6a_forward.6} parent=35 // pred_check_branch
        %251 = sbr.rel (%p249) target = $region40
      $region39: #{mixed6a_forward.6} parent=35 // pred_region
        %252 = vst [vmem:[#allocation2] sm:$0xff] 0.0
        %253 = vst [vmem:[#allocation2 + $0x8] sm:$0xff] 0.0
        %254 = vst [vmem:[#allocation2 + $0x10] sm:$0xff] 0.0
        %255 = vst [vmem:[#allocation2 + $0x18] sm:$0xff] 0.0
        %256 = vst [vmem:[#allocation2 + $0x20] sm:$0xff] 0.0
        %257 = vst [vmem:[#allocation2 + $0x28] sm:$0xff] 0.0
        %258 = vst [vmem:[#allocation2 + $0x30] sm:$0xff] 0.0
        %259 = vst [vmem:[#allocation2 + $0x38] sm:$0xff] 0.0
        %260 = vst [vmem:[#allocation2 + $0x40] sm:$0xff] 0.0
        %261 = vst [vmem:[#allocation2 + $0x48] sm:$0xff] 0.0
        %262 = vst [vmem:[#allocation2 + $0x50] sm:$0xff] 0.0
        %263 = vst [vmem:[#allocation2 + $0x58] sm:$0xff] 0.0
        %264 = vst [vmem:[#allocation2 + $0x60] sm:$0xff] 0.0
        %265 = vst [vmem:[#allocation2 + $0x68] sm:$0xff] 0.0
        %266 = vst [vmem:[#allocation2 + $0x70] sm:$0xff] 0.0
        %267 = vst [vmem:[#allocation2 + $0x78] sm:$0xff] 0.0
        %268 = vst [vmem:[#allocation2 + $0x80] sm:$0xff] 0.0
        %269 = vst [vmem:[#allocation2 + $0x88] sm:$0xff] 0.0
        %270 = vst [vmem:[#allocation2 + $0x90] sm:$0xff] 0.0
        %271 = vst [vmem:[#allocation2 + $0x98] sm:$0xff] 0.0
        %272 = vst [vmem:[#allocation2 + $0xa0] sm:$0xff] 0.0
        %273 = vst [vmem:[#allocation2 + $0xa8] sm:$0xff] 0.0
        %274 = vst [vmem:[#allocation2 + $0xb0] sm:$0xff] 0.0
        %275 = vst [vmem:[#allocation2 + $0xb8] sm:$0xff] 0.0
        %276 = vst [vmem:[#allocation2 + $0xc0] sm:$0xff] 0.0
        %277 = vst [vmem:[#allocation2 + $0xc8] sm:$0xff] 0.0
        %278 = vst [vmem:[#allocation2 + $0xd0] sm:$0xff] 0.0
        %279 = vst [vmem:[#allocation2 + $0xd8] sm:$0xff] 0.0
        %280 = vst [vmem:[#allocation2 + $0xe0] sm:$0xff] 0.0
        %281 = vst [vmem:[#allocation2 + $0xe8] sm:$0xff] 0.0
        %282 = vst [vmem:[#allocation2 + $0xf0] sm:$0xff] 0.0
        %283 = vst [vmem:[#allocation2 + $0xf8] sm:$0xff] 0.0
        %284 = vst [vmem:[#allocation2 + $0x100] sm:$0xff] 0.0
        %285 = vst [vmem:[#allocation2 + $0x108] sm:$0xff] 0.0
        %286 = vst [vmem:[#allocation2 + $0x110] sm:$0xff] 0.0
        %287 = vst [vmem:[#allocation2 + $0x118] sm:$0xff] 0.0
        %288 = vst [vmem:[#allocation2 + $0x120] sm:$0xff] 0.0
        %289 = vst [vmem:[#allocation2 + $0x128] sm:$0xff] 0.0
        %290 = vst [vmem:[#allocation2 + $0x130] sm:$0xff] 0.0
        %291 = vst [vmem:[#allocation2 + $0x138] sm:$0xff] 0.0
        %292 = vst [vmem:[#allocation2 + $0x140] sm:$0xff] 0.0
        %293 = vst [vmem:[#allocation2 + $0x148] sm:$0xff] 0.0
        %294 = vst [vmem:[#allocation2 + $0x150] sm:$0xff] 0.0
        %295 = vst [vmem:[#allocation2 + $0x158] sm:$0xff] 0.0
        %296 = vst [vmem:[#allocation2 + $0x160] sm:$0xff] 0.0
        %297 = vst [vmem:[#allocation2 + $0x168] sm:$0xff] 0.0
        %298 = vst [vmem:[#allocation2 + $0x170] sm:$0xff] 0.0
        %299 = vst [vmem:[#allocation2 + $0x178] sm:$0xff] 0.0
        %300 = vst [vmem:[#allocation2 + $0x180] sm:$0xff] 0.0
        %301 = vst [vmem:[#allocation2 + $0x188] sm:$0xff] 0.0
        %302 = vst [vmem:[#allocation2 + $0x190] sm:$0xff] 0.0
        %303 = vst [vmem:[#allocation2 + $0x198] sm:$0xff] 0.0
        %304 = vst [vmem:[#allocation2 + $0x1a0] sm:$0xff] 0.0
        %305 = vst [vmem:[#allocation2 + $0x1a8] sm:$0xff] 0.0
        %306 = vst [vmem:[#allocation2 + $0x1b0] sm:$0xff] 0.0
        %307 = vst [vmem:[#allocation2 + $0x1b8] sm:$0xff] 0.0
        %308 = vst [vmem:[#allocation2 + $0x1c0] sm:$0xff] 0.0
        %309 = vst [vmem:[#allocation2 + $0x1c8] sm:$0xff] 0.0
        %310 = vst [vmem:[#allocation2 + $0x1d0] sm:$0xff] 0.0
        %311 = vst [vmem:[#allocation2 + $0x1d8] sm:$0xff] 0.0
        %312 = vst [vmem:[#allocation2 + $0x1e0] sm:$0xff] 0.0
        %313 = vst [vmem:[#allocation2 + $0x1e8] sm:$0xff] 0.0
        %314 = vst [vmem:[#allocation2 + $0x1f0] sm:$0xff] 0.0
        %315 = vst [vmem:[#allocation2 + $0x1f8] sm:$0xff] 0.0
      $region40: #{mixed6a_forward.6} parent=35 // pred_fallthru
        _
      %v316 = vld [vmem:[#allocation2] sm:$0xff]
      %v317 = vld [vmem:[#allocation2 + $0x8] sm:$0xff]
      %v318 = vld [vmem:[#allocation2 + $0x10] sm:$0xff]
      %v319 = vld [vmem:[#allocation2 + $0x18] sm:$0xff]
      %v320 = vld [vmem:[#allocation2 + $0x20] sm:$0xff]
      %v321 = vld [vmem:[#allocation2 + $0x28] sm:$0xff]
      %v322 = vld [vmem:[#allocation2 + $0x30] sm:$0xff]
      %v323 = vld [vmem:[#allocation2 + $0x38] sm:$0xff]
      %v324 = vld [vmem:[#allocation2 + $0x40] sm:$0xff]
      %v325 = vld [vmem:[#allocation2 + $0x48] sm:$0xff]
      %v326 = vld [vmem:[#allocation2 + $0x50] sm:$0xff]
      %v327 = vld [vmem:[#allocation2 + $0x58] sm:$0xff]
      %v328 = vld [vmem:[#allocation2 + $0x60] sm:$0xff]
      %v329 = vld [vmem:[#allocation2 + $0x68] sm:$0xff]
      %v330 = vld [vmem:[#allocation2 + $0x70] sm:$0xff]
      %v331 = vld [vmem:[#allocation2 + $0x78] sm:$0xff]
      %v332 = vld [vmem:[#allocation2 + $0x80] sm:$0xff]
      %v333 = vld [vmem:[#allocation2 + $0x88] sm:$0xff]
      %v334 = vld [vmem:[#allocation2 + $0x90] sm:$0xff]
      %v335 = vld [vmem:[#allocation2 + $0x98] sm:$0xff]
      %v336 = vld [vmem:[#allocation2 + $0xa0] sm:$0xff]
      %v337 = vld [vmem:[#allocation2 + $0xa8] sm:$0xff]
      %v338 = vld [vmem:[#allocation2 + $0xb0] sm:$0xff]
      %v339 = vld [vmem:[#allocation2 + $0xb8] sm:$0xff]
      %v340 = vld [vmem:[#allocation2 + $0xc0] sm:$0xff]
      %v341 = vld [vmem:[#allocation2 + $0xc8] sm:$0xff]
      %v342 = vld [vmem:[#allocation2 + $0xd0] sm:$0xff]
      %v343 = vld [vmem:[#allocation2 + $0xd8] sm:$0xff]
      %v344 = vld [vmem:[#allocation2 + $0xe0] sm:$0xff]
      %v345 = vld [vmem:[#allocation2 + $0xe8] sm:$0xff]
      %v346 = vld [vmem:[#allocation2 + $0xf0] sm:$0xff]
      %v347 = vld [vmem:[#allocation2 + $0xf8] sm:$0xff]
      %v348 = vld [vmem:[#allocation2 + $0x100] sm:$0xff]
      %v349 = vld [vmem:[#allocation2 + $0x108] sm:$0xff]
      %v350 = vld [vmem:[#allocation2 + $0x110] sm:$0xff]
      %v351 = vld [vmem:[#allocation2 + $0x118] sm:$0xff]
      %v352 = vld [vmem:[#allocation2 + $0x120] sm:$0xff]
      %v353 = vld [vmem:[#allocation2 + $0x128] sm:$0xff]
      %v354 = vld [vmem:[#allocation2 + $0x130] sm:$0xff]
      %v355 = vld [vmem:[#allocation2 + $0x138] sm:$0xff]
      %v356 = vld [vmem:[#allocation2 + $0x140] sm:$0xff]
      %v357 = vld [vmem:[#allocation2 + $0x148] sm:$0xff]
      %v358 = vld [vmem:[#allocation2 + $0x150] sm:$0xff]
      %v359 = vld [vmem:[#allocation2 + $0x158] sm:$0xff]
      %v360 = vld [vmem:[#allocation2 + $0x160] sm:$0xff]
      %v361 = vld [vmem:[#allocation2 + $0x168] sm:$0xff]
      %v362 = vld [vmem:[#allocation2 + $0x170] sm:$0xff]
      %v363 = vld [vmem:[#allocation2 + $0x178] sm:$0xff]
      %v364 = vld [vmem:[#allocation2 + $0x180] sm:$0xff]
      %v365 = vld [vmem:[#allocation2 + $0x188] sm:$0xff]
      %v366 = vld [vmem:[#allocation2 + $0x190] sm:$0xff]
      %v367 = vld [vmem:[#allocation2 + $0x198] sm:$0xff]
      %v368 = vld [vmem:[#allocation2 + $0x1a0] sm:$0xff]
      %v369 = vld [vmem:[#allocation2 + $0x1a8] sm:$0xff]
      %v370 = vld [vmem:[#allocation2 + $0x1b0] sm:$0xff]
      %v371 = vld [vmem:[#allocation2 + $0x1b8] sm:$0xff]
      %v372 = vld [vmem:[#allocation2 + $0x1c0] sm:$0xff]
      %v373 = vld [vmem:[#allocation2 + $0x1c8] sm:$0xff]
      %v374 = vld [vmem:[#allocation2 + $0x1d0] sm:$0xff]
      %v375 = vld [vmem:[#allocation2 + $0x1d8] sm:$0xff]
      %v376 = vld [vmem:[#allocation2 + $0x1e0] sm:$0xff]
      %v377 = vld [vmem:[#allocation2 + $0x1e8] sm:$0xff]
      %v378 = vld [vmem:[#allocation2 + $0x1f0] sm:$0xff]
      %v379 = vld [vmem:[#allocation2 + $0x1f8] sm:$0xff]
      %v380 = vld [vmem:[%s234] sm:$0xf]
      %v381 = vld [vmem:[%s234 + $0x4] sm:$0xf]
      %v382 = vld [vmem:[%s234 + $0x8] sm:$0xf]
      %v383 = vld [vmem:[%s234 + $0xc] sm:$0xf]
      %v384 = vld [vmem:[%s234 + $0x10] sm:$0xf]
      %v385 = vld [vmem:[%s234 + $0x14] sm:$0xf]
      %v386 = vld [vmem:[%s234 + $0x18] sm:$0xf]
      %v387 = vld [vmem:[%s234 + $0x1c] sm:$0xf]
      %v388 = vld [vmem:[%s234 + $0x20] sm:$0xf]
      %v389 = vld [vmem:[%s234 + $0x24] sm:$0xf]
      %v390 = vld [vmem:[%s234 + $0x28] sm:$0xf]
      %v391 = vld [vmem:[%s234 + $0x2c] sm:$0xf]
      %v392 = vld [vmem:[%s234 + $0x30] sm:$0xf]
      %v393 = vld [vmem:[%s234 + $0x34] sm:$0xf]
      %v394 = vld [vmem:[%s234 + $0x38] sm:$0xf]
      %v395 = vld [vmem:[%s234 + $0x3c] sm:$0xf]
      %v396 = vld [vmem:[%s234 + $0x40] sm:$0xf]
      %v397 = vld [vmem:[%s234 + $0x44] sm:$0xf]
      %v398 = vld [vmem:[%s234 + $0x48] sm:$0xf]
      %v399 = vld [vmem:[%s234 + $0x4c] sm:$0xf]
      %v400 = vld [vmem:[%s234 + $0x50] sm:$0xf]
      %v401 = vld [vmem:[%s234 + $0x54] sm:$0xf]
      %v402 = vld [vmem:[%s234 + $0x58] sm:$0xf]
      %v403 = vld [vmem:[%s234 + $0x5c] sm:$0xf]
      %v404 = vld [vmem:[%s234 + $0x60] sm:$0xf]
      %v405 = vld [vmem:[%s234 + $0x64] sm:$0xf]
      %v406 = vld [vmem:[%s234 + $0x68] sm:$0xf]
      %v407 = vld [vmem:[%s234 + $0x6c] sm:$0xf]
      %v408 = vld [vmem:[%s234 + $0x70] sm:$0xf]
      %v409 = vld [vmem:[%s234 + $0x74] sm:$0xf]
      %v410 = vld [vmem:[%s234 + $0x78] sm:$0xf]
      %v411 = vld [vmem:[%s234 + $0x7c] sm:$0xf]
      %v412 = vld [vmem:[%s234 + $0x80] sm:$0xf]
      %v413 = vld [vmem:[%s234 + $0x84] sm:$0xf]
      %v414 = vld [vmem:[%s234 + $0x88] sm:$0xf]
      %v415 = vld [vmem:[%s234 + $0x8c] sm:$0xf]
      %v416 = vld [vmem:[%s234 + $0x90] sm:$0xf]
      %v417 = vld [vmem:[%s234 + $0x94] sm:$0xf]
      %v418 = vld [vmem:[%s234 + $0x98] sm:$0xf]
      %v419 = vld [vmem:[%s234 + $0x9c] sm:$0xf]
      %v420 = vld [vmem:[%s234 + $0xa0] sm:$0xf]
      %v421 = vld [vmem:[%s234 + $0xa4] sm:$0xf]
      %v422 = vld [vmem:[%s234 + $0xa8] sm:$0xf]
      %v423 = vld [vmem:[%s234 + $0xac] sm:$0xf]
      %v424 = vld [vmem:[%s234 + $0xb0] sm:$0xf]
      %v425 = vld [vmem:[%s234 + $0xb4] sm:$0xf]
      %v426 = vld [vmem:[%s234 + $0xb8] sm:$0xf]
      %v427 = vld [vmem:[%s234 + $0xbc] sm:$0xf]
      %v428 = vld [vmem:[%s234 + $0xc0] sm:$0xf]
      %v429 = vld [vmem:[%s234 + $0xc4] sm:$0xf]
      %v430 = vld [vmem:[%s234 + $0xc8] sm:$0xf]
      %v431 = vld [vmem:[%s234 + $0xcc] sm:$0xf]
      %v432 = vld [vmem:[%s234 + $0xd0] sm:$0xf]
      %v433 = vld [vmem:[%s234 + $0xd4] sm:$0xf]
      %v434 = vld [vmem:[%s234 + $0xd8] sm:$0xf]
      %v435 = vld [vmem:[%s234 + $0xdc] sm:$0xf]
      %v436 = vld [vmem:[%s234 + $0xe0] sm:$0xf]
      %v437 = vld [vmem:[%s234 + $0xe4] sm:$0xf]
      %v438 = vld [vmem:[%s234 + $0xe8] sm:$0xf]
      %v439 = vld [vmem:[%s234 + $0xec] sm:$0xf]
      %v440 = vld [vmem:[%s234 + $0xf0] sm:$0xf]
      %v441 = vld [vmem:[%s234 + $0xf4] sm:$0xf]
      %v442 = vld [vmem:[%s234 + $0xf8] sm:$0xf]
      %v443 = vld [vmem:[%s234 + $0xfc] sm:$0xf]
      %v444 = vld [vmem:[%s240] sm:$0xf]
      %v445 = vld [vmem:[%s240 + $0x4] sm:$0xf]
      %v446 = vld [vmem:[%s240 + $0x8] sm:$0xf]
      %v447 = vld [vmem:[%s240 + $0xc] sm:$0xf]
      %v448 = vld [vmem:[%s240 + $0x10] sm:$0xf]
      %v449 = vld [vmem:[%s240 + $0x14] sm:$0xf]
      %v450 = vld [vmem:[%s240 + $0x18] sm:$0xf]
      %v451 = vld [vmem:[%s240 + $0x1c] sm:$0xf]
      %v516 = vunpack.c.l.b16 %v380
      %v517 = vunpack.c.l.b16 %v381
      %v518 = vunpack.c.l.b16 %v382
      %v519 = vunpack.c.l.b16 %v383
      %v520 = vunpack.c.l.b16 %v384
      %v521 = vunpack.c.l.b16 %v385
      %v522 = vunpack.c.l.b16 %v386
      %v523 = vunpack.c.l.b16 %v387
      %v524 = vunpack.c.l.b16 %v388
      %v525 = vunpack.c.l.b16 %v389
      %v526 = vunpack.c.l.b16 %v390
      %v527 = vunpack.c.l.b16 %v391
      %v528 = vunpack.c.l.b16 %v392
      %v529 = vunpack.c.l.b16 %v393
      %v530 = vunpack.c.l.b16 %v394
      %v531 = vunpack.c.l.b16 %v395
      %v532 = vunpack.c.l.b16 %v396
      %v533 = vunpack.c.l.b16 %v397
      %v534 = vunpack.c.l.b16 %v398
      %v535 = vunpack.c.l.b16 %v399
      %v536 = vunpack.c.l.b16 %v400
      %v537 = vunpack.c.l.b16 %v401
      %v538 = vunpack.c.l.b16 %v402
      %v539 = vunpack.c.l.b16 %v403
      %v540 = vunpack.c.l.b16 %v404
      %v541 = vunpack.c.l.b16 %v405
      %v542 = vunpack.c.l.b16 %v406
      %v543 = vunpack.c.l.b16 %v407
      %v544 = vunpack.c.l.b16 %v408
      %v545 = vunpack.c.l.b16 %v409
      %v546 = vunpack.c.l.b16 %v410
      %v547 = vunpack.c.l.b16 %v411
      %v548 = vunpack.c.l.b16 %v412
      %v549 = vunpack.c.l.b16 %v413
      %v550 = vunpack.c.l.b16 %v414
      %v551 = vunpack.c.l.b16 %v415
      %v552 = vunpack.c.l.b16 %v416
      %v553 = vunpack.c.l.b16 %v417
      %v554 = vunpack.c.l.b16 %v418
      %v555 = vunpack.c.l.b16 %v419
      %v556 = vunpack.c.l.b16 %v420
      %v557 = vunpack.c.l.b16 %v421
      %v558 = vunpack.c.l.b16 %v422
      %v559 = vunpack.c.l.b16 %v423
      %v560 = vunpack.c.l.b16 %v424
      %v561 = vunpack.c.l.b16 %v425
      %v562 = vunpack.c.l.b16 %v426
      %v563 = vunpack.c.l.b16 %v427
      %v564 = vunpack.c.l.b16 %v428
      %v565 = vunpack.c.l.b16 %v429
      %v566 = vunpack.c.l.b16 %v430
      %v567 = vunpack.c.l.b16 %v431
      %v568 = vunpack.c.l.b16 %v432
      %v569 = vunpack.c.l.b16 %v433
      %v570 = vunpack.c.l.b16 %v434
      %v571 = vunpack.c.l.b16 %v435
      %v572 = vunpack.c.l.b16 %v436
      %v573 = vunpack.c.l.b16 %v437
      %v574 = vunpack.c.l.b16 %v438
      %v575 = vunpack.c.l.b16 %v439
      %v576 = vunpack.c.l.b16 %v440
      %v577 = vunpack.c.l.b16 %v441
      %v578 = vunpack.c.l.b16 %v442
      %v579 = vunpack.c.l.b16 %v443
      %v580 = vpack.c.b16 %v517, %v516
      %v581 = vpack.c.b16 %v519, %v518
      %v582 = vpack.c.b16 %v521, %v520
      %v583 = vpack.c.b16 %v523, %v522
      %v584 = vpack.c.b16 %v525, %v524
      %v585 = vpack.c.b16 %v527, %v526
      %v586 = vpack.c.b16 %v529, %v528
      %v587 = vpack.c.b16 %v531, %v530
      %v588 = vpack.c.b16 %v533, %v532
      %v589 = vpack.c.b16 %v535, %v534
      %v590 = vpack.c.b16 %v537, %v536
      %v591 = vpack.c.b16 %v539, %v538
      %v592 = vpack.c.b16 %v541, %v540
      %v593 = vpack.c.b16 %v543, %v542
      %v594 = vpack.c.b16 %v545, %v544
      %v595 = vpack.c.b16 %v547, %v546
      %v596 = vpack.c.b16 %v549, %v548
      %v597 = vpack.c.b16 %v551, %v550
      %v598 = vpack.c.b16 %v553, %v552
      %v599 = vpack.c.b16 %v555, %v554
      %v600 = vpack.c.b16 %v557, %v556
      %v601 = vpack.c.b16 %v559, %v558
      %v602 = vpack.c.b16 %v561, %v560
      %v603 = vpack.c.b16 %v563, %v562
      %v604 = vpack.c.b16 %v565, %v564
      %v605 = vpack.c.b16 %v567, %v566
      %v606 = vpack.c.b16 %v569, %v568
      %v607 = vpack.c.b16 %v571, %v570
      %v608 = vpack.c.b16 %v573, %v572
      %v609 = vpack.c.b16 %v575, %v574
      %v610 = vpack.c.b16 %v577, %v576
      %v611 = vpack.c.b16 %v579, %v578
      %v620 = vunpack.c.l.b16 %v444
      %v621 = vunpack.c.l.b16 %v445
      %v622 = vunpack.c.l.b16 %v446
      %v623 = vunpack.c.l.b16 %v447
      %v624 = vunpack.c.l.b16 %v448
      %v625 = vunpack.c.l.b16 %v449
      %v626 = vunpack.c.l.b16 %v450
      %v627 = vunpack.c.l.b16 %v451
      %v628 = vpack.c.b16 %v621, %v620
      %v629 = vpack.c.b16 %v623, %v622
      %v630 = vpack.c.b16 %v625, %v624
      %v631 = vpack.c.b16 %v627, %v626
      %vm636 = vcmask 523264
      %v638 = vsel %vm636, %v580, 0
      %v641 = vsel %vm636, %v581, 0
      %v644 = vsel %vm636, %v582, 0
      %v647 = vsel %vm636, %v583, 0
      %v650 = vsel %vm636, %v584, 0
      %v653 = vsel %vm636, %v585, 0
      %v656 = vsel %vm636, %v586, 0
      %v659 = vsel %vm636, %v587, 0
      %v662 = vsel %vm636, %v588, 0
      %v665 = vsel %vm636, %v589, 0
      %v668 = vsel %vm636, %v590, 0
      %v671 = vsel %vm636, %v591, 0
      %v674 = vsel %vm636, %v592, 0
      %v677 = vsel %vm636, %v593, 0
      %v680 = vsel %vm636, %v594, 0
      %v683 = vsel %vm636, %v595, 0
      %v686 = vsel %vm636, %v596, 0
      %v689 = vsel %vm636, %v597, 0
      %v692 = vsel %vm636, %v598, 0
      %v695 = vsel %vm636, %v599, 0
      %v698 = vsel %vm636, %v600, 0
      %v701 = vsel %vm636, %v601, 0
      %v704 = vsel %vm636, %v602, 0
      %v707 = vsel %vm636, %v603, 0
      %v710 = vsel %vm636, %v604, 0
      %v713 = vsel %vm636, %v605, 0
      %v716 = vsel %vm636, %v606, 0
      %v719 = vsel %vm636, %v607, 0
      %v722 = vsel %vm636, %v608, 0
      %v725 = vsel %vm636, %v609, 0
      %v728 = vsel %vm636, %v610, 0
      %v731 = vsel %vm636, %v611, 0
      %733 = vmatprep.subr.bf16.mxu0 0
      %734 = vmatpush1.bf16.msra.mxu0 %v628
      %735 = vmatprep.subr.bf16.mxu0 0
      %736 = vmatpush1.bf16.msra.mxu0 %v629
      %737 = vmatprep.subr.bf16.mxu0 0
      %738 = vmatpush1.bf16.msra.mxu0 %v630
      %739 = vmatprep.subr.bf16.mxu0 0
      %740 = vmatpush1.bf16.msra.mxu0 %v631
      %741 = vmatprep.subr.bf16.mxu0 0
      %742 = vmatpush1.bf16.msra.mxu0 0
      %743 = vmatprep.subr.bf16.mxu0 0
      %744 = vmatpush1.bf16.msra.mxu0 0
      %745 = vmatprep.subr.bf16.mxu0 0
      %746 = vmatpush1.bf16.msra.mxu0 0
      %747 = vmatprep.subr.bf16.mxu0 0
      %748 = vmatpush1.bf16.msra.mxu0 0
      %749 = vmatprep.subr.bf16.mxu0 0
      %750 = vmatpush1.bf16.msra.mxu0 0
      %751 = vmatprep.subr.bf16.mxu0 0
      %752 = vmatpush1.bf16.msra.mxu0 0
      %753 = vmatprep.subr.bf16.mxu0 0
      %754 = vmatpush1.bf16.msra.mxu0 0
      %755 = vmatprep.subr.bf16.mxu0 0
      %756 = vmatpush1.bf16.msra.mxu0 0
      %757 = vmatprep.subr.bf16.mxu0 0
      %758 = vmatpush1.bf16.msra.mxu0 0
      %759 = vmatprep.subr.bf16.mxu0 0
      %760 = vmatpush1.bf16.msra.mxu0 0
      %761 = vmatprep.subr.bf16.mxu0 0
      %762 = vmatpush1.bf16.msra.mxu0 0
      %763 = vmatprep.subr.bf16.mxu0 0
      %764 = vmatpush1.bf16.msra.mxu0 0
      %765 = vmatprep.mubr.bf16.mxu0 0
      %766 = vmatmul.mubr.bf16.gmra.mrb[0].mxu0 %v638
      %v767 = vpop.f32.mrb[0].mxu0
      %v768 = vadd.f32 0.0, %v767
      %v769 = vpop.f32.mrb[0].mxu0
      %v770 = vpop.f32.mrb[0].mxu0
      %v771 = vadd.f32 0.0, %v770
      %v772 = vpop.f32.mrb[0].mxu0
      %773 = vmatprep.mubr.bf16.mxu0 0
      %774 = vmatmul.mubr.bf16.gmra.mrb[0].mxu0 %v641
      %v775 = vpop.f32.mrb[0].mxu0
      %v776 = vadd.f32 0.0, %v775
      %v777 = vpop.f32.mrb[0].mxu0
      %v778 = vpop.f32.mrb[0].mxu0
      %v779 = vadd.f32 0.0, %v778
      %v780 = vpop.f32.mrb[0].mxu0
      %781 = vmatprep.mubr.bf16.mxu0 0
      %782 = vmatmul.mubr.bf16.gmra.mrb[0].mxu0 %v644
      %v783 = vpop.f32.mrb[0].mxu0
      %v784 = vadd.f32 0.0, %v783
      %v785 = vpop.f32.mrb[0].mxu0
      %v786 = vpop.f32.mrb[0].mxu0
      %v787 = vadd.f32 0.0, %v786
      %v788 = vpop.f32.mrb[0].mxu0
      %789 = vmatprep.mubr.bf16.mxu0 0
      %790 = vmatmul.mubr.bf16.gmra.mrb[0].mxu0 %v647
      %v791 = vpop.f32.mrb[0].mxu0
      %v792 = vadd.f32 0.0, %v791
      %v793 = vpop.f32.mrb[0].mxu0
      %v794 = vpop.f32.mrb[0].mxu0
      %v795 = vadd.f32 0.0, %v794
      %v796 = vpop.f32.mrb[0].mxu0
      %797 = vmatprep.mubr.bf16.mxu0 0
      %798 = vmatmul.mubr.bf16.gmra.mrb[0].mxu0 %v650
      %v799 = vpop.f32.mrb[0].mxu0
      %v800 = vadd.f32 0.0, %v799
      %v801 = vpop.f32.mrb[0].mxu0
      %v802 = vpop.f32.mrb[0].mxu0
      %v803 = vadd.f32 0.0, %v802
      %v804 = vpop.f32.mrb[0].mxu0
      %805 = vmatprep.mubr.bf16.mxu0 0
      %806 = vmatmul.mubr.bf16.gmra.mrb[0].mxu0 %v653
      %v807 = vpop.f32.mrb[0].mxu0
      %v808 = vadd.f32 0.0, %v807
      %v809 = vpop.f32.mrb[0].mxu0
      %v810 = vpop.f32.mrb[0].mxu0
      %v811 = vadd.f32 0.0, %v810
      %v812 = vpop.f32.mrb[0].mxu0
      %813 = vmatprep.mubr.bf16.mxu0 0
      %814 = vmatmul.mubr.bf16.gmra.mrb[0].mxu0 %v656
      %v815 = vpop.f32.mrb[0].mxu0
      %v816 = vadd.f32 0.0, %v815
      %v817 = vpop.f32.mrb[0].mxu0
      %v818 = vpop.f32.mrb[0].mxu0
      %v819 = vadd.f32 0.0, %v818
      %v820 = vpop.f32.mrb[0].mxu0
      %821 = vmatprep.mubr.bf16.mxu0 0
      %822 = vmatmul.mubr.bf16.gmra.mrb[0].mxu0 %v659
      %v823 = vpop.f32.mrb[0].mxu0
      %v824 = vadd.f32 0.0, %v823
      %v825 = vpop.f32.mrb[0].mxu0
      %v826 = vpop.f32.mrb[0].mxu0
      %v827 = vadd.f32 0.0, %v826
      %v828 = vpop.f32.mrb[0].mxu0
      %829 = vmatprep.mubr.bf16.mxu0 0
      %830 = vmatmul.mubr.bf16.gmra.mrb[0].mxu0 %v662
      %v831 = vpop.f32.mrb[0].mxu0
      %v832 = vadd.f32 0.0, %v831
      %v833 = vpop.f32.mrb[0].mxu0
      %v834 = vpop.f32.mrb[0].mxu0
      %v835 = vadd.f32 0.0, %v834
      %v836 = vpop.f32.mrb[0].mxu0
      %837 = vmatprep.mubr.bf16.mxu0 0
      %838 = vmatmul.mubr.bf16.gmra.mrb[0].mxu0 %v665
      %v839 = vpop.f32.mrb[0].mxu0
      %v840 = vadd.f32 0.0, %v839
      %v841 = vpop.f32.mrb[0].mxu0
      %v842 = vpop.f32.mrb[0].mxu0
      %v843 = vadd.f32 0.0, %v842
      %v844 = vpop.f32.mrb[0].mxu0
      %845 = vmatprep.mubr.bf16.mxu0 0
      %846 = vmatmul.mubr.bf16.gmra.mrb[0].mxu0 %v668
      %v847 = vpop.f32.mrb[0].mxu0
      %v848 = vadd.f32 0.0, %v847
      %v849 = vpop.f32.mrb[0].mxu0
      %v850 = vpop.f32.mrb[0].mxu0
      %v851 = vadd.f32 0.0, %v850
      %v852 = vpop.f32.mrb[0].mxu0
      %853 = vmatprep.mubr.bf16.mxu0 0
      %854 = vmatmul.mubr.bf16.gmra.mrb[0].mxu0 %v671
      %v855 = vpop.f32.mrb[0].mxu0
      %v856 = vadd.f32 0.0, %v855
      %v857 = vpop.f32.mrb[0].mxu0
      %v858 = vpop.f32.mrb[0].mxu0
      %v859 = vadd.f32 0.0, %v858
      %v860 = vpop.f32.mrb[0].mxu0
      %861 = vmatprep.mubr.bf16.mxu0 0
      %862 = vmatmul.mubr.bf16.gmra.mrb[0].mxu0 %v674
      %v863 = vpop.f32.mrb[0].mxu0
      %v864 = vadd.f32 0.0, %v863
      %v865 = vpop.f32.mrb[0].mxu0
      %v866 = vpop.f32.mrb[0].mxu0
      %v867 = vadd.f32 0.0, %v866
      %v868 = vpop.f32.mrb[0].mxu0
      %869 = vmatprep.mubr.bf16.mxu0 0
      %870 = vmatmul.mubr.bf16.gmra.mrb[0].mxu0 %v677
      %v871 = vpop.f32.mrb[0].mxu0
      %v872 = vadd.f32 0.0, %v871
      %v873 = vpop.f32.mrb[0].mxu0
      %v874 = vpop.f32.mrb[0].mxu0
      %v875 = vadd.f32 0.0, %v874
      %v876 = vpop.f32.mrb[0].mxu0
      %877 = vmatprep.mubr.bf16.mxu0 0
      %878 = vmatmul.mubr.bf16.gmra.mrb[0].mxu0 %v680
      %v879 = vpop.f32.mrb[0].mxu0
      %v880 = vadd.f32 0.0, %v879
      %v881 = vpop.f32.mrb[0].mxu0
      %v882 = vpop.f32.mrb[0].mxu0
      %v883 = vadd.f32 0.0, %v882
      %v884 = vpop.f32.mrb[0].mxu0
      %885 = vmatprep.mubr.bf16.mxu0 0
      %886 = vmatmul.mubr.bf16.gmra.mrb[0].mxu0 %v683
      %v887 = vpop.f32.mrb[0].mxu0
      %v888 = vadd.f32 0.0, %v887
      %v889 = vpop.f32.mrb[0].mxu0
      %v890 = vpop.f32.mrb[0].mxu0
      %v891 = vadd.f32 0.0, %v890
      %v892 = vpop.f32.mrb[0].mxu0
      %893 = vmatprep.mubr.bf16.mxu0 0
      %894 = vmatmul.mubr.bf16.gmra.mrb[0].mxu0 %v686
      %v895 = vpop.f32.mrb[0].mxu0
      %v896 = vadd.f32 0.0, %v895
      %v897 = vpop.f32.mrb[0].mxu0
      %v898 = vpop.f32.mrb[0].mxu0
      %v899 = vadd.f32 0.0, %v898
      %v900 = vpop.f32.mrb[0].mxu0
      %901 = vmatprep.mubr.bf16.mxu0 0
      %902 = vmatmul.mubr.bf16.gmra.mrb[0].mxu0 %v689
      %v903 = vpop.f32.mrb[0].mxu0
      %v904 = vadd.f32 0.0, %v903
      %v905 = vpop.f32.mrb[0].mxu0
      %v906 = vpop.f32.mrb[0].mxu0
      %v907 = vadd.f32 0.0, %v906
      %v908 = vpop.f32.mrb[0].mxu0
      %909 = vmatprep.mubr.bf16.mxu0 0
      %910 = vmatmul.mubr.bf16.gmra.mrb[0].mxu0 %v692
      %v911 = vpop.f32.mrb[0].mxu0
      %v912 = vadd.f32 0.0, %v911
      %v913 = vpop.f32.mrb[0].mxu0
      %v914 = vpop.f32.mrb[0].mxu0
      %v915 = vadd.f32 0.0, %v914
      %v916 = vpop.f32.mrb[0].mxu0
      %917 = vmatprep.mubr.bf16.mxu0 0
      %918 = vmatmul.mubr.bf16.gmra.mrb[0].mxu0 %v695
      %v919 = vpop.f32.mrb[0].mxu0
      %v920 = vadd.f32 0.0, %v919
      %v921 = vpop.f32.mrb[0].mxu0
      %v922 = vpop.f32.mrb[0].mxu0
      %v923 = vadd.f32 0.0, %v922
      %v924 = vpop.f32.mrb[0].mxu0
      %925 = vmatprep.mubr.bf16.mxu0 0
      %926 = vmatmul.mubr.bf16.gmra.mrb[0].mxu0 %v698
      %v927 = vpop.f32.mrb[0].mxu0
      %v928 = vadd.f32 0.0, %v927
      %v929 = vpop.f32.mrb[0].mxu0
      %v930 = vpop.f32.mrb[0].mxu0
      %v931 = vadd.f32 0.0, %v930
      %v932 = vpop.f32.mrb[0].mxu0
      %933 = vmatprep.mubr.bf16.mxu0 0
      %934 = vmatmul.mubr.bf16.gmra.mrb[0].mxu0 %v701
      %v935 = vpop.f32.mrb[0].mxu0
      %v936 = vadd.f32 0.0, %v935
      %v937 = vpop.f32.mrb[0].mxu0
      %v938 = vpop.f32.mrb[0].mxu0
      %v939 = vadd.f32 0.0, %v938
      %v940 = vpop.f32.mrb[0].mxu0
      %941 = vmatprep.mubr.bf16.mxu0 0
      %942 = vmatmul.mubr.bf16.gmra.mrb[0].mxu0 %v704
      %v943 = vpop.f32.mrb[0].mxu0
      %v944 = vadd.f32 0.0, %v943
      %v945 = vpop.f32.mrb[0].mxu0
      %v946 = vpop.f32.mrb[0].mxu0
      %v947 = vadd.f32 0.0, %v946
      %v948 = vpop.f32.mrb[0].mxu0
      %949 = vmatprep.mubr.bf16.mxu0 0
      %950 = vmatmul.mubr.bf16.gmra.mrb[0].mxu0 %v707
      %v951 = vpop.f32.mrb[0].mxu0
      %v952 = vadd.f32 0.0, %v951
      %v953 = vpop.f32.mrb[0].mxu0
      %v954 = vpop.f32.mrb[0].mxu0
      %v955 = vadd.f32 0.0, %v954
      %v956 = vpop.f32.mrb[0].mxu0
      %957 = vmatprep.mubr.bf16.mxu0 0
      %958 = vmatmul.mubr.bf16.gmra.mrb[0].mxu0 %v710
      %v959 = vpop.f32.mrb[0].mxu0
      %v960 = vadd.f32 0.0, %v959
      %v961 = vpop.f32.mrb[0].mxu0
      %v962 = vpop.f32.mrb[0].mxu0
      %v963 = vadd.f32 0.0, %v962
      %v964 = vpop.f32.mrb[0].mxu0
      %965 = vmatprep.mubr.bf16.mxu0 0
      %966 = vmatmul.mubr.bf16.gmra.mrb[0].mxu0 %v713
      %v967 = vpop.f32.mrb[0].mxu0
      %v968 = vadd.f32 0.0, %v967
      %v969 = vpop.f32.mrb[0].mxu0
      %v970 = vpop.f32.mrb[0].mxu0
      %v971 = vadd.f32 0.0, %v970
      %v972 = vpop.f32.mrb[0].mxu0
      %973 = vmatprep.mubr.bf16.mxu0 0
      %974 = vmatmul.mubr.bf16.gmra.mrb[0].mxu0 %v716
      %v975 = vpop.f32.mrb[0].mxu0
      %v976 = vadd.f32 0.0, %v975
      %v977 = vpop.f32.mrb[0].mxu0
      %v978 = vpop.f32.mrb[0].mxu0
      %v979 = vadd.f32 0.0, %v978
      %v980 = vpop.f32.mrb[0].mxu0
      %981 = vmatprep.mubr.bf16.mxu0 0
      %982 = vmatmul.mubr.bf16.gmra.mrb[0].mxu0 %v719
      %v983 = vpop.f32.mrb[0].mxu0
      %v984 = vadd.f32 0.0, %v983
      %v985 = vpop.f32.mrb[0].mxu0
      %v986 = vpop.f32.mrb[0].mxu0
      %v987 = vadd.f32 0.0, %v986
      %v988 = vpop.f32.mrb[0].mxu0
      %989 = vmatprep.mubr.bf16.mxu0 0
      %990 = vmatmul.mubr.bf16.gmra.mrb[0].mxu0 %v722
      %v991 = vpop.f32.mrb[0].mxu0
      %v992 = vadd.f32 0.0, %v991
      %v993 = vpop.f32.mrb[0].mxu0
      %v994 = vpop.f32.mrb[0].mxu0
      %v995 = vadd.f32 0.0, %v994
      %v996 = vpop.f32.mrb[0].mxu0
      %997 = vmatprep.mubr.bf16.mxu0 0
      %998 = vmatmul.mubr.bf16.gmra.mrb[0].mxu0 %v725
      %v999 = vpop.f32.mrb[0].mxu0
      %v1000 = vadd.f32 0.0, %v999
      %v1001 = vpop.f32.mrb[0].mxu0
      %v1002 = vpop.f32.mrb[0].mxu0
      %v1003 = vadd.f32 0.0, %v1002
      %v1004 = vpop.f32.mrb[0].mxu0
      %1005 = vmatprep.mubr.bf16.mxu0 0
      %1006 = vmatmul.mubr.bf16.gmra.mrb[0].mxu0 %v728
      %v1007 = vpop.f32.mrb[0].mxu0
      %v1008 = vadd.f32 0.0, %v1007
      %v1009 = vpop.f32.mrb[0].mxu0
      %v1010 = vpop.f32.mrb[0].mxu0
      %v1011 = vadd.f32 0.0, %v1010
      %v1012 = vpop.f32.mrb[0].mxu0
      %1013 = vmatprep.mubr.bf16.mxu0 0
      %1014 = vmatmul.mubr.bf16.gmra.mrb[0].mxu0 %v731
      %v1015 = vpop.f32.mrb[0].mxu0
      %v1016 = vadd.f32 0.0, %v1015
      %v1017 = vpop.f32.mrb[0].mxu0
      %v1018 = vpop.f32.mrb[0].mxu0
      %v1019 = vadd.f32 0.0, %v1018
      %v1020 = vpop.f32.mrb[0].mxu0
      %1021 = vdwg.mxu0
      %v1022 = vadd.f32 %v316, %v768
      %v1023 = vadd.f32 %v317, %v771
      %v1024 = vadd.f32 %v318, %v776
      %v1025 = vadd.f32 %v319, %v779
      %v1026 = vadd.f32 %v320, %v784
      %v1027 = vadd.f32 %v321, %v787
      %v1028 = vadd.f32 %v322, %v792
      %v1029 = vadd.f32 %v323, %v795
      %v1030 = vadd.f32 %v324, %v800
      %v1031 = vadd.f32 %v325, %v803
      %v1032 = vadd.f32 %v326, %v808
      %v1033 = vadd.f32 %v327, %v811
      %v1034 = vadd.f32 %v328, %v816
      %v1035 = vadd.f32 %v329, %v819
      %v1036 = vadd.f32 %v330, %v824
      %v1037 = vadd.f32 %v331, %v827
      %v1038 = vadd.f32 %v332, %v832
      %v1039 = vadd.f32 %v333, %v835
      %v1040 = vadd.f32 %v334, %v840
      %v1041 = vadd.f32 %v335, %v843
      %v1042 = vadd.f32 %v336, %v848
      %v1043 = vadd.f32 %v337, %v851
      %v1044 = vadd.f32 %v338, %v856
      %v1045 = vadd.f32 %v339, %v859
      %v1046 = vadd.f32 %v340, %v864
      %v1047 = vadd.f32 %v341, %v867
      %v1048 = vadd.f32 %v342, %v872
      %v1049 = vadd.f32 %v343, %v875
      %v1050 = vadd.f32 %v344, %v880
      %v1051 = vadd.f32 %v345, %v883
      %v1052 = vadd.f32 %v346, %v888
      %v1053 = vadd.f32 %v347, %v891
      %v1054 = vadd.f32 %v348, %v896
      %v1055 = vadd.f32 %v349, %v899
      %v1056 = vadd.f32 %v350, %v904
      %v1057 = vadd.f32 %v351, %v907
      %v1058 = vadd.f32 %v352, %v912
      %v1059 = vadd.f32 %v353, %v915
      %v1060 = vadd.f32 %v354, %v920
      %v1061 = vadd.f32 %v355, %v923
      %v1062 = vadd.f32 %v356, %v928
      %v1063 = vadd.f32 %v357, %v931
      %v1064 = vadd.f32 %v358, %v936
      %v1065 = vadd.f32 %v359, %v939
      %v1066 = vadd.f32 %v360, %v944
      %v1067 = vadd.f32 %v361, %v947
      %v1068 = vadd.f32 %v362, %v952
      %v1069 = vadd.f32 %v363, %v955
      %v1070 = vadd.f32 %v364, %v960
      %v1071 = vadd.f32 %v365, %v963
      %v1072 = vadd.f32 %v366, %v968
      %v1073 = vadd.f32 %v367, %v971
      %v1074 = vadd.f32 %v368, %v976
      %v1075 = vadd.f32 %v369, %v979
      %v1076 = vadd.f32 %v370, %v984
      %v1077 = vadd.f32 %v371, %v987
      %v1078 = vadd.f32 %v372, %v992
      %v1079 = vadd.f32 %v373, %v995
      %v1080 = vadd.f32 %v374, %v1000
      %v1081 = vadd.f32 %v375, %v1003
      %v1082 = vadd.f32 %v376, %v1008
      %v1083 = vadd.f32 %v377, %v1011
      %v1084 = vadd.f32 %v378, %v1016
      %v1085 = vadd.f32 %v379, %v1019
      %1086 = vst [vmem:[#allocation2] sm:$0xff] %v1022
      %1087 = vst [vmem:[#allocation2 + $0x8] sm:$0xff] %v1023
      %1088 = vst [vmem:[#allocation2 + $0x10] sm:$0xff] %v1024
      %1089 = vst [vmem:[#allocation2 + $0x18] sm:$0xff] %v1025
      %1090 = vst [vmem:[#allocation2 + $0x20] sm:$0xff] %v1026
      %1091 = vst [vmem:[#allocation2 + $0x28] sm:$0xff] %v1027
      %1092 = vst [vmem:[#allocation2 + $0x30] sm:$0xff] %v1028
      %1093 = vst [vmem:[#allocation2 + $0x38] sm:$0xff] %v1029
      %1094 = vst [vmem:[#allocation2 + $0x40] sm:$0xff] %v1030
      %1095 = vst [vmem:[#allocation2 + $0x48] sm:$0xff] %v1031
      %1096 = vst [vmem:[#allocation2 + $0x50] sm:$0xff] %v1032
      %1097 = vst [vmem:[#allocation2 + $0x58] sm:$0xff] %v1033
      %1098 = vst [vmem:[#allocation2 + $0x60] sm:$0xff] %v1034
      %1099 = vst [vmem:[#allocation2 + $0x68] sm:$0xff] %v1035
      %1100 = vst [vmem:[#allocation2 + $0x70] sm:$0xff] %v1036
      %1101 = vst [vmem:[#allocation2 + $0x78] sm:$0xff] %v1037
      %1102 = vst [vmem:[#allocation2 + $0x80] sm:$0xff] %v1038
      %1103 = vst [vmem:[#allocation2 + $0x88] sm:$0xff] %v1039
      %1104 = vst [vmem:[#allocation2 + $0x90] sm:$0xff] %v1040
      %1105 = vst [vmem:[#allocation2 + $0x98] sm:$0xff] %v1041
      %1106 = vst [vmem:[#allocation2 + $0xa0] sm:$0xff] %v1042
      %1107 = vst [vmem:[#allocation2 + $0xa8] sm:$0xff] %v1043
      %1108 = vst [vmem:[#allocation2 + $0xb0] sm:$0xff] %v1044
      %1109 = vst [vmem:[#allocation2 + $0xb8] sm:$0xff] %v1045
      %1110 = vst [vmem:[#allocation2 + $0xc0] sm:$0xff] %v1046
      %1111 = vst [vmem:[#allocation2 + $0xc8] sm:$0xff] %v1047
      %1112 = vst [vmem:[#allocation2 + $0xd0] sm:$0xff] %v1048
      %1113 = vst [vmem:[#allocation2 + $0xd8] sm:$0xff] %v1049
      %1114 = vst [vmem:[#allocation2 + $0xe0] sm:$0xff] %v1050
      %1115 = vst [vmem:[#allocation2 + $0xe8] sm:$0xff] %v1051
      %1116 = vst [vmem:[#allocation2 + $0xf0] sm:$0xff] %v1052
      %1117 = vst [vmem:[#allocation2 + $0xf8] sm:$0xff] %v1053
      %1118 = vst [vmem:[#allocation2 + $0x100] sm:$0xff] %v1054
      %1119 = vst [vmem:[#allocation2 + $0x108] sm:$0xff] %v1055
      %1120 = vst [vmem:[#allocation2 + $0x110] sm:$0xff] %v1056
      %1121 = vst [vmem:[#allocation2 + $0x118] sm:$0xff] %v1057
      %1122 = vst [vmem:[#allocation2 + $0x120] sm:$0xff] %v1058
      %1123 = vst [vmem:[#allocation2 + $0x128] sm:$0xff] %v1059
      %1124 = vst [vmem:[#allocation2 + $0x130] sm:$0xff] %v1060
      %1125 = vst [vmem:[#allocation2 + $0x138] sm:$0xff] %v1061
      %1126 = vst [vmem:[#allocation2 + $0x140] sm:$0xff] %v1062
      %1127 = vst [vmem:[#allocation2 + $0x148] sm:$0xff] %v1063
      %1128 = vst [vmem:[#allocation2 + $0x150] sm:$0xff] %v1064
      %1129 = vst [vmem:[#allocation2 + $0x158] sm:$0xff] %v1065
      %1130 = vst [vmem:[#allocation2 + $0x160] sm:$0xff] %v1066
      %1131 = vst [vmem:[#allocation2 + $0x168] sm:$0xff] %v1067
      %1132 = vst [vmem:[#allocation2 + $0x170] sm:$0xff] %v1068
      %1133 = vst [vmem:[#allocation2 + $0x178] sm:$0xff] %v1069
      %1134 = vst [vmem:[#allocation2 + $0x180] sm:$0xff] %v1070
      %1135 = vst [vmem:[#allocation2 + $0x188] sm:$0xff] %v1071
      %1136 = vst [vmem:[#allocation2 + $0x190] sm:$0xff] %v1072
      %1137 = vst [vmem:[#allocation2 + $0x198] sm:$0xff] %v1073
      %1138 = vst [vmem:[#allocation2 + $0x1a0] sm:$0xff] %v1074
      %1139 = vst [vmem:[#allocation2 + $0x1a8] sm:$0xff] %v1075
      %1140 = vst [vmem:[#allocation2 + $0x1b0] sm:$0xff] %v1076
      %1141 = vst [vmem:[#allocation2 + $0x1b8] sm:$0xff] %v1077
      %1142 = vst [vmem:[#allocation2 + $0x1c0] sm:$0xff] %v1078
      %1143 = vst [vmem:[#allocation2 + $0x1c8] sm:$0xff] %v1079
      %1144 = vst [vmem:[#allocation2 + $0x1d0] sm:$0xff] %v1080
      %1145 = vst [vmem:[#allocation2 + $0x1d8] sm:$0xff] %v1081
      %1146 = vst [vmem:[#allocation2 + $0x1e0] sm:$0xff] %v1082
      %1147 = vst [vmem:[#allocation2 + $0x1e8] sm:$0xff] %v1083
      %1148 = vst [vmem:[#allocation2 + $0x1f0] sm:$0xff] %v1084
      %1149 = vst [vmem:[#allocation2 + $0x1f8] sm:$0xff] %v1085
      %p1150 = scmp.eq.s32.totalorder %s20, 8
      // Predicated region
      $region41: #{mixed6a_forward.6} parent=35 // pred_check
        %p1151 = pneg %p1150
      $region42: #{mixed6a_forward.6} parent=35 // pred_check_branch
        %1153 = sbr.rel (%p1151) target = $region44
      $region43: #{mixed6a_forward.6} parent=35 // pred_region
        %v1154 = vld [vmem:[#allocation2] sm:$0xff]
        %v1155 = vld [vmem:[#allocation2 + $0x8] sm:$0xff]
        %v1156 = vld [vmem:[#allocation2 + $0x10] sm:$0xff]
        %v1157 = vld [vmem:[#allocation2 + $0x18] sm:$0xff]
        %v1158 = vld [vmem:[#allocation2 + $0x20] sm:$0xff]
        %v1159 = vld [vmem:[#allocation2 + $0x28] sm:$0xff]
        %v1160 = vld [vmem:[#allocation2 + $0x30] sm:$0xff]
        %v1161 = vld [vmem:[#allocation2 + $0x38] sm:$0xff]
        %v1162 = vld [vmem:[#allocation2 + $0x40] sm:$0xff]
        %v1163 = vld [vmem:[#allocation2 + $0x48] sm:$0xff]
        %v1164 = vld [vmem:[#allocation2 + $0x50] sm:$0xff]
        %v1165 = vld [vmem:[#allocation2 + $0x58] sm:$0xff]
        %v1166 = vld [vmem:[#allocation2 + $0x60] sm:$0xff]
        %v1167 = vld [vmem:[#allocation2 + $0x68] sm:$0xff]
        %v1168 = vld [vmem:[#allocation2 + $0x70] sm:$0xff]
        %v1169 = vld [vmem:[#allocation2 + $0x78] sm:$0xff]
        %v1170 = vld [vmem:[#allocation2 + $0x80] sm:$0xff]
        %v1171 = vld [vmem:[#allocation2 + $0x88] sm:$0xff]
        %v1172 = vld [vmem:[#allocation2 + $0x90] sm:$0xff]
        %v1173 = vld [vmem:[#allocation2 + $0x98] sm:$0xff]
        %v1174 = vld [vmem:[#allocation2 + $0xa0] sm:$0xff]
        %v1175 = vld [vmem:[#allocation2 + $0xa8] sm:$0xff]
        %v1176 = vld [vmem:[#allocation2 + $0xb0] sm:$0xff]
        %v1177 = vld [vmem:[#allocation2 + $0xb8] sm:$0xff]
        %v1178 = vld [vmem:[#allocation2 + $0xc0] sm:$0xff]
        %v1179 = vld [vmem:[#allocation2 + $0xc8] sm:$0xff]
        %v1180 = vld [vmem:[#allocation2 + $0xd0] sm:$0xff]
        %v1181 = vld [vmem:[#allocation2 + $0xd8] sm:$0xff]
        %v1182 = vld [vmem:[#allocation2 + $0xe0] sm:$0xff]
        %v1183 = vld [vmem:[#allocation2 + $0xe8] sm:$0xff]
        %v1184 = vld [vmem:[#allocation2 + $0xf0] sm:$0xff]
        %v1185 = vld [vmem:[#allocation2 + $0xf8] sm:$0xff]
        %v1186 = vld [vmem:[#allocation2 + $0x100] sm:$0xff]
        %v1187 = vld [vmem:[#allocation2 + $0x108] sm:$0xff]
        %v1188 = vld [vmem:[#allocation2 + $0x110] sm:$0xff]
        %v1189 = vld [vmem:[#allocation2 + $0x118] sm:$0xff]
        %v1190 = vld [vmem:[#allocation2 + $0x120] sm:$0xff]
        %v1191 = vld [vmem:[#allocation2 + $0x128] sm:$0xff]
        %v1192 = vld [vmem:[#allocation2 + $0x130] sm:$0xff]
        %v1193 = vld [vmem:[#allocation2 + $0x138] sm:$0xff]
        %v1194 = vld [vmem:[#allocation2 + $0x140] sm:$0xff]
        %v1195 = vld [vmem:[#allocation2 + $0x148] sm:$0xff]
        %v1196 = vld [vmem:[#allocation2 + $0x150] sm:$0xff]
        %v1197 = vld [vmem:[#allocation2 + $0x158] sm:$0xff]
        %v1198 = vld [vmem:[#allocation2 + $0x160] sm:$0xff]
        %v1199 = vld [vmem:[#allocation2 + $0x168] sm:$0xff]
        %v1200 = vld [vmem:[#allocation2 + $0x170] sm:$0xff]
        %v1201 = vld [vmem:[#allocation2 + $0x178] sm:$0xff]
        %v1202 = vld [vmem:[#allocation2 + $0x180] sm:$0xff]
        %v1203 = vld [vmem:[#allocation2 + $0x188] sm:$0xff]
        %v1204 = vld [vmem:[#allocation2 + $0x190] sm:$0xff]
        %v1205 = vld [vmem:[#allocation2 + $0x198] sm:$0xff]
        %v1206 = vld [vmem:[#allocation2 + $0x1a0] sm:$0xff]
        %v1207 = vld [vmem:[#allocation2 + $0x1a8] sm:$0xff]
        %v1208 = vld [vmem:[#allocation2 + $0x1b0] sm:$0xff]
        %v1209 = vld [vmem:[#allocation2 + $0x1b8] sm:$0xff]
        %v1210 = vld [vmem:[#allocation2 + $0x1c0] sm:$0xff]
        %v1211 = vld [vmem:[#allocation2 + $0x1c8] sm:$0xff]
        %v1212 = vld [vmem:[#allocation2 + $0x1d0] sm:$0xff]
        %v1213 = vld [vmem:[#allocation2 + $0x1d8] sm:$0xff]
        %v1214 = vld [vmem:[#allocation2 + $0x1e0] sm:$0xff]
        %v1215 = vld [vmem:[#allocation2 + $0x1e8] sm:$0xff]
        %v1216 = vld [vmem:[#allocation2 + $0x1f0] sm:$0xff]
        %v1217 = vld [vmem:[#allocation2 + $0x1f8] sm:$0xff]
        %v1218 = vld [vmem:[%s2] sm:$0x1]
        %v1220 = vlaneseq
        %v1221 = vshrl.u32 %v1220, 7
        %v1222 = vsub.s32 0, %v1221
        %v1223 = vrot.slane %v1218, %v1222
        %v1225 = vmul.f32 %v1154, %v1223
        %v1226 = vmul.f32 %v1155, %v1223
        %v1227 = vmul.f32 %v1156, %v1223
        %v1228 = vmul.f32 %v1157, %v1223
        %v1229 = vmul.f32 %v1158, %v1223
        %v1230 = vmul.f32 %v1159, %v1223
        %v1231 = vmul.f32 %v1160, %v1223
        %v1232 = vmul.f32 %v1161, %v1223
        %v1233 = vmul.f32 %v1162, %v1223
        %v1234 = vmul.f32 %v1163, %v1223
        %v1235 = vmul.f32 %v1164, %v1223
        %v1236 = vmul.f32 %v1165, %v1223
        %v1237 = vmul.f32 %v1166, %v1223
        %v1238 = vmul.f32 %v1167, %v1223
        %v1239 = vmul.f32 %v1168, %v1223
        %v1240 = vmul.f32 %v1169, %v1223
        %v1241 = vmul.f32 %v1170, %v1223
        %v1242 = vmul.f32 %v1171, %v1223
        %v1243 = vmul.f32 %v1172, %v1223
        %v1244 = vmul.f32 %v1173, %v1223
        %v1245 = vmul.f32 %v1174, %v1223
        %v1246 = vmul.f32 %v1175, %v1223
        %v1247 = vmul.f32 %v1176, %v1223
        %v1248 = vmul.f32 %v1177, %v1223
        %v1249 = vmul.f32 %v1178, %v1223
        %v1250 = vmul.f32 %v1179, %v1223
        %v1251 = vmul.f32 %v1180, %v1223
        %v1252 = vmul.f32 %v1181, %v1223
        %v1253 = vmul.f32 %v1182, %v1223
        %v1254 = vmul.f32 %v1183, %v1223
        %v1255 = vmul.f32 %v1184, %v1223
        %v1256 = vmul.f32 %v1185, %v1223
        %v1257 = vmul.f32 %v1186, %v1223
        %v1258 = vmul.f32 %v1187, %v1223
        %v1259 = vmul.f32 %v1188, %v1223
        %v1260 = vmul.f32 %v1189, %v1223
        %v1261 = vmul.f32 %v1190, %v1223
        %v1262 = vmul.f32 %v1191, %v1223
        %v1263 = vmul.f32 %v1192, %v1223
        %v1264 = vmul.f32 %v1193, %v1223
        %v1265 = vmul.f32 %v1194, %v1223
        %v1266 = vmul.f32 %v1195, %v1223
        %v1267 = vmul.f32 %v1196, %v1223
        %v1268 = vmul.f32 %v1197, %v1223
        %v1269 = vmul.f32 %v1198, %v1223
        %v1270 = vmul.f32 %v1199, %v1223
        %v1271 = vmul.f32 %v1200, %v1223
        %v1272 = vmul.f32 %v1201, %v1223
        %v1273 = vmul.f32 %v1202, %v1223
        %v1274 = vmul.f32 %v1203, %v1223
        %v1275 = vmul.f32 %v1204, %v1223
        %v1276 = vmul.f32 %v1205, %v1223
        %v1277 = vmul.f32 %v1206, %v1223
        %v1278 = vmul.f32 %v1207, %v1223
        %v1279 = vmul.f32 %v1208, %v1223
        %v1280 = vmul.f32 %v1209, %v1223
        %v1281 = vmul.f32 %v1210, %v1223
        %v1282 = vmul.f32 %v1211, %v1223
        %v1283 = vmul.f32 %v1212, %v1223
        %v1284 = vmul.f32 %v1213, %v1223
        %v1285 = vmul.f32 %v1214, %v1223
        %v1286 = vmul.f32 %v1215, %v1223
        %v1287 = vmul.f32 %v1216, %v1223
        %v1288 = vmul.f32 %v1217, %v1223
        %v1289 = vld [vmem:[%s3] sm:$0x1]
        %v1291 = vlaneseq
        %v1292 = vshrl.u32 %v1291, 7
        %v1293 = vsub.s32 0, %v1292
        %v1294 = vrot.slane %v1289, %v1293
        %v1296 = vadd.f32 %v1225, %v1294
        %v1297 = vadd.f32 %v1226, %v1294
        %v1298 = vadd.f32 %v1227, %v1294
        %v1299 = vadd.f32 %v1228, %v1294
        %v1300 = vadd.f32 %v1229, %v1294
        %v1301 = vadd.f32 %v1230, %v1294
        %v1302 = vadd.f32 %v1231, %v1294
        %v1303 = vadd.f32 %v1232, %v1294
        %v1304 = vadd.f32 %v1233, %v1294
        %v1305 = vadd.f32 %v1234, %v1294
        %v1306 = vadd.f32 %v1235, %v1294
        %v1307 = vadd.f32 %v1236, %v1294
        %v1308 = vadd.f32 %v1237, %v1294
        %v1309 = vadd.f32 %v1238, %v1294
        %v1310 = vadd.f32 %v1239, %v1294
        %v1311 = vadd.f32 %v1240, %v1294
        %v1312 = vadd.f32 %v1241, %v1294
        %v1313 = vadd.f32 %v1242, %v1294
        %v1314 = vadd.f32 %v1243, %v1294
        %v1315 = vadd.f32 %v1244, %v1294
        %v1316 = vadd.f32 %v1245, %v1294
        %v1317 = vadd.f32 %v1246, %v1294
        %v1318 = vadd.f32 %v1247, %v1294
        %v1319 = vadd.f32 %v1248, %v1294
        %v1320 = vadd.f32 %v1249, %v1294
        %v1321 = vadd.f32 %v1250, %v1294
        %v1322 = vadd.f32 %v1251, %v1294
        %v1323 = vadd.f32 %v1252, %v1294
        %v1324 = vadd.f32 %v1253, %v1294
        %v1325 = vadd.f32 %v1254, %v1294
        %v1326 = vadd.f32 %v1255, %v1294
        %v1327 = vadd.f32 %v1256, %v1294
        %v1328 = vadd.f32 %v1257, %v1294
        %v1329 = vadd.f32 %v1258, %v1294
        %v1330 = vadd.f32 %v1259, %v1294
        %v1331 = vadd.f32 %v1260, %v1294
        %v1332 = vadd.f32 %v1261, %v1294
        %v1333 = vadd.f32 %v1262, %v1294
        %v1334 = vadd.f32 %v1263, %v1294
        %v1335 = vadd.f32 %v1264, %v1294
        %v1336 = vadd.f32 %v1265, %v1294
        %v1337 = vadd.f32 %v1266, %v1294
        %v1338 = vadd.f32 %v1267, %v1294
        %v1339 = vadd.f32 %v1268, %v1294
        %v1340 = vadd.f32 %v1269, %v1294
        %v1341 = vadd.f32 %v1270, %v1294
        %v1342 = vadd.f32 %v1271, %v1294
        %v1343 = vadd.f32 %v1272, %v1294
        %v1344 = vadd.f32 %v1273, %v1294
        %v1345 = vadd.f32 %v1274, %v1294
        %v1346 = vadd.f32 %v1275, %v1294
        %v1347 = vadd.f32 %v1276, %v1294
        %v1348 = vadd.f32 %v1277, %v1294
        %v1349 = vadd.f32 %v1278, %v1294
        %v1350 = vadd.f32 %v1279, %v1294
        %v1351 = vadd.f32 %v1280, %v1294
        %v1352 = vadd.f32 %v1281, %v1294
        %v1353 = vadd.f32 %v1282, %v1294
        %v1354 = vadd.f32 %v1283, %v1294
        %v1355 = vadd.f32 %v1284, %v1294
        %v1356 = vadd.f32 %v1285, %v1294
        %v1357 = vadd.f32 %v1286, %v1294
        %v1358 = vadd.f32 %v1287, %v1294
        %v1359 = vadd.f32 %v1288, %v1294
        %v1360 = vmax.f32 %v1296, 0.0
        %v1361 = vmax.f32 %v1297, 0.0
        %v1362 = vmax.f32 %v1298, 0.0
        %v1363 = vmax.f32 %v1299, 0.0
        %v1364 = vmax.f32 %v1300, 0.0
        %v1365 = vmax.f32 %v1301, 0.0
        %v1366 = vmax.f32 %v1302, 0.0
        %v1367 = vmax.f32 %v1303, 0.0
        %v1368 = vmax.f32 %v1304, 0.0
        %v1369 = vmax.f32 %v1305, 0.0
        %v1370 = vmax.f32 %v1306, 0.0
        %v1371 = vmax.f32 %v1307, 0.0
        %v1372 = vmax.f32 %v1308, 0.0
        %v1373 = vmax.f32 %v1309, 0.0
        %v1374 = vmax.f32 %v1310, 0.0
        %v1375 = vmax.f32 %v1311, 0.0
        %v1376 = vmax.f32 %v1312, 0.0
        %v1377 = vmax.f32 %v1313, 0.0
        %v1378 = vmax.f32 %v1314, 0.0
        %v1379 = vmax.f32 %v1315, 0.0
        %v1380 = vmax.f32 %v1316, 0.0
        %v1381 = vmax.f32 %v1317, 0.0
        %v1382 = vmax.f32 %v1318, 0.0
        %v1383 = vmax.f32 %v1319, 0.0
        %v1384 = vmax.f32 %v1320, 0.0
        %v1385 = vmax.f32 %v1321, 0.0
        %v1386 = vmax.f32 %v1322, 0.0
        %v1387 = vmax.f32 %v1323, 0.0
        %v1388 = vmax.f32 %v1324, 0.0
        %v1389 = vmax.f32 %v1325, 0.0
        %v1390 = vmax.f32 %v1326, 0.0
        %v1391 = vmax.f32 %v1327, 0.0
        %v1392 = vmax.f32 %v1328, 0.0
        %v1393 = vmax.f32 %v1329, 0.0
        %v1394 = vmax.f32 %v1330, 0.0
        %v1395 = vmax.f32 %v1331, 0.0
        %v1396 = vmax.f32 %v1332, 0.0
        %v1397 = vmax.f32 %v1333, 0.0
        %v1398 = vmax.f32 %v1334, 0.0
        %v1399 = vmax.f32 %v1335, 0.0
        %v1400 = vmax.f32 %v1336, 0.0
        %v1401 = vmax.f32 %v1337, 0.0
        %v1402 = vmax.f32 %v1338, 0.0
        %v1403 = vmax.f32 %v1339, 0.0
        %v1404 = vmax.f32 %v1340, 0.0
        %v1405 = vmax.f32 %v1341, 0.0
        %v1406 = vmax.f32 %v1342, 0.0
        %v1407 = vmax.f32 %v1343, 0.0
        %v1408 = vmax.f32 %v1344, 0.0
        %v1409 = vmax.f32 %v1345, 0.0
        %v1410 = vmax.f32 %v1346, 0.0
        %v1411 = vmax.f32 %v1347, 0.0
        %v1412 = vmax.f32 %v1348, 0.0
        %v1413 = vmax.f32 %v1349, 0.0
        %v1414 = vmax.f32 %v1350, 0.0
        %v1415 = vmax.f32 %v1351, 0.0
        %v1416 = vmax.f32 %v1352, 0.0
        %v1417 = vmax.f32 %v1353, 0.0
        %v1418 = vmax.f32 %v1354, 0.0
        %v1419 = vmax.f32 %v1355, 0.0
        %v1420 = vmax.f32 %v1356, 0.0
        %v1421 = vmax.f32 %v1357, 0.0
        %v1422 = vmax.f32 %v1358, 0.0
        %v1423 = vmax.f32 %v1359, 0.0
        %v1424 = vpack.c.bf16 %v1361, %v1360
        %v1425 = vpack.c.bf16 %v1363, %v1362
        %v1426 = vpack.c.bf16 %v1365, %v1364
        %v1427 = vpack.c.bf16 %v1367, %v1366
        %v1428 = vpack.c.bf16 %v1369, %v1368
        %v1429 = vpack.c.bf16 %v1371, %v1370
        %v1430 = vpack.c.bf16 %v1373, %v1372
        %v1431 = vpack.c.bf16 %v1375, %v1374
        %v1432 = vpack.c.bf16 %v1377, %v1376
        %v1433 = vpack.c.bf16 %v1379, %v1378
        %v1434 = vpack.c.bf16 %v1381, %v1380
        %v1435 = vpack.c.bf16 %v1383, %v1382
        %v1436 = vpack.c.bf16 %v1385, %v1384
        %v1437 = vpack.c.bf16 %v1387, %v1386
        %v1438 = vpack.c.bf16 %v1389, %v1388
        %v1439 = vpack.c.bf16 %v1391, %v1390
        %v1440 = vpack.c.bf16 %v1393, %v1392
        %v1441 = vpack.c.bf16 %v1395, %v1394
        %v1442 = vpack.c.bf16 %v1397, %v1396
        %v1443 = vpack.c.bf16 %v1399, %v1398
        %v1444 = vpack.c.bf16 %v1401, %v1400
        %v1445 = vpack.c.bf16 %v1403, %v1402
        %v1446 = vpack.c.bf16 %v1405, %v1404
        %v1447 = vpack.c.bf16 %v1407, %v1406
        %v1448 = vpack.c.bf16 %v1409, %v1408
        %v1449 = vpack.c.bf16 %v1411, %v1410
        %v1450 = vpack.c.bf16 %v1413, %v1412
        %v1451 = vpack.c.bf16 %v1415, %v1414
        %v1452 = vpack.c.bf16 %v1417, %v1416
        %v1453 = vpack.c.bf16 %v1419, %v1418
        %v1454 = vpack.c.bf16 %v1421, %v1420
        %v1455 = vpack.c.bf16 %v1423, %v1422
        %v1488 = vunpack.c.l.b16 %v1424
        %v1489 = vunpack.c.h.b16 %v1424
        %v1490 = vunpack.c.l.b16 %v1425
        %v1491 = vunpack.c.h.b16 %v1425
        %v1492 = vunpack.c.l.b16 %v1426
        %v1493 = vunpack.c.h.b16 %v1426
        %v1494 = vunpack.c.l.b16 %v1427
        %v1495 = vunpack.c.h.b16 %v1427
        %v1496 = vunpack.c.l.b16 %v1428
        %v1497 = vunpack.c.h.b16 %v1428
        %v1498 = vunpack.c.l.b16 %v1429
        %v1499 = vunpack.c.h.b16 %v1429
        %v1500 = vunpack.c.l.b16 %v1430
        %v1501 = vunpack.c.h.b16 %v1430
        %v1502 = vunpack.c.l.b16 %v1431
        %v1503 = vunpack.c.h.b16 %v1431
        %v1504 = vunpack.c.l.b16 %v1432
        %v1505 = vunpack.c.h.b16 %v1432
        %v1506 = vunpack.c.l.b16 %v1433
        %v1507 = vunpack.c.h.b16 %v1433
        %v1508 = vunpack.c.l.b16 %v1434
        %v1509 = vunpack.c.h.b16 %v1434
        %v1510 = vunpack.c.l.b16 %v1435
        %v1511 = vunpack.c.h.b16 %v1435
        %v1512 = vunpack.c.l.b16 %v1436
        %v1513 = vunpack.c.h.b16 %v1436
        %v1514 = vunpack.c.l.b16 %v1437
        %v1515 = vunpack.c.h.b16 %v1437
        %v1516 = vunpack.c.l.b16 %v1438
        %v1517 = vunpack.c.h.b16 %v1438
        %v1518 = vunpack.c.l.b16 %v1439
        %v1519 = vunpack.c.h.b16 %v1439
        %v1520 = vunpack.c.l.b16 %v1440
        %v1521 = vunpack.c.h.b16 %v1440
        %v1522 = vunpack.c.l.b16 %v1441
        %v1523 = vunpack.c.h.b16 %v1441
        %v1524 = vunpack.c.l.b16 %v1442
        %v1525 = vunpack.c.h.b16 %v1442
        %v1526 = vunpack.c.l.b16 %v1443
        %v1527 = vunpack.c.h.b16 %v1443
        %v1528 = vunpack.c.l.b16 %v1444
        %v1529 = vunpack.c.h.b16 %v1444
        %v1530 = vunpack.c.l.b16 %v1445
        %v1531 = vunpack.c.h.b16 %v1445
        %v1532 = vunpack.c.l.b16 %v1446
        %v1533 = vunpack.c.h.b16 %v1446
        %v1534 = vunpack.c.l.b16 %v1447
        %v1535 = vunpack.c.h.b16 %v1447
        %v1536 = vunpack.c.l.b16 %v1448
        %v1537 = vunpack.c.h.b16 %v1448
        %v1538 = vunpack.c.l.b16 %v1449
        %v1539 = vunpack.c.h.b16 %v1449
        %v1540 = vunpack.c.l.b16 %v1450
        %v1541 = vunpack.c.h.b16 %v1450
        %v1542 = vunpack.c.l.b16 %v1451
        %v1543 = vunpack.c.h.b16 %v1451
        %v1544 = vunpack.c.l.b16 %v1452
        %v1545 = vunpack.c.h.b16 %v1452
        %v1546 = vunpack.c.l.b16 %v1453
        %v1547 = vunpack.c.h.b16 %v1453
        %v1548 = vunpack.c.l.b16 %v1454
        %v1549 = vunpack.c.h.b16 %v1454
        %v1550 = vunpack.c.l.b16 %v1455
        %v1551 = vunpack.c.h.b16 %v1455
        %v1552 = vpack.c.b16 %v1488, %v1488
        %v1553 = vpack.c.b16 %v1489, %v1489
        %v1554 = vpack.c.b16 %v1490, %v1490
        %v1555 = vpack.c.b16 %v1491, %v1491
        %v1556 = vpack.c.b16 %v1492, %v1492
        %v1557 = vpack.c.b16 %v1493, %v1493
        %v1558 = vpack.c.b16 %v1494, %v1494
        %v1559 = vpack.c.b16 %v1495, %v1495
        %v1560 = vpack.c.b16 %v1496, %v1496
        %v1561 = vpack.c.b16 %v1497, %v1497
        %v1562 = vpack.c.b16 %v1498, %v1498
        %v1563 = vpack.c.b16 %v1499, %v1499
        %v1564 = vpack.c.b16 %v1500, %v1500
        %v1565 = vpack.c.b16 %v1501, %v1501
        %v1566 = vpack.c.b16 %v1502, %v1502
        %v1567 = vpack.c.b16 %v1503, %v1503
        %v1568 = vpack.c.b16 %v1504, %v1504
        %v1569 = vpack.c.b16 %v1505, %v1505
        %v1570 = vpack.c.b16 %v1506, %v1506
        %v1571 = vpack.c.b16 %v1507, %v1507
        %v1572 = vpack.c.b16 %v1508, %v1508
        %v1573 = vpack.c.b16 %v1509, %v1509
        %v1574 = vpack.c.b16 %v1510, %v1510
        %v1575 = vpack.c.b16 %v1511, %v1511
        %v1576 = vpack.c.b16 %v1512, %v1512
        %v1577 = vpack.c.b16 %v1513, %v1513
        %v1578 = vpack.c.b16 %v1514, %v1514
        %v1579 = vpack.c.b16 %v1515, %v1515
        %v1580 = vpack.c.b16 %v1516, %v1516
        %v1581 = vpack.c.b16 %v1517, %v1517
        %v1582 = vpack.c.b16 %v1518, %v1518
        %v1583 = vpack.c.b16 %v1519, %v1519
        %v1584 = vpack.c.b16 %v1520, %v1520
        %v1585 = vpack.c.b16 %v1521, %v1521
        %v1586 = vpack.c.b16 %v1522, %v1522
        %v1587 = vpack.c.b16 %v1523, %v1523
        %v1588 = vpack.c.b16 %v1524, %v1524
        %v1589 = vpack.c.b16 %v1525, %v1525
        %v1590 = vpack.c.b16 %v1526, %v1526
        %v1591 = vpack.c.b16 %v1527, %v1527
        %v1592 = vpack.c.b16 %v1528, %v1528
        %v1593 = vpack.c.b16 %v1529, %v1529
        %v1594 = vpack.c.b16 %v1530, %v1530
        %v1595 = vpack.c.b16 %v1531, %v1531
        %v1596 = vpack.c.b16 %v1532, %v1532
        %v1597 = vpack.c.b16 %v1533, %v1533
        %v1598 = vpack.c.b16 %v1534, %v1534
        %v1599 = vpack.c.b16 %v1535, %v1535
        %v1600 = vpack.c.b16 %v1536, %v1536
        %v1601 = vpack.c.b16 %v1537, %v1537
        %v1602 = vpack.c.b16 %v1538, %v1538
        %v1603 = vpack.c.b16 %v1539, %v1539
        %v1604 = vpack.c.b16 %v1540, %v1540
        %v1605 = vpack.c.b16 %v1541, %v1541
        %v1606 = vpack.c.b16 %v1542, %v1542
        %v1607 = vpack.c.b16 %v1543, %v1543
        %v1608 = vpack.c.b16 %v1544, %v1544
        %v1609 = vpack.c.b16 %v1545, %v1545
        %v1610 = vpack.c.b16 %v1546, %v1546
        %v1611 = vpack.c.b16 %v1547, %v1547
        %v1612 = vpack.c.b16 %v1548, %v1548
        %v1613 = vpack.c.b16 %v1549, %v1549
        %v1614 = vpack.c.b16 %v1550, %v1550
        %v1615 = vpack.c.b16 %v1551, %v1551
        %1680 = vst [vmem:[%s245] sm:$0xf] %v1552
        %1681 = vst [vmem:[%s245 + $0x4] sm:$0xf] %v1553
        %1682 = vst [vmem:[%s245 + $0x8] sm:$0xf] %v1554
        %1683 = vst [vmem:[%s245 + $0xc] sm:$0xf] %v1555
        %1684 = vst [vmem:[%s245 + $0x10] sm:$0xf] %v1556
        %1685 = vst [vmem:[%s245 + $0x14] sm:$0xf] %v1557
        %1686 = vst [vmem:[%s245 + $0x18] sm:$0xf] %v1558
        %1687 = vst [vmem:[%s245 + $0x1c] sm:$0xf] %v1559
        %1688 = vst [vmem:[%s245 + $0x20] sm:$0xf] %v1560
        %1689 = vst [vmem:[%s245 + $0x24] sm:$0xf] %v1561
        %1690 = vst [vmem:[%s245 + $0x28] sm:$0xf] %v1562
        %1691 = vst [vmem:[%s245 + $0x2c] sm:$0xf] %v1563
        %1692 = vst [vmem:[%s245 + $0x30] sm:$0xf] %v1564
        %1693 = vst [vmem:[%s245 + $0x34] sm:$0xf] %v1565
        %1694 = vst [vmem:[%s245 + $0x38] sm:$0xf] %v1566
        %1695 = vst [vmem:[%s245 + $0x3c] sm:$0xf] %v1567
        %1696 = vst [vmem:[%s245 + $0x40] sm:$0xf] %v1568
        %1697 = vst [vmem:[%s245 + $0x44] sm:$0xf] %v1569
        %1698 = vst [vmem:[%s245 + $0x48] sm:$0xf] %v1570
        %1699 = vst [vmem:[%s245 + $0x4c] sm:$0xf] %v1571
        %1700 = vst [vmem:[%s245 + $0x50] sm:$0xf] %v1572
        %1701 = vst [vmem:[%s245 + $0x54] sm:$0xf] %v1573
        %1702 = vst [vmem:[%s245 + $0x58] sm:$0xf] %v1574
        %1703 = vst [vmem:[%s245 + $0x5c] sm:$0xf] %v1575
        %1704 = vst [vmem:[%s245 + $0x60] sm:$0xf] %v1576
        %1705 = vst [vmem:[%s245 + $0x64] sm:$0xf] %v1577
        %1706 = vst [vmem:[%s245 + $0x68] sm:$0xf] %v1578
        %1707 = vst [vmem:[%s245 + $0x6c] sm:$0xf] %v1579
        %1708 = vst [vmem:[%s245 + $0x70] sm:$0xf] %v1580
        %1709 = vst [vmem:[%s245 + $0x74] sm:$0xf] %v1581
        %1710 = vst [vmem:[%s245 + $0x78] sm:$0xf] %v1582
        %1711 = vst [vmem:[%s245 + $0x7c] sm:$0xf] %v1583
        %1712 = vst [vmem:[%s245 + $0x80] sm:$0xf] %v1584
        %1713 = vst [vmem:[%s245 + $0x84] sm:$0xf] %v1585
        %1714 = vst [vmem:[%s245 + $0x88] sm:$0xf] %v1586
        %1715 = vst [vmem:[%s245 + $0x8c] sm:$0xf] %v1587
        %1716 = vst [vmem:[%s245 + $0x90] sm:$0xf] %v1588
        %1717 = vst [vmem:[%s245 + $0x94] sm:$0xf] %v1589
        %1718 = vst [vmem:[%s245 + $0x98] sm:$0xf] %v1590
        %1719 = vst [vmem:[%s245 + $0x9c] sm:$0xf] %v1591
        %1720 = vst [vmem:[%s245 + $0xa0] sm:$0xf] %v1592
        %1721 = vst [vmem:[%s245 + $0xa4] sm:$0xf] %v1593
        %1722 = vst [vmem:[%s245 + $0xa8] sm:$0xf] %v1594
        %1723 = vst [vmem:[%s245 + $0xac] sm:$0xf] %v1595
        %1724 = vst [vmem:[%s245 + $0xb0] sm:$0xf] %v1596
        %1725 = vst [vmem:[%s245 + $0xb4] sm:$0xf] %v1597
        %1726 = vst [vmem:[%s245 + $0xb8] sm:$0xf] %v1598
        %1727 = vst [vmem:[%s245 + $0xbc] sm:$0xf] %v1599
        %1728 = vst [vmem:[%s245 + $0xc0] sm:$0xf] %v1600
        %1729 = vst [vmem:[%s245 + $0xc4] sm:$0xf] %v1601
        %1730 = vst [vmem:[%s245 + $0xc8] sm:$0xf] %v1602
        %1731 = vst [vmem:[%s245 + $0xcc] sm:$0xf] %v1603
        %1732 = vst [vmem:[%s245 + $0xd0] sm:$0xf] %v1604
        %1733 = vst [vmem:[%s245 + $0xd4] sm:$0xf] %v1605
        %1734 = vst [vmem:[%s245 + $0xd8] sm:$0xf] %v1606
        %1735 = vst [vmem:[%s245 + $0xdc] sm:$0xf] %v1607
        %1736 = vst [vmem:[%s245 + $0xe0] sm:$0xf] %v1608
        %1737 = vst [vmem:[%s245 + $0xe4] sm:$0xf] %v1609
        %1738 = vst [vmem:[%s245 + $0xe8] sm:$0xf] %v1610
        %1739 = vst [vmem:[%s245 + $0xec] sm:$0xf] %v1611
        %1740 = vst [vmem:[%s245 + $0xf0] sm:$0xf] %v1612
        %1741 = vst [vmem:[%s245 + $0xf4] sm:$0xf] %v1613
        %1742 = vst [vmem:[%s245 + $0xf8] sm:$0xf] %v1614
        %1743 = vst [vmem:[%s245 + $0xfc] sm:$0xf] %v1615
      $region44: #{mixed6a_forward.6} parent=35 // pred_fallthru
        _
      %s1744 = smul.u32 64, %s19
      %p1745 = scmp.lt.s32.totalorder %s1744, 63
      %s1746 = scalar_select %p1745, %s1744, 63
      %s1747 = smul.addr %s1746, 4
      %s1748 = scalar_lea.vmem %s4, %s1747
      // Predicated region
      $region45: #{mixed6a_forward.6} parent=35 // pred_check
        %p1749 = pneg %p141
      $region46: #{mixed6a_forward.6} parent=35 // pred_check_branch
        %1751 = sbr.rel (%p1749) target = $region48
      $region47: #{mixed6a_forward.6} parent=35 // pred_region
        %s1752 = smul.u32 64, %s19
      $region48: #{mixed6a_forward.6} parent=35 // pred_fallthru
        _
      // Predicated region
      $region49: #{mixed6a_forward.6} parent=35 // pred_check
        %p1753 = pneg %p141
      $region50: #{mixed6a_forward.6} parent=35 // pred_check_branch
        %1755 = sbr.rel (%p1753) target = $region52
      $region51: #{mixed6a_forward.6} parent=35 // pred_region
        %s1756 = smul.u32 64, %s19
        %p1757 = scmp.lt.s32.totalorder %s1756, 63
        %s1758 = scalar_select %p1757, %s1756, 63
        %s1759 = smul.addr %s1758, 4
        %s1760 = scalar_lea.vmem %s4, %s1759
      $region52: #{mixed6a_forward.6} parent=35 // pred_fallthru
        _
    $region36: #{mixed6a_forward.6} parent=5 // pred_fallthru
      _
    %p1761 = scmp.le.s32.totalorder 2, %s10
    // Predicated region
    $region53: #{mixed6a_forward.6} parent=5 // pred_check
      %p1762 = pneg %p1761
    $region54: #{mixed6a_forward.6} parent=5 // pred_check_branch
      %1764 = sbr.rel (%p1762) target = $region56
    $region55: #{mixed6a_forward.6} parent=5 // pred_region
      %s1765 = ssub.s32 %s10, 2
    $region56: #{mixed6a_forward.6} parent=5 // pred_fallthru
      _
  $region6: #{mixed6a_forward.6} parent=0 // loop_footer
    %s14 = sadd.s32 1, %s10
  $region7: #{mixed6a_forward.6} parent=0 // loop_footer_branch
    %9 = sbr.rel target = $region3
  $region8: #{mixed6a_forward.6} parent=0 // loop_exit
    _

// kernel: mixed6a_forward.7
$region0: #{mixed6a_forward.7}
  #allocation0 [shape = 'u32[]', space=smem, size = 0x4, offset = 0x4, fixed_abs, tag = 'smem constant byte address 0x4 - core index']
  #allocation1 [shape = 'u32[144,128]{1,0:T(1,128)}', space=vmem, size = 0x12000, scoped, tag = 'internal scratch']
  #allocation2 [shape = 'f32[104,128]{1,0:T(8,128)}', space=vmem, size = 0xd000, scoped, tag = 'scratch operand']
  %s0 = inlined_call_operand.vmem [shape: bf16[9,104,96], index: 0, kind: input, shape index: {}]
  %s1 = inlined_call_operand.vmem [shape: bf16[9,96,128], index: 1, kind: input, shape index: {}]
  %s2 = inlined_call_operand.vmem [shape: f32[1,128], index: 2, kind: input, shape index: {}]
  %s3 = inlined_call_operand.vmem [shape: f32[1,128], index: 3, kind: input, shape index: {}]
  %s4 = inlined_call_operand.vmem [shape: f32[104,128], index: 4, kind: output, shape index: {}]
  %s5 = sld [smem:[#allocation0]]
  $region57: #{mixed6a_forward.7} parent=0
    _
  %s7 = ssub.s32 1, %s5
  %s8 = scalar_select 0, %s7, %s5
  loop: start=0, step=1, limit=11
  $region2: #{mixed6a_forward.7} parent=0 // loop_pre_header
    _
  $region3: #{mixed6a_forward.7} parent=0 // loop_header
    %s10 = sphi 0, %s14
    %p11 = scmp.ge.s32.totalorder %s10, 11
    %s17 = sphi 0, %s29
    %s18 = sphi 0, %s25
    %s19 = sphi 0, %s17
    %s20 = sphi 0, %s18
    %s21 = sphi 0, %s19
    %s22 = sphi 0, %s20
    %s34 = sphi 0, %s36
    %s37 = sphi 0, %s34
    %s38 = sphi 0, %s37
    %s54 = sphi 0, %s38
    %s60 = sphi 0, %s62
    %s63 = sphi 0, %s60
    %s64 = sphi 0, %s63
    %s80 = sphi 0, %s64
    %s84 = sphi 0, %s84
    %s86 = sphi 0, %s84
    %s87 = sphi 0, %s86
    %s101 = sphi 0, %s87
    %s105 = sphi 0, %s105
    %s107 = sphi 0, %s105
    %s108 = sphi 0, %s107
    %s122 = sphi 0, %s108
    %s128 = sphi 0, %s130
    %s131 = sphi 0, %s128
    %s132 = sphi 0, %s131
    %s148 = sphi 0, %s132
  $region4: #{mixed6a_forward.7} parent=0 // loop_header_branch
    %13 = sbr.rel (%p11) target = $region8
  $region5: #{mixed6a_forward.7} parent=0 // loop_body
    %s15 = ssub.s32 %s10, 1
    %s16 = ssub.s32 %s10, 2
    %s23 = sadd.s32 1, %s18
    %p24 = scmp.ge.s32.totalorder %s23, 9
    %s25 = scalar_select %p24, 0, %s23
    %s26 = sadd.s32 1, %s17
    %s27 = scalar_select %p24, %s26, %s17
    %p28 = scmp.ge.s32.totalorder %s27, 1
    %s29 = scalar_select %p28, 0, %s27
    %s30 = ssub.s32 %s18, %s25
    %s31 = ssub.s32 %s17, %s29
    %s32 = sor.u32 %s30, %s31
    %p33 = scmp.eq.s32.totalorder %s32, 0
    %s35 = sadd.s32 %s34, 1
    %s36 = scalar_select %p33, %s34, %s35
    %p39 = pneg %p33
    %p40 = scmp.eq.s32.totalorder %s10, 8
    %p41 = por %p39, %p40
    %p42 = scmp.ne.s32.totalorder %s34, %s37
    %p43 = scmp.eq.s32.totalorder %s10, 0
    %p44 = por %p42, %p43
    %p45 = scmp.ne.s32.totalorder %s34, %s37
    %p46 = scmp.eq.s32.totalorder %s15, 8
    %p47 = por %p45, %p46
    %p48 = scmp.ne.s32.totalorder %s37, %s38
    %p49 = scmp.eq.s32.totalorder %s15, 0
    %p50 = por %p48, %p49
    %p51 = scmp.ne.s32.totalorder %s37, %s38
    %p52 = scmp.eq.s32.totalorder %s16, 8
    %p53 = por %p51, %p52
    %p55 = scmp.ne.s32.totalorder %s38, %s54
    %p56 = scmp.eq.s32.totalorder %s16, 0
    %p57 = por %p55, %p56
    %s58 = ssub.s32 %s18, %s25
    %p59 = scmp.eq.s32.totalorder %s58, 0
    %s61 = sadd.s32 %s60, 1
    %s62 = scalar_select %p59, %s60, %s61
    %p65 = pneg %p59
    %p66 = scmp.eq.s32.totalorder %s10, 8
    %p67 = por %p65, %p66
    %p68 = scmp.ne.s32.totalorder %s60, %s63
    %p69 = scmp.eq.s32.totalorder %s10, 0
    %p70 = por %p68, %p69
    %p71 = scmp.ne.s32.totalorder %s60, %s63
    %p72 = scmp.eq.s32.totalorder %s15, 8
    %p73 = por %p71, %p72
    %p74 = scmp.ne.s32.totalorder %s63, %s64
    %p75 = scmp.eq.s32.totalorder %s15, 0
    %p76 = por %p74, %p75
    %p77 = scmp.ne.s32.totalorder %s63, %s64
    %p78 = scmp.eq.s32.totalorder %s16, 8
    %p79 = por %p77, %p78
    %p81 = scmp.ne.s32.totalorder %s64, %s80
    %p82 = scmp.eq.s32.totalorder %s16, 0
    %p83 = por %p81, %p82
    %s85 = sadd.s32 %s84, 1
    %p88 = scmp.eq.s32.totalorder %s10, 8
    %p89 = scmp.ne.s32.totalorder %s84, %s86
    %p90 = scmp.eq.s32.totalorder %s10, 0
    %p91 = por %p89, %p90
    %p92 = scmp.ne.s32.totalorder %s84, %s86
    %p93 = scmp.eq.s32.totalorder %s15, 8
    %p94 = por %p92, %p93
    %p95 = scmp.ne.s32.totalorder %s86, %s87
    %p96 = scmp.eq.s32.totalorder %s15, 0
    %p97 = por %p95, %p96
    %p98 = scmp.ne.s32.totalorder %s86, %s87
    %p99 = scmp.eq.s32.totalorder %s16, 8
    %p100 = por %p98, %p99
    %p102 = scmp.ne.s32.totalorder %s87, %s101
    %p103 = scmp.eq.s32.totalorder %s16, 0
    %p104 = por %p102, %p103
    %s106 = sadd.s32 %s105, 1
    %p109 = scmp.eq.s32.totalorder %s10, 8
    %p110 = scmp.ne.s32.totalorder %s105, %s107
    %p111 = scmp.eq.s32.totalorder %s10, 0
    %p112 = por %p110, %p111
    %p113 = scmp.ne.s32.totalorder %s105, %s107
    %p114 = scmp.eq.s32.totalorder %s15, 8
    %p115 = por %p113, %p114
    %p116 = scmp.ne.s32.totalorder %s107, %s108
    %p117 = scmp.eq.s32.totalorder %s15, 0
    %p118 = por %p116, %p117
    %p119 = scmp.ne.s32.totalorder %s107, %s108
    %p120 = scmp.eq.s32.totalorder %s16, 8
    %p121 = por %p119, %p120
    %p123 = scmp.ne.s32.totalorder %s108, %s122
    %p124 = scmp.eq.s32.totalorder %s16, 0
    %p125 = por %p123, %p124
    %s126 = ssub.s32 %s17, %s29
    %p127 = scmp.eq.s32.totalorder %s126, 0
    %s129 = sadd.s32 %s128, 1
    %s130 = scalar_select %p127, %s128, %s129
    %p133 = pneg %p127
    %p134 = scmp.eq.s32.totalorder %s10, 8
    %p135 = por %p133, %p134
    %p136 = scmp.ne.s32.totalorder %s128, %s131
    %p137 = scmp.eq.s32.totalorder %s10, 0
    %p138 = por %p136, %p137
    %p139 = scmp.ne.s32.totalorder %s128, %s131
    %p140 = scmp.eq.s32.totalorder %s15, 8
    %p141 = por %p139, %p140
    %p142 = scmp.ne.s32.totalorder %s131, %s132
    %p143 = scmp.eq.s32.totalorder %s15, 0
    %p144 = por %p142, %p143
    %p145 = scmp.ne.s32.totalorder %s131, %s132
    %p146 = scmp.eq.s32.totalorder %s16, 8
    %p147 = por %p145, %p146
    %p149 = scmp.ne.s32.totalorder %s132, %s148
    %p150 = scmp.eq.s32.totalorder %s16, 0
    %p151 = por %p149, %p150
    %p152 = scmp.le.s32.totalorder 1, %s10
    %p153 = scmp.lt.s32.totalorder %s10, 10
    %p154 = pnand %p152, %p153
    %p155 = pneg %p154
    // Predicated region
    $region9: #{mixed6a_forward.7} parent=5 // pred_check
      _
    $region10: #{mixed6a_forward.7} parent=5 // pred_check_branch
      %157 = sbr.rel (%p154) target = $region12
    $region11: #{mixed6a_forward.7} parent=5 // pred_region
      %s158 = ssub.s32 %s10, 1
      // Predicated region
      $region13: #{mixed6a_forward.7} parent=11 // pred_check
        %p159 = pneg %p97
      $region14: #{mixed6a_forward.7} parent=11 // pred_check_branch
        %161 = sbr.rel (%p159) target = $region16
      $region15: #{mixed6a_forward.7} parent=11 // pred_region
        _
      $region16: #{mixed6a_forward.7} parent=11 // pred_fallthru
        _
      // Predicated region
      $region17: #{mixed6a_forward.7} parent=11 // pred_check
        %p162 = pneg %p118
      $region18: #{mixed6a_forward.7} parent=11 // pred_check_branch
        %164 = sbr.rel (%p162) target = $region20
      $region19: #{mixed6a_forward.7} parent=11 // pred_region
        _
      $region20: #{mixed6a_forward.7} parent=11 // pred_fallthru
        _
    $region12: #{mixed6a_forward.7} parent=5 // pred_fallthru
      _
    %p165 = scmp.lt.s32.totalorder %s10, 9
    // Predicated region
    $region21: #{mixed6a_forward.7} parent=5 // pred_check
      %p166 = pneg %p165
    $region22: #{mixed6a_forward.7} parent=5 // pred_check_branch
      %168 = sbr.rel (%p166) target = $region24
    $region23: #{mixed6a_forward.7} parent=5 // pred_region
      // Predicated region
      $region25: #{mixed6a_forward.7} parent=23 // pred_check
        %p169 = pneg %p44
      $region26: #{mixed6a_forward.7} parent=23 // pred_check_branch
        %171 = sbr.rel (%p169) target = $region28
      $region27: #{mixed6a_forward.7} parent=23 // pred_region
        %s172 = smul.u32 13, %s17
        %p173 = scmp.lt.s32.totalorder %s18, 8
        %s174 = scalar_select %p173, %s18, 8
        %p175 = scmp.lt.s32.totalorder %s172, 12
        %s176 = scalar_select %p175, %s172, 12
        %s177 = smul.addr %s174, 13
        %s178 = sadd.s32 %s176, %s177
        %s179 = smul.addr %s178, 4
        %s180 = scalar_lea.vmem %s0, %s179
        %s181 = smul.u32 13, %s17
      $region28: #{mixed6a_forward.7} parent=23 // pred_fallthru
        _
      // Predicated region
      $region29: #{mixed6a_forward.7} parent=23 // pred_check
        %p182 = pneg %p70
      $region30: #{mixed6a_forward.7} parent=23 // pred_check_branch
        %184 = sbr.rel (%p182) target = $region32
      $region31: #{mixed6a_forward.7} parent=23 // pred_region
        %p185 = scmp.lt.s32.totalorder %s18, 8
        %s186 = scalar_select %p185, %s18, 8
        %s187 = smul.addr %s186, 12
        %s188 = smul.addr %s187, 4
        %s189 = scalar_lea.vmem %s1, %s188
      $region32: #{mixed6a_forward.7} parent=23 // pred_fallthru
        _
    $region24: #{mixed6a_forward.7} parent=5 // pred_fallthru
      _
    %p190 = scmp.le.s32.totalorder 1, %s10
    %p191 = scmp.lt.s32.totalorder %s10, 10
    %p192 = pnand %p190, %p191
    %p193 = pneg %p192
    // Predicated region
    $region33: #{mixed6a_forward.7} parent=5 // pred_check
      _
    $region34: #{mixed6a_forward.7} parent=5 // pred_check_branch
      %195 = sbr.rel (%p192) target = $region36
    $region35: #{mixed6a_forward.7} parent=5 // pred_region
      %s196 = ssub.s32 %s10, 1
      %s197 = smul.u32 13, %s19
      %p198 = scmp.lt.s32.totalorder %s20, 8
      %s199 = scalar_select %p198, %s20, 8
      %p200 = scmp.lt.s32.totalorder %s197, 12
      %s201 = scalar_select %p200, %s197, 12
      %s202 = smul.addr %s199, 13
      %s203 = sadd.s32 %s201, %s202
      %s204 = smul.addr %s203, 4
      %s205 = scalar_lea.vmem %s0, %s204
      %p206 = pneg %p50
      %p207 = pneg %p47
      %p208 = scmp.lt.s32.totalorder %s20, 8
      %s209 = scalar_select %p208, %s20, 8
      %s210 = smul.addr %s209, 12
      %s211 = smul.addr %s210, 4
      %s212 = scalar_lea.vmem %s1, %s211
      %p213 = pneg %p76
      %p214 = pneg %p73
      %p215 = pneg %p97
      %p216 = pneg %p94
      %p217 = pneg %p118
      %p218 = pneg %p115
      %p219 = pneg %p144
      %p220 = pneg %p141
      %s221 = smul.u32 13, %s19
      %p222 = scmp.lt.s32.totalorder %s221, 12
      %s223 = scalar_select %p222, %s221, 12
      %s224 = smul.addr %s223, 8
      %s225 = scalar_lea.vmem %s4, %s224
      %s226 = smul.u32 13, %s19
      %p227 = scmp.lt.s32.totalorder %s20, 8
      %s228 = scalar_select %p227, %s20, 8
      %p229 = scmp.lt.s32.totalorder %s226, 12
      %s230 = scalar_select %p229, %s226, 12
      %s231 = smul.addr %s228, 13
      %s232 = sadd.s32 %s230, %s231
      %s233 = smul.addr %s232, 4
      %s234 = scalar_lea.vmem %s0, %s233
      %s235 = smul.u32 13, %s19
      %p236 = scmp.lt.s32.totalorder %s20, 8
      %s237 = scalar_select %p236, %s20, 8
      %s238 = smul.addr %s237, 12
      %s239 = smul.addr %s238, 4
      %s240 = scalar_lea.vmem %s1, %s239
      %s241 = smul.u32 13, %s19
      %p242 = scmp.lt.s32.totalorder %s241, 12
      %s243 = scalar_select %p242, %s241, 12
      %s244 = smul.addr %s243, 8
      %s245 = scalar_lea.vmem %s4, %s244
      %s246 = smul.u32 13, %s19
      %p248 = scmp.eq.s32.totalorder %s20, 0
      // Predicated region
      $region37: #{mixed6a_forward.7} parent=35 // pred_check
        %p249 = pneg %p248
      $region38: #{mixed6a_forward.7} parent=35 // pred_check_branch
        %251 = sbr.rel (%p249) target = $region40
      $region39: #{mixed6a_forward.7} parent=35 // pred_region
        %252 = vst [vmem:[#allocation2] sm:$0xff] 0.0
        %253 = vst [vmem:[#allocation2 + $0x8] sm:$0xff] 0.0
        %254 = vst [vmem:[#allocation2 + $0x10] sm:$0xff] 0.0
        %255 = vst [vmem:[#allocation2 + $0x18] sm:$0xff] 0.0
        %256 = vst [vmem:[#allocation2 + $0x20] sm:$0xff] 0.0
        %257 = vst [vmem:[#allocation2 + $0x28] sm:$0xff] 0.0
        %258 = vst [vmem:[#allocation2 + $0x30] sm:$0xff] 0.0
        %259 = vst [vmem:[#allocation2 + $0x38] sm:$0xff] 0.0
        %260 = vst [vmem:[#allocation2 + $0x40] sm:$0xff] 0.0
        %261 = vst [vmem:[#allocation2 + $0x48] sm:$0xff] 0.0
        %262 = vst [vmem:[#allocation2 + $0x50] sm:$0xff] 0.0
        %263 = vst [vmem:[#allocation2 + $0x58] sm:$0xff] 0.0
        %264 = vst [vmem:[#allocation2 + $0x60] sm:$0xff] 0.0
      $region40: #{mixed6a_forward.7} parent=35 // pred_fallthru
        _
      %v265 = vld [vmem:[#allocation2] sm:$0xff]
      %v266 = vld [vmem:[#allocation2 + $0x8] sm:$0xff]
      %v267 = vld [vmem:[#allocation2 + $0x10] sm:$0xff]
      %v268 = vld [vmem:[#allocation2 + $0x18] sm:$0xff]
      %v269 = vld [vmem:[#allocation2 + $0x20] sm:$0xff]
      %v270 = vld [vmem:[#allocation2 + $0x28] sm:$0xff]
      %v271 = vld [vmem:[#allocation2 + $0x30] sm:$0xff]
      %v272 = vld [vmem:[#allocation2 + $0x38] sm:$0xff]
      %v273 = vld [vmem:[#allocation2 + $0x40] sm:$0xff]
      %v274 = vld [vmem:[#allocation2 + $0x48] sm:$0xff]
      %v275 = vld [vmem:[#allocation2 + $0x50] sm:$0xff]
      %v276 = vld [vmem:[#allocation2 + $0x58] sm:$0xff]
      %v277 = vld [vmem:[#allocation2 + $0x60] sm:$0xff]
      %v278 = vld [vmem:[%s234] sm:$0xf]
      %v279 = vld [vmem:[%s234 + $0x4] sm:$0xf]
      %v280 = vld [vmem:[%s234 + $0x8] sm:$0xf]
      %v281 = vld [vmem:[%s234 + $0xc] sm:$0xf]
      %v282 = vld [vmem:[%s234 + $0x10] sm:$0xf]
      %v283 = vld [vmem:[%s234 + $0x14] sm:$0xf]
      %v284 = vld [vmem:[%s234 + $0x18] sm:$0xf]
      %v285 = vld [vmem:[%s234 + $0x1c] sm:$0xf]
      %v286 = vld [vmem:[%s234 + $0x20] sm:$0xf]
      %v287 = vld [vmem:[%s234 + $0x24] sm:$0xf]
      %v288 = vld [vmem:[%s234 + $0x28] sm:$0xf]
      %v289 = vld [vmem:[%s234 + $0x2c] sm:$0xf]
      %v290 = vld [vmem:[%s234 + $0x30] sm:$0xf]
      %v291 = vld [vmem:[%s240] sm:$0xf]
      %v292 = vld [vmem:[%s240 + $0x4] sm:$0xf]
      %v293 = vld [vmem:[%s240 + $0x8] sm:$0xf]
      %v294 = vld [vmem:[%s240 + $0xc] sm:$0xf]
      %v295 = vld [vmem:[%s240 + $0x10] sm:$0xf]
      %v296 = vld [vmem:[%s240 + $0x14] sm:$0xf]
      %v297 = vld [vmem:[%s240 + $0x18] sm:$0xf]
      %v298 = vld [vmem:[%s240 + $0x1c] sm:$0xf]
      %v299 = vld [vmem:[%s240 + $0x20] sm:$0xf]
      %v300 = vld [vmem:[%s240 + $0x24] sm:$0xf]
      %v301 = vld [vmem:[%s240 + $0x28] sm:$0xf]
      %v302 = vld [vmem:[%s240 + $0x2c] sm:$0xf]
      %v316 = vunpack.c.l.b16 %v278
      %v317 = vunpack.c.l.b16 %v279
      %v318 = vunpack.c.l.b16 %v280
      %v319 = vunpack.c.l.b16 %v281
      %v320 = vunpack.c.l.b16 %v282
      %v321 = vunpack.c.l.b16 %v283
      %v322 = vunpack.c.l.b16 %v284
      %v323 = vunpack.c.l.b16 %v285
      %v324 = vunpack.c.l.b16 %v286
      %v325 = vunpack.c.l.b16 %v287
      %v326 = vunpack.c.l.b16 %v288
      %v327 = vunpack.c.l.b16 %v289
      %v328 = vunpack.c.l.b16 %v290
      %v329 = vpack.c.b16 %v317, %v316
      %v330 = vpack.c.b16 %v319, %v318
      %v331 = vpack.c.b16 %v321, %v320
      %v332 = vpack.c.b16 %v323, %v322
      %v333 = vpack.c.b16 %v325, %v324
      %v334 = vpack.c.b16 %v327, %v326
      %v335 = vpack.c.b16 %v328, %v328
      %v348 = vunpack.c.l.b16 %v291
      %v349 = vunpack.c.l.b16 %v292
      %v350 = vunpack.c.l.b16 %v293
      %v351 = vunpack.c.l.b16 %v294
      %v352 = vunpack.c.l.b16 %v295
      %v353 = vunpack.c.l.b16 %v296
      %v354 = vunpack.c.l.b16 %v297
      %v355 = vunpack.c.l.b16 %v298
      %v356 = vunpack.c.l.b16 %v299
      %v357 = vunpack.c.l.b16 %v300
      %v358 = vunpack.c.l.b16 %v301
      %v359 = vunpack.c.l.b16 %v302
      %v360 = vpack.c.b16 %v349, %v348
      %v361 = vpack.c.b16 %v351, %v350
      %v362 = vpack.c.b16 %v353, %v352
      %v363 = vpack.c.b16 %v355, %v354
      %v364 = vpack.c.b16 %v357, %v356
      %v365 = vpack.c.b16 %v359, %v358
      %vm372 = vcmask 785408
      %v374 = vsel %vm372, %v329, 0
      %v377 = vsel %vm372, %v330, 0
      %v380 = vsel %vm372, %v331, 0
      %v383 = vsel %vm372, %v332, 0
      %v386 = vsel %vm372, %v333, 0
      %v389 = vsel %vm372, %v334, 0
      %v392 = vsel %vm372, %v335, 0
      %394 = vmatprep.subr.bf16.mxu0 0
      %395 = vmatpush1.bf16.msra.mxu0 %v360
      %396 = vmatprep.subr.bf16.mxu0 0
      %397 = vmatpush1.bf16.msra.mxu0 %v361
      %398 = vmatprep.subr.bf16.mxu0 0
      %399 = vmatpush1.bf16.msra.mxu0 %v362
      %400 = vmatprep.subr.bf16.mxu0 0
      %401 = vmatpush1.bf16.msra.mxu0 %v363
      %402 = vmatprep.subr.bf16.mxu0 0
      %403 = vmatpush1.bf16.msra.mxu0 %v364
      %404 = vmatprep.subr.bf16.mxu0 0
      %405 = vmatpush1.bf16.msra.mxu0 %v365
      %406 = vmatprep.subr.bf16.mxu0 0
      %407 = vmatpush1.bf16.msra.mxu0 0
      %408 = vmatprep.subr.bf16.mxu0 0
      %409 = vmatpush1.bf16.msra.mxu0 0
      %410 = vmatprep.subr.bf16.mxu0 0
      %411 = vmatpush1.bf16.msra.mxu0 0
      %412 = vmatprep.subr.bf16.mxu0 0
      %413 = vmatpush1.bf16.msra.mxu0 0
      %414 = vmatprep.subr.bf16.mxu0 0
      %415 = vmatpush1.bf16.msra.mxu0 0
      %416 = vmatprep.subr.bf16.mxu0 0
      %417 = vmatpush1.bf16.msra.mxu0 0
      %418 = vmatprep.subr.bf16.mxu0 0
      %419 = vmatpush1.bf16.msra.mxu0 0
      %420 = vmatprep.subr.bf16.mxu0 0
      %421 = vmatpush1.bf16.msra.mxu0 0
      %422 = vmatprep.subr.bf16.mxu0 0
      %423 = vmatpush1.bf16.msra.mxu0 0
      %424 = vmatprep.subr.bf16.mxu0 0
      %425 = vmatpush1.bf16.msra.mxu0 0
      %426 = vmatprep.mubr.bf16.mxu0 0
      %427 = vmatmul.mubr.bf16.gmra.mrb[0].mxu0 %v374
      %v428 = vpop.f32.mrb[0].mxu0
      %v429 = vadd.f32 0.0, %v428
      %v430 = vpop.f32.mrb[0].mxu0
      %v431 = vpop.f32.mrb[0].mxu0
      %v432 = vadd.f32 0.0, %v431
      %v433 = vpop.f32.mrb[0].mxu0
      %434 = vmatprep.mubr.bf16.mxu0 0
      %435 = vmatmul.mubr.bf16.gmra.mrb[0].mxu0 %v377
      %v436 = vpop.f32.mrb[0].mxu0
      %v437 = vadd.f32 0.0, %v436
      %v438 = vpop.f32.mrb[0].mxu0
      %v439 = vpop.f32.mrb[0].mxu0
      %v440 = vadd.f32 0.0, %v439
      %v441 = vpop.f32.mrb[0].mxu0
      %442 = vmatprep.mubr.bf16.mxu0 0
      %443 = vmatmul.mubr.bf16.gmra.mrb[0].mxu0 %v380
      %v444 = vpop.f32.mrb[0].mxu0
      %v445 = vadd.f32 0.0, %v444
      %v446 = vpop.f32.mrb[0].mxu0
      %v447 = vpop.f32.mrb[0].mxu0
      %v448 = vadd.f32 0.0, %v447
      %v449 = vpop.f32.mrb[0].mxu0
      %450 = vmatprep.mubr.bf16.mxu0 0
      %451 = vmatmul.mubr.bf16.gmra.mrb[0].mxu0 %v383
      %v452 = vpop.f32.mrb[0].mxu0
      %v453 = vadd.f32 0.0, %v452
      %v454 = vpop.f32.mrb[0].mxu0
      %v455 = vpop.f32.mrb[0].mxu0
      %v456 = vadd.f32 0.0, %v455
      %v457 = vpop.f32.mrb[0].mxu0
      %458 = vmatprep.mubr.bf16.mxu0 0
      %459 = vmatmul.mubr.bf16.gmra.mrb[0].mxu0 %v386
      %v460 = vpop.f32.mrb[0].mxu0
      %v461 = vadd.f32 0.0, %v460
      %v462 = vpop.f32.mrb[0].mxu0
      %v463 = vpop.f32.mrb[0].mxu0
      %v464 = vadd.f32 0.0, %v463
      %v465 = vpop.f32.mrb[0].mxu0
      %466 = vmatprep.mubr.bf16.mxu0 0
      %467 = vmatmul.mubr.bf16.gmra.mrb[0].mxu0 %v389
      %v468 = vpop.f32.mrb[0].mxu0
      %v469 = vadd.f32 0.0, %v468
      %v470 = vpop.f32.mrb[0].mxu0
      %v471 = vpop.f32.mrb[0].mxu0
      %v472 = vadd.f32 0.0, %v471
      %v473 = vpop.f32.mrb[0].mxu0
      %474 = vmatprep.mubr.bf16.mxu0 0
      %475 = vmatmul.mubr.bf16.gmra.mrb[0].mxu0 %v392
      %v476 = vpop.f32.mrb[0].mxu0
      %v477 = vadd.f32 0.0, %v476
      %v478 = vpop.f32.mrb[0].mxu0
      %v479 = vpop.f32.mrb[0].mxu0
      %v480 = vpop.f32.mrb[0].mxu0
      %481 = vdwg.mxu0
      %v482 = vadd.f32 %v265, %v429
      %v483 = vadd.f32 %v266, %v432
      %v484 = vadd.f32 %v267, %v437
      %v485 = vadd.f32 %v268, %v440
      %v486 = vadd.f32 %v269, %v445
      %v487 = vadd.f32 %v270, %v448
      %v488 = vadd.f32 %v271, %v453
      %v489 = vadd.f32 %v272, %v456
      %v490 = vadd.f32 %v273, %v461
      %v491 = vadd.f32 %v274, %v464
      %v492 = vadd.f32 %v275, %v469
      %v493 = vadd.f32 %v276, %v472
      %v494 = vadd.f32 %v277, %v477
      %495 = vst [vmem:[#allocation2] sm:$0xff] %v482
      %496 = vst [vmem:[#allocation2 + $0x8] sm:$0xff] %v483
      %497 = vst [vmem:[#allocation2 + $0x10] sm:$0xff] %v484
      %498 = vst [vmem:[#allocation2 + $0x18] sm:$0xff] %v485
      %499 = vst [vmem:[#allocation2 + $0x20] sm:$0xff] %v486
      %500 = vst [vmem:[#allocation2 + $0x28] sm:$0xff] %v487
      %501 = vst [vmem:[#allocation2 + $0x30] sm:$0xff] %v488
      %502 = vst [vmem:[#allocation2 + $0x38] sm:$0xff] %v489
      %503 = vst [vmem:[#allocation2 + $0x40] sm:$0xff] %v490
      %504 = vst [vmem:[#allocation2 + $0x48] sm:$0xff] %v491
      %505 = vst [vmem:[#allocation2 + $0x50] sm:$0xff] %v492
      %506 = vst [vmem:[#allocation2 + $0x58] sm:$0xff] %v493
      %507 = vst [vmem:[#allocation2 + $0x60] sm:$0xff] %v494
      %p508 = scmp.eq.s32.totalorder %s20, 8
      // Predicated region
      $region41: #{mixed6a_forward.7} parent=35 // pred_check
        %p509 = pneg %p508
      $region42: #{mixed6a_forward.7} parent=35 // pred_check_branch
        %511 = sbr.rel (%p509) target = $region44
      $region43: #{mixed6a_forward.7} parent=35 // pred_region
        %v512 = vld [vmem:[#allocation2] sm:$0xff]
        %v513 = vld [vmem:[#allocation2 + $0x8] sm:$0xff]
        %v514 = vld [vmem:[#allocation2 + $0x10] sm:$0xff]
        %v515 = vld [vmem:[#allocation2 + $0x18] sm:$0xff]
        %v516 = vld [vmem:[#allocation2 + $0x20] sm:$0xff]
        %v517 = vld [vmem:[#allocation2 + $0x28] sm:$0xff]
        %v518 = vld [vmem:[#allocation2 + $0x30] sm:$0xff]
        %v519 = vld [vmem:[#allocation2 + $0x38] sm:$0xff]
        %v520 = vld [vmem:[#allocation2 + $0x40] sm:$0xff]
        %v521 = vld [vmem:[#allocation2 + $0x48] sm:$0xff]
        %v522 = vld [vmem:[#allocation2 + $0x50] sm:$0xff]
        %v523 = vld [vmem:[#allocation2 + $0x58] sm:$0xff]
        %v524 = vld [vmem:[#allocation2 + $0x60] sm:$0xff]
        %v525 = vld [vmem:[%s2] sm:$0x1]
        %v527 = vlaneseq
        %v528 = vshrl.u32 %v527, 7
        %v529 = vsub.s32 0, %v528
        %v530 = vrot.slane %v525, %v529
        %v532 = vmul.f32 %v512, %v530
        %v533 = vmul.f32 %v513, %v530
        %v534 = vmul.f32 %v514, %v530
        %v535 = vmul.f32 %v515, %v530
        %v536 = vmul.f32 %v516, %v530
        %v537 = vmul.f32 %v517, %v530
        %v538 = vmul.f32 %v518, %v530
        %v539 = vmul.f32 %v519, %v530
        %v540 = vmul.f32 %v520, %v530
        %v541 = vmul.f32 %v521, %v530
        %v542 = vmul.f32 %v522, %v530
        %v543 = vmul.f32 %v523, %v530
        %v544 = vmul.f32 %v524, %v530
        %v545 = vld [vmem:[%s3] sm:$0x1]
        %v547 = vlaneseq
        %v548 = vshrl.u32 %v547, 7
        %v549 = vsub.s32 0, %v548
        %v550 = vrot.slane %v545, %v549
        %v552 = vadd.f32 %v532, %v550
        %v553 = vadd.f32 %v533, %v550
        %v554 = vadd.f32 %v534, %v550
        %v555 = vadd.f32 %v535, %v550
        %v556 = vadd.f32 %v536, %v550
        %v557 = vadd.f32 %v537, %v550
        %v558 = vadd.f32 %v538, %v550
        %v559 = vadd.f32 %v539, %v550
        %v560 = vadd.f32 %v540, %v550
        %v561 = vadd.f32 %v541, %v550
        %v562 = vadd.f32 %v542, %v550
        %v563 = vadd.f32 %v543, %v550
        %v564 = vadd.f32 %v544, %v550
        %v565 = vmax.f32 %v552, 0.0
        %v566 = vmax.f32 %v553, 0.0
        %v567 = vmax.f32 %v554, 0.0
        %v568 = vmax.f32 %v555, 0.0
        %v569 = vmax.f32 %v556, 0.0
        %v570 = vmax.f32 %v557, 0.0
        %v571 = vmax.f32 %v558, 0.0
        %v572 = vmax.f32 %v559, 0.0
        %v573 = vmax.f32 %v560, 0.0
        %v574 = vmax.f32 %v561, 0.0
        %v575 = vmax.f32 %v562, 0.0
        %v576 = vmax.f32 %v563, 0.0
        %v577 = vmax.f32 %v564, 0.0
        %578 = vst [vmem:[%s245] sm:$0xff] %v565
        %579 = vst [vmem:[%s245 + $0x8] sm:$0xff] %v566
        %580 = vst [vmem:[%s245 + $0x10] sm:$0xff] %v567
        %581 = vst [vmem:[%s245 + $0x18] sm:$0xff] %v568
        %582 = vst [vmem:[%s245 + $0x20] sm:$0xff] %v569
        %583 = vst [vmem:[%s245 + $0x28] sm:$0xff] %v570
        %584 = vst [vmem:[%s245 + $0x30] sm:$0xff] %v571
        %585 = vst [vmem:[%s245 + $0x38] sm:$0xff] %v572
        %586 = vst [vmem:[%s245 + $0x40] sm:$0xff] %v573
        %587 = vst [vmem:[%s245 + $0x48] sm:$0xff] %v574
        %588 = vst [vmem:[%s245 + $0x50] sm:$0xff] %v575
        %589 = vst [vmem:[%s245 + $0x58] sm:$0xff] %v576
        %590 = vst [vmem:[%s245 + $0x60] sm:$0xff] %v577
      $region44: #{mixed6a_forward.7} parent=35 // pred_fallthru
        _
      %s591 = smul.u32 13, %s19
      %p592 = scmp.lt.s32.totalorder %s591, 12
      %s593 = scalar_select %p592, %s591, 12
      %s594 = smul.addr %s593, 8
      %s595 = scalar_lea.vmem %s4, %s594
      // Predicated region
      $region45: #{mixed6a_forward.7} parent=35 // pred_check
        %p596 = pneg %p141
      $region46: #{mixed6a_forward.7} parent=35 // pred_check_branch
        %598 = sbr.rel (%p596) target = $region48
      $region47: #{mixed6a_forward.7} parent=35 // pred_region
        %s599 = smul.u32 13, %s19
      $region48: #{mixed6a_forward.7} parent=35 // pred_fallthru
        _
      // Predicated region
      $region49: #{mixed6a_forward.7} parent=35 // pred_check
        %p600 = pneg %p141
      $region50: #{mixed6a_forward.7} parent=35 // pred_check_branch
        %602 = sbr.rel (%p600) target = $region52
      $region51: #{mixed6a_forward.7} parent=35 // pred_region
        %s603 = smul.u32 13, %s19
        %p604 = scmp.lt.s32.totalorder %s603, 12
        %s605 = scalar_select %p604, %s603, 12
        %s606 = smul.addr %s605, 8
        %s607 = scalar_lea.vmem %s4, %s606
      $region52: #{mixed6a_forward.7} parent=35 // pred_fallthru
        _
    $region36: #{mixed6a_forward.7} parent=5 // pred_fallthru
      _
    %p608 = scmp.le.s32.totalorder 2, %s10
    // Predicated region
    $region53: #{mixed6a_forward.7} parent=5 // pred_check
      %p609 = pneg %p608
    $region54: #{mixed6a_forward.7} parent=5 // pred_check_branch
      %611 = sbr.rel (%p609) target = $region56
    $region55: #{mixed6a_forward.7} parent=5 // pred_region
      %s612 = ssub.s32 %s10, 2
    $region56: #{mixed6a_forward.7} parent=5 // pred_fallthru
      _
  $region6: #{mixed6a_forward.7} parent=0 // loop_footer
    %s14 = sadd.s32 1, %s10
  $region7: #{mixed6a_forward.7} parent=0 // loop_footer_branch
    %9 = sbr.rel target = $region3
  $region8: #{mixed6a_forward.7} parent=0 // loop_exit
    _

// kernel: mixed6a_forward.4
$region0: #{mixed6a_forward.4}
  #allocation0 [shape = 'u32[]', space=smem, size = 0x4, offset = 0x4, fixed_abs, tag = 'smem constant byte address 0x4 - core index']
  #allocation1 [shape = 'u32[144,128]{1,0:T(1,128)}', space=vmem, size = 0x12000, scoped, tag = 'internal scratch']
  #allocation2 [shape = 'f32[104,128]{1,0:T(8,128)}', space=vmem, size = 0xd000, scoped, tag = 'scratch operand']
  #allocation3 [shape = 'f32[104,4]{1,0:T(8,128)}', space=vmem, size = 0xd000, scoped, tag = 'scratch operand']
  %s0 = inlined_call_operand.vmem [shape: bf16[9,104,4], index: 0, kind: input, shape index: {}]
  %s1 = inlined_call_operand.vmem [shape: bf16[9,4,128], index: 1, kind: input, shape index: {}]
  %s2 = inlined_call_operand.vmem [shape: f32[1,128], index: 2, kind: input, shape index: {}]
  %s3 = inlined_call_operand.vmem [shape: f32[1,128], index: 3, kind: input, shape index: {}]
  %s4 = inlined_call_operand.vmem [shape: f32[104,128], index: 4, kind: output, shape index: {0}]
  %s5 = inlined_call_operand.vmem [shape: f32[104,4], index: 5, kind: output, shape index: {1}]
  %6 = xla_tuple %s4, %s5
  %s7 = sld [smem:[#allocation0]]
  $region65: #{mixed6a_forward.4} parent=0
    _
  %s9 = ssub.s32 1, %s7
  %s10 = scalar_select 0, %s9, %s7
  loop: start=0, step=1, limit=11
  $region2: #{mixed6a_forward.4} parent=0 // loop_pre_header
    _
  $region3: #{mixed6a_forward.4} parent=0 // loop_header
    %s12 = sphi 0, %s16
    %p13 = scmp.ge.s32.totalorder %s12, 11
    %s19 = sphi 0, %s31
    %s20 = sphi 0, %s27
    %s21 = sphi 0, %s19
    %s22 = sphi 0, %s20
    %s23 = sphi 0, %s21
    %s24 = sphi 0, %s22
    %s36 = sphi 0, %s38
    %s39 = sphi 0, %s36
    %s40 = sphi 0, %s39
    %s56 = sphi 0, %s40
    %s62 = sphi 0, %s64
    %s65 = sphi 0, %s62
    %s66 = sphi 0, %s65
    %s82 = sphi 0, %s66
    %s86 = sphi 0, %s86
    %s88 = sphi 0, %s86
    %s89 = sphi 0, %s88
    %s103 = sphi 0, %s89
    %s107 = sphi 0, %s107
    %s109 = sphi 0, %s107
    %s110 = sphi 0, %s109
    %s124 = sphi 0, %s110
    %s130 = sphi 0, %s132
    %s133 = sphi 0, %s130
    %s134 = sphi 0, %s133
    %s150 = sphi 0, %s134
    %s156 = sphi 0, %s158
    %s159 = sphi 0, %s156
    %s160 = sphi 0, %s159
    %s176 = sphi 0, %s160
  $region4: #{mixed6a_forward.4} parent=0 // loop_header_branch
    %15 = sbr.rel (%p13) target = $region8
  $region5: #{mixed6a_forward.4} parent=0 // loop_body
    %s17 = ssub.s32 %s12, 1
    %s18 = ssub.s32 %s12, 2
    %s25 = sadd.s32 1, %s20
    %p26 = scmp.ge.s32.totalorder %s25, 9
    %s27 = scalar_select %p26, 0, %s25
    %s28 = sadd.s32 1, %s19
    %s29 = scalar_select %p26, %s28, %s19
    %p30 = scmp.ge.s32.totalorder %s29, 1
    %s31 = scalar_select %p30, 0, %s29
    %s32 = ssub.s32 %s20, %s27
    %s33 = ssub.s32 %s19, %s31
    %s34 = sor.u32 %s32, %s33
    %p35 = scmp.eq.s32.totalorder %s34, 0
    %s37 = sadd.s32 %s36, 1
    %s38 = scalar_select %p35, %s36, %s37
    %p41 = pneg %p35
    %p42 = scmp.eq.s32.totalorder %s12, 8
    %p43 = por %p41, %p42
    %p44 = scmp.ne.s32.totalorder %s36, %s39
    %p45 = scmp.eq.s32.totalorder %s12, 0
    %p46 = por %p44, %p45
    %p47 = scmp.ne.s32.totalorder %s36, %s39
    %p48 = scmp.eq.s32.totalorder %s17, 8
    %p49 = por %p47, %p48
    %p50 = scmp.ne.s32.totalorder %s39, %s40
    %p51 = scmp.eq.s32.totalorder %s17, 0
    %p52 = por %p50, %p51
    %p53 = scmp.ne.s32.totalorder %s39, %s40
    %p54 = scmp.eq.s32.totalorder %s18, 8
    %p55 = por %p53, %p54
    %p57 = scmp.ne.s32.totalorder %s40, %s56
    %p58 = scmp.eq.s32.totalorder %s18, 0
    %p59 = por %p57, %p58
    %s60 = ssub.s32 %s20, %s27
    %p61 = scmp.eq.s32.totalorder %s60, 0
    %s63 = sadd.s32 %s62, 1
    %s64 = scalar_select %p61, %s62, %s63
    %p67 = pneg %p61
    %p68 = scmp.eq.s32.totalorder %s12, 8
    %p69 = por %p67, %p68
    %p70 = scmp.ne.s32.totalorder %s62, %s65
    %p71 = scmp.eq.s32.totalorder %s12, 0
    %p72 = por %p70, %p71
    %p73 = scmp.ne.s32.totalorder %s62, %s65
    %p74 = scmp.eq.s32.totalorder %s17, 8
    %p75 = por %p73, %p74
    %p76 = scmp.ne.s32.totalorder %s65, %s66
    %p77 = scmp.eq.s32.totalorder %s17, 0
    %p78 = por %p76, %p77
    %p79 = scmp.ne.s32.totalorder %s65, %s66
    %p80 = scmp.eq.s32.totalorder %s18, 8
    %p81 = por %p79, %p80
    %p83 = scmp.ne.s32.totalorder %s66, %s82
    %p84 = scmp.eq.s32.totalorder %s18, 0
    %p85 = por %p83, %p84
    %s87 = sadd.s32 %s86, 1
    %p90 = scmp.eq.s32.totalorder %s12, 8
    %p91 = scmp.ne.s32.totalorder %s86, %s88
    %p92 = scmp.eq.s32.totalorder %s12, 0
    %p93 = por %p91, %p92
    %p94 = scmp.ne.s32.totalorder %s86, %s88
    %p95 = scmp.eq.s32.totalorder %s17, 8
    %p96 = por %p94, %p95
    %p97 = scmp.ne.s32.totalorder %s88, %s89
    %p98 = scmp.eq.s32.totalorder %s17, 0
    %p99 = por %p97, %p98
    %p100 = scmp.ne.s32.totalorder %s88, %s89
    %p101 = scmp.eq.s32.totalorder %s18, 8
    %p102 = por %p100, %p101
    %p104 = scmp.ne.s32.totalorder %s89, %s103
    %p105 = scmp.eq.s32.totalorder %s18, 0
    %p106 = por %p104, %p105
    %s108 = sadd.s32 %s107, 1
    %p111 = scmp.eq.s32.totalorder %s12, 8
    %p112 = scmp.ne.s32.totalorder %s107, %s109
    %p113 = scmp.eq.s32.totalorder %s12, 0
    %p114 = por %p112, %p113
    %p115 = scmp.ne.s32.totalorder %s107, %s109
    %p116 = scmp.eq.s32.totalorder %s17, 8
    %p117 = por %p115, %p116
    %p118 = scmp.ne.s32.totalorder %s109, %s110
    %p119 = scmp.eq.s32.totalorder %s17, 0
    %p120 = por %p118, %p119
    %p121 = scmp.ne.s32.totalorder %s109, %s110
    %p122 = scmp.eq.s32.totalorder %s18, 8
    %p123 = por %p121, %p122
    %p125 = scmp.ne.s32.totalorder %s110, %s124
    %p126 = scmp.eq.s32.totalorder %s18, 0
    %p127 = por %p125, %p126
    %s128 = ssub.s32 %s19, %s31
    %p129 = scmp.eq.s32.totalorder %s128, 0
    %s131 = sadd.s32 %s130, 1
    %s132 = scalar_select %p129, %s130, %s131
    %p135 = pneg %p129
    %p136 = scmp.eq.s32.totalorder %s12, 8
    %p137 = por %p135, %p136
    %p138 = scmp.ne.s32.totalorder %s130, %s133
    %p139 = scmp.eq.s32.totalorder %s12, 0
    %p140 = por %p138, %p139
    %p141 = scmp.ne.s32.totalorder %s130, %s133
    %p142 = scmp.eq.s32.totalorder %s17, 8
    %p143 = por %p141, %p142
    %p144 = scmp.ne.s32.totalorder %s133, %s134
    %p145 = scmp.eq.s32.totalorder %s17, 0
    %p146 = por %p144, %p145
    %p147 = scmp.ne.s32.totalorder %s133, %s134
    %p148 = scmp.eq.s32.totalorder %s18, 8
    %p149 = por %p147, %p148
    %p151 = scmp.ne.s32.totalorder %s134, %s150
    %p152 = scmp.eq.s32.totalorder %s18, 0
    %p153 = por %p151, %p152
    %s154 = ssub.s32 %s19, %s31
    %p155 = scmp.eq.s32.totalorder %s154, 0
    %s157 = sadd.s32 %s156, 1
    %s158 = scalar_select %p155, %s156, %s157
    %p161 = pneg %p155
    %p162 = scmp.eq.s32.totalorder %s12, 8
    %p163 = por %p161, %p162
    %p164 = scmp.ne.s32.totalorder %s156, %s159
    %p165 = scmp.eq.s32.totalorder %s12, 0
    %p166 = por %p164, %p165
    %p167 = scmp.ne.s32.totalorder %s156, %s159
    %p168 = scmp.eq.s32.totalorder %s17, 8
    %p169 = por %p167, %p168
    %p170 = scmp.ne.s32.totalorder %s159, %s160
    %p171 = scmp.eq.s32.totalorder %s17, 0
    %p172 = por %p170, %p171
    %p173 = scmp.ne.s32.totalorder %s159, %s160
    %p174 = scmp.eq.s32.totalorder %s18, 8
    %p175 = por %p173, %p174
    %p177 = scmp.ne.s32.totalorder %s160, %s176
    %p178 = scmp.eq.s32.totalorder %s18, 0
    %p179 = por %p177, %p178
    %p180 = scmp.le.s32.totalorder 1, %s12
    %p181 = scmp.lt.s32.totalorder %s12, 10
    %p182 = pnand %p180, %p181
    %p183 = pneg %p182
    // Predicated region
    $region9: #{mixed6a_forward.4} parent=5 // pred_check
      _
    $region10: #{mixed6a_forward.4} parent=5 // pred_check_branch
      %185 = sbr.rel (%p182) target = $region12
    $region11: #{mixed6a_forward.4} parent=5 // pred_region
      %s186 = ssub.s32 %s12, 1
      // Predicated region
      $region13: #{mixed6a_forward.4} parent=11 // pred_check
        %p187 = pneg %p99
      $region14: #{mixed6a_forward.4} parent=11 // pred_check_branch
        %189 = sbr.rel (%p187) target = $region16
      $region15: #{mixed6a_forward.4} parent=11 // pred_region
        _
      $region16: #{mixed6a_forward.4} parent=11 // pred_fallthru
        _
      // Predicated region
      $region17: #{mixed6a_forward.4} parent=11 // pred_check
        %p190 = pneg %p120
      $region18: #{mixed6a_forward.4} parent=11 // pred_check_branch
        %192 = sbr.rel (%p190) target = $region20
      $region19: #{mixed6a_forward.4} parent=11 // pred_region
        _
      $region20: #{mixed6a_forward.4} parent=11 // pred_fallthru
        _
    $region12: #{mixed6a_forward.4} parent=5 // pred_fallthru
      _
    %p193 = scmp.lt.s32.totalorder %s12, 9
    // Predicated region
    $region21: #{mixed6a_forward.4} parent=5 // pred_check
      %p194 = pneg %p193
    $region22: #{mixed6a_forward.4} parent=5 // pred_check_branch
      %196 = sbr.rel (%p194) target = $region24
    $region23: #{mixed6a_forward.4} parent=5 // pred_region
      // Predicated region
      $region25: #{mixed6a_forward.4} parent=23 // pred_check
        %p197 = pneg %p46
      $region26: #{mixed6a_forward.4} parent=23 // pred_check_branch
        %199 = sbr.rel (%p197) target = $region28
      $region27: #{mixed6a_forward.4} parent=23 // pred_region
        %s200 = smul.u32 13, %s19
        %p201 = scmp.lt.s32.totalorder %s20, 8
        %s202 = scalar_select %p201, %s20, 8
        %p203 = scmp.lt.s32.totalorder %s200, 12
        %s204 = scalar_select %p203, %s200, 12
        %s205 = smul.addr %s202, 13
        %s206 = sadd.s32 %s204, %s205
        %s207 = smul.addr %s206, 4
        %s208 = scalar_lea.vmem %s0, %s207
        %s209 = smul.u32 13, %s19
      $region28: #{mixed6a_forward.4} parent=23 // pred_fallthru
        _
      // Predicated region
      $region29: #{mixed6a_forward.4} parent=23 // pred_check
        %p210 = pneg %p72
      $region30: #{mixed6a_forward.4} parent=23 // pred_check_branch
        %212 = sbr.rel (%p210) target = $region32
      $region31: #{mixed6a_forward.4} parent=23 // pred_region
        %p213 = scmp.lt.s32.totalorder %s20, 8
        %s214 = scalar_select %p213, %s20, 8
        %s215 = smul.addr %s214, 2
        %s216 = scalar_lea.vmem %s1, %s215
      $region32: #{mixed6a_forward.4} parent=23 // pred_fallthru
        _
    $region24: #{mixed6a_forward.4} parent=5 // pred_fallthru
      _
    %p217 = scmp.le.s32.totalorder 1, %s12
    %p218 = scmp.lt.s32.totalorder %s12, 10
    %p219 = pnand %p217, %p218
    %p220 = pneg %p219
    // Predicated region
    $region33: #{mixed6a_forward.4} parent=5 // pred_check
      _
    $region34: #{mixed6a_forward.4} parent=5 // pred_check_branch
      %222 = sbr.rel (%p219) target = $region36
    $region35: #{mixed6a_forward.4} parent=5 // pred_region
      %s223 = ssub.s32 %s12, 1
      %s224 = smul.u32 13, %s21
      %p225 = scmp.lt.s32.totalorder %s22, 8
      %s226 = scalar_select %p225, %s22, 8
      %p227 = scmp.lt.s32.totalorder %s224, 12
      %s228 = scalar_select %p227, %s224, 12
      %s229 = smul.addr %s226, 13
      %s230 = sadd.s32 %s228, %s229
      %s231 = smul.addr %s230, 4
      %s232 = scalar_lea.vmem %s0, %s231
      %p233 = pneg %p52
      %p234 = pneg %p49
      %p235 = scmp.lt.s32.totalorder %s22, 8
      %s236 = scalar_select %p235, %s22, 8
      %s237 = smul.addr %s236, 2
      %s238 = scalar_lea.vmem %s1, %s237
      %p239 = pneg %p78
      %p240 = pneg %p75
      %p241 = pneg %p99
      %p242 = pneg %p96
      %p243 = pneg %p120
      %p244 = pneg %p117
      %p245 = pneg %p146
      %p246 = pneg %p143
      %s247 = smul.u32 13, %s21
      %p248 = scmp.lt.s32.totalorder %s247, 12
      %s249 = scalar_select %p248, %s247, 12
      %s250 = smul.addr %s249, 8
      %s251 = scalar_lea.vmem %s4, %s250
      %p252 = pneg %p172
      %p253 = pneg %p169
      %s254 = smul.u32 13, %s21
      %p255 = scmp.lt.s32.totalorder %s254, 12
      %s256 = scalar_select %p255, %s254, 12
      %s257 = smul.addr %s256, 8
      %s258 = scalar_lea.vmem %s5, %s257
      %s259 = smul.u32 13, %s21
      %p260 = scmp.lt.s32.totalorder %s22, 8
      %s261 = scalar_select %p260, %s22, 8
      %p262 = scmp.lt.s32.totalorder %s259, 12
      %s263 = scalar_select %p262, %s259, 12
      %s264 = smul.addr %s261, 13
      %s265 = sadd.s32 %s263, %s264
      %s266 = smul.addr %s265, 4
      %s267 = scalar_lea.vmem %s0, %s266
      %s268 = smul.u32 13, %s21
      %p269 = scmp.lt.s32.totalorder %s22, 8
      %s270 = scalar_select %p269, %s22, 8
      %s271 = smul.addr %s270, 2
      %s272 = scalar_lea.vmem %s1, %s271
      %s273 = smul.u32 13, %s21
      %p274 = scmp.lt.s32.totalorder %s273, 12
      %s275 = scalar_select %p274, %s273, 12
      %s276 = smul.addr %s275, 8
      %s277 = scalar_lea.vmem %s4, %s276
      %s278 = smul.u32 13, %s21
      %s279 = smul.u32 13, %s21
      %p280 = scmp.lt.s32.totalorder %s279, 12
      %s281 = scalar_select %p280, %s279, 12
      %s282 = smul.addr %s281, 8
      %s283 = scalar_lea.vmem %s5, %s282
      %s284 = smul.u32 13, %s21
      %p286 = scmp.eq.s32.totalorder %s22, 0
      // Predicated region
      $region37: #{mixed6a_forward.4} parent=35 // pred_check
        %p287 = pneg %p286
      $region38: #{mixed6a_forward.4} parent=35 // pred_check_branch
        %289 = sbr.rel (%p287) target = $region40
      $region39: #{mixed6a_forward.4} parent=35 // pred_region
        %290 = vst [vmem:[#allocation2] sm:$0xff] 0.0
        %291 = vst [vmem:[#allocation2 + $0x8] sm:$0xff] 0.0
        %292 = vst [vmem:[#allocation2 + $0x10] sm:$0xff] 0.0
        %293 = vst [vmem:[#allocation2 + $0x18] sm:$0xff] 0.0
        %294 = vst [vmem:[#allocation2 + $0x20] sm:$0xff] 0.0
        %295 = vst [vmem:[#allocation2 + $0x28] sm:$0xff] 0.0
        %296 = vst [vmem:[#allocation2 + $0x30] sm:$0xff] 0.0
        %297 = vst [vmem:[#allocation2 + $0x38] sm:$0xff] 0.0
        %298 = vst [vmem:[#allocation2 + $0x40] sm:$0xff] 0.0
        %299 = vst [vmem:[#allocation2 + $0x48] sm:$0xff] 0.0
        %300 = vst [vmem:[#allocation2 + $0x50] sm:$0xff] 0.0
        %301 = vst [vmem:[#allocation2 + $0x58] sm:$0xff] 0.0
        %302 = vst [vmem:[#allocation2 + $0x60] sm:$0xff] 0.0
        %vm303 = vcmask 31744
        %304 = vst.msk [vmem:[#allocation3] sm:$0xff] %vm303, -inf
        %305 = vst.msk [vmem:[#allocation3 + $0x8] sm:$0xff] %vm303, -inf
        %306 = vst.msk [vmem:[#allocation3 + $0x10] sm:$0xff] %vm303, -inf
        %307 = vst.msk [vmem:[#allocation3 + $0x18] sm:$0xff] %vm303, -inf
        %308 = vst.msk [vmem:[#allocation3 + $0x20] sm:$0xff] %vm303, -inf
        %309 = vst.msk [vmem:[#allocation3 + $0x28] sm:$0xff] %vm303, -inf
        %310 = vst.msk [vmem:[#allocation3 + $0x30] sm:$0xff] %vm303, -inf
        %311 = vst.msk [vmem:[#allocation3 + $0x38] sm:$0xff] %vm303, -inf
        %312 = vst.msk [vmem:[#allocation3 + $0x40] sm:$0xff] %vm303, -inf
        %313 = vst.msk [vmem:[#allocation3 + $0x48] sm:$0xff] %vm303, -inf
        %314 = vst.msk [vmem:[#allocation3 + $0x50] sm:$0xff] %vm303, -inf
        %315 = vst.msk [vmem:[#allocation3 + $0x58] sm:$0xff] %vm303, -inf
        %316 = vst.msk [vmem:[#allocation3 + $0x60] sm:$0xff] %vm303, -inf
      $region40: #{mixed6a_forward.4} parent=35 // pred_fallthru
        _
      %v317 = vld [vmem:[%s267] sm:$0xf]
      %v318 = vld [vmem:[%s267 + $0x4] sm:$0xf]
      %v319 = vld [vmem:[%s267 + $0x8] sm:$0xf]
      %v320 = vld [vmem:[%s267 + $0xc] sm:$0xf]
      %v321 = vld [vmem:[%s267 + $0x10] sm:$0xf]
      %v322 = vld [vmem:[%s267 + $0x14] sm:$0xf]
      %v323 = vld [vmem:[%s267 + $0x18] sm:$0xf]
      %v324 = vld [vmem:[%s267 + $0x1c] sm:$0xf]
      %v325 = vld [vmem:[%s267 + $0x20] sm:$0xf]
      %v326 = vld [vmem:[%s267 + $0x24] sm:$0xf]
      %v327 = vld [vmem:[%s267 + $0x28] sm:$0xf]
      %v328 = vld [vmem:[%s267 + $0x2c] sm:$0xf]
      %v329 = vld [vmem:[%s267 + $0x30] sm:$0xf]
      %v330 = vld [vmem:[#allocation2] sm:$0xff]
      %v331 = vld [vmem:[#allocation2 + $0x8] sm:$0xff]
      %v332 = vld [vmem:[#allocation2 + $0x10] sm:$0xff]
      %v333 = vld [vmem:[#allocation2 + $0x18] sm:$0xff]
      %v334 = vld [vmem:[#allocation2 + $0x20] sm:$0xff]
      %v335 = vld [vmem:[#allocation2 + $0x28] sm:$0xff]
      %v336 = vld [vmem:[#allocation2 + $0x30] sm:$0xff]
      %v337 = vld [vmem:[#allocation2 + $0x38] sm:$0xff]
      %v338 = vld [vmem:[#allocation2 + $0x40] sm:$0xff]
      %v339 = vld [vmem:[#allocation2 + $0x48] sm:$0xff]
      %v340 = vld [vmem:[#allocation2 + $0x50] sm:$0xff]
      %v341 = vld [vmem:[#allocation2 + $0x58] sm:$0xff]
      %v342 = vld [vmem:[#allocation2 + $0x60] sm:$0xff]
      %v343 = vld [vmem:[%s272] sm:$0x3]
      %v357 = vunpack.c.l.b16 %v317
      %v358 = vunpack.c.l.b16 %v318
      %v359 = vunpack.c.l.b16 %v319
      %v360 = vunpack.c.l.b16 %v320
      %v361 = vunpack.c.l.b16 %v321
      %v362 = vunpack.c.l.b16 %v322
      %v363 = vunpack.c.l.b16 %v323
      %v364 = vunpack.c.l.b16 %v324
      %v365 = vunpack.c.l.b16 %v325
      %v366 = vunpack.c.l.b16 %v326
      %v367 = vunpack.c.l.b16 %v327
      %v368 = vunpack.c.l.b16 %v328
      %v369 = vunpack.c.l.b16 %v329
      %v370 = vpack.c.b16 %v358, %v357
      %v371 = vpack.c.b16 %v360, %v359
      %v372 = vpack.c.b16 %v362, %v361
      %v373 = vpack.c.b16 %v364, %v363
      %v374 = vpack.c.b16 %v366, %v365
      %v375 = vpack.c.b16 %v368, %v367
      %v376 = vpack.c.b16 %v369, %v369
      %vm377 = vcmask 31744
      %v379 = vsel %vm377, %v370, 0
      %v382 = vsel %vm377, %v371, 0
      %v385 = vsel %vm377, %v372, 0
      %v388 = vsel %vm377, %v373, 0
      %v391 = vsel %vm377, %v374, 0
      %v394 = vsel %vm377, %v375, 0
      %v397 = vsel %vm377, %v376, 0
      %vm399 = vcmask 1041408
      %v401 = vsel %vm399, %v343, 0
      %403 = vmatprep.subr.bf16.mxu0 0
      %404 = vmatpush1.bf16.msra.mxu0 %v401
      %405 = vmatprep.subr.bf16.mxu0 0
      %406 = vmatpush1.bf16.msra.mxu0 0
      %407 = vmatprep.subr.bf16.mxu0 0
      %408 = vmatpush1.bf16.msra.mxu0 0
      %409 = vmatprep.subr.bf16.mxu0 0
      %410 = vmatpush1.bf16.msra.mxu0 0
      %411 = vmatprep.subr.bf16.mxu0 0
      %412 = vmatpush1.bf16.msra.mxu0 0
      %413 = vmatprep.subr.bf16.mxu0 0
      %414 = vmatpush1.bf16.msra.mxu0 0
      %415 = vmatprep.subr.bf16.mxu0 0
      %416 = vmatpush1.bf16.msra.mxu0 0
      %417 = vmatprep.subr.bf16.mxu0 0
      %418 = vmatpush1.bf16.msra.mxu0 0
      %419 = vmatprep.subr.bf16.mxu0 0
      %420 = vmatpush1.bf16.msra.mxu0 0
      %421 = vmatprep.subr.bf16.mxu0 0
      %422 = vmatpush1.bf16.msra.mxu0 0
      %423 = vmatprep.subr.bf16.mxu0 0
      %424 = vmatpush1.bf16.msra.mxu0 0
      %425 = vmatprep.subr.bf16.mxu0 0
      %426 = vmatpush1.bf16.msra.mxu0 0
      %427 = vmatprep.subr.bf16.mxu0 0
      %428 = vmatpush1.bf16.msra.mxu0 0
      %429 = vmatprep.subr.bf16.mxu0 0
      %430 = vmatpush1.bf16.msra.mxu0 0
      %431 = vmatprep.subr.bf16.mxu0 0
      %432 = vmatpush1.bf16.msra.mxu0 0
      %433 = vmatprep.subr.bf16.mxu0 0
      %434 = vmatpush1.bf16.msra.mxu0 0
      %435 = vmatprep.mubr.bf16.mxu0 0
      %436 = vmatmul.mubr.bf16.gmra.mrb[0].mxu0 %v379
      %v437 = vpop.f32.mrb[0].mxu0
      %v438 = vadd.f32 0.0, %v437
      %v439 = vpop.f32.mrb[0].mxu0
      %v440 = vpop.f32.mrb[0].mxu0
      %v441 = vadd.f32 0.0, %v440
      %v442 = vpop.f32.mrb[0].mxu0
      %443 = vmatprep.mubr.bf16.mxu0 0
      %444 = vmatmul.mubr.bf16.gmra.mrb[0].mxu0 %v382
      %v445 = vpop.f32.mrb[0].mxu0
      %v446 = vadd.f32 0.0, %v445
      %v447 = vpop.f32.mrb[0].mxu0
      %v448 = vpop.f32.mrb[0].mxu0
      %v449 = vadd.f32 0.0, %v448
      %v450 = vpop.f32.mrb[0].mxu0
      %451 = vmatprep.mubr.bf16.mxu0 0
      %452 = vmatmul.mubr.bf16.gmra.mrb[0].mxu0 %v385
      %v453 = vpop.f32.mrb[0].mxu0
      %v454 = vadd.f32 0.0, %v453
      %v455 = vpop.f32.mrb[0].mxu0
      %v456 = vpop.f32.mrb[0].mxu0
      %v457 = vadd.f32 0.0, %v456
      %v458 = vpop.f32.mrb[0].mxu0
      %459 = vmatprep.mubr.bf16.mxu0 0
      %460 = vmatmul.mubr.bf16.gmra.mrb[0].mxu0 %v388
      %v461 = vpop.f32.mrb[0].mxu0
      %v462 = vadd.f32 0.0, %v461
      %v463 = vpop.f32.mrb[0].mxu0
      %v464 = vpop.f32.mrb[0].mxu0
      %v465 = vadd.f32 0.0, %v464
      %v466 = vpop.f32.mrb[0].mxu0
      %467 = vmatprep.mubr.bf16.mxu0 0
      %468 = vmatmul.mubr.bf16.gmra.mrb[0].mxu0 %v391
      %v469 = vpop.f32.mrb[0].mxu0
      %v470 = vadd.f32 0.0, %v469
      %v471 = vpop.f32.mrb[0].mxu0
      %v472 = vpop.f32.mrb[0].mxu0
      %v473 = vadd.f32 0.0, %v472
      %v474 = vpop.f32.mrb[0].mxu0
      %475 = vmatprep.mubr.bf16.mxu0 0
      %476 = vmatmul.mubr.bf16.gmra.mrb[0].mxu0 %v394
      %v477 = vpop.f32.mrb[0].mxu0
      %v478 = vadd.f32 0.0, %v477
      %v479 = vpop.f32.mrb[0].mxu0
      %v480 = vpop.f32.mrb[0].mxu0
      %v481 = vadd.f32 0.0, %v480
      %v482 = vpop.f32.mrb[0].mxu0
      %483 = vmatprep.mubr.bf16.mxu0 0
      %484 = vmatmul.mubr.bf16.gmra.mrb[0].mxu0 %v397
      %v485 = vpop.f32.mrb[0].mxu0
      %v486 = vadd.f32 0.0, %v485
      %v487 = vpop.f32.mrb[0].mxu0
      %v488 = vpop.f32.mrb[0].mxu0
      %v489 = vpop.f32.mrb[0].mxu0
      %490 = vdwg.mxu0
      %v491 = vadd.f32 %v330, %v438
      %v492 = vadd.f32 %v331, %v441
      %v493 = vadd.f32 %v332, %v446
      %v494 = vadd.f32 %v333, %v449
      %v495 = vadd.f32 %v334, %v454
      %v496 = vadd.f32 %v335, %v457
      %v497 = vadd.f32 %v336, %v462
      %v498 = vadd.f32 %v337, %v465
      %v499 = vadd.f32 %v338, %v470
      %v500 = vadd.f32 %v339, %v473
      %v501 = vadd.f32 %v340, %v478
      %v502 = vadd.f32 %v341, %v481
      %v503 = vadd.f32 %v342, %v486
      %504 = vst [vmem:[#allocation2] sm:$0xff] %v491
      %505 = vst [vmem:[#allocation2 + $0x8] sm:$0xff] %v492
      %506 = vst [vmem:[#allocation2 + $0x10] sm:$0xff] %v493
      %507 = vst [vmem:[#allocation2 + $0x18] sm:$0xff] %v494
      %508 = vst [vmem:[#allocation2 + $0x20] sm:$0xff] %v495
      %509 = vst [vmem:[#allocation2 + $0x28] sm:$0xff] %v496
      %510 = vst [vmem:[#allocation2 + $0x30] sm:$0xff] %v497
      %511 = vst [vmem:[#allocation2 + $0x38] sm:$0xff] %v498
      %512 = vst [vmem:[#allocation2 + $0x40] sm:$0xff] %v499
      %513 = vst [vmem:[#allocation2 + $0x48] sm:$0xff] %v500
      %514 = vst [vmem:[#allocation2 + $0x50] sm:$0xff] %v501
      %515 = vst [vmem:[#allocation2 + $0x58] sm:$0xff] %v502
      %516 = vst [vmem:[#allocation2 + $0x60] sm:$0xff] %v503
      %v517 = vld [vmem:[#allocation3] sm:$0xff]
      %v518 = vld [vmem:[#allocation3 + $0x8] sm:$0xff]
      %v519 = vld [vmem:[#allocation3 + $0x10] sm:$0xff]
      %v520 = vld [vmem:[#allocation3 + $0x18] sm:$0xff]
      %v521 = vld [vmem:[#allocation3 + $0x20] sm:$0xff]
      %v522 = vld [vmem:[#allocation3 + $0x28] sm:$0xff]
      %v523 = vld [vmem:[#allocation3 + $0x30] sm:$0xff]
      %v524 = vld [vmem:[#allocation3 + $0x38] sm:$0xff]
      %v525 = vld [vmem:[#allocation3 + $0x40] sm:$0xff]
      %v526 = vld [vmem:[#allocation3 + $0x48] sm:$0xff]
      %v527 = vld [vmem:[#allocation3 + $0x50] sm:$0xff]
      %v528 = vld [vmem:[#allocation3 + $0x58] sm:$0xff]
      %v529 = vld [vmem:[#allocation3 + $0x60] sm:$0xff]
      %v530 = vunpack.c.l.bf16 %v317
      %v531 = vunpack.c.l.bf16 %v318
      %v532 = vunpack.c.l.bf16 %v319
      %v533 = vunpack.c.l.bf16 %v320
      %v534 = vunpack.c.l.bf16 %v321
      %v535 = vunpack.c.l.bf16 %v322
      %v536 = vunpack.c.l.bf16 %v323
      %v537 = vunpack.c.l.bf16 %v324
      %v538 = vunpack.c.l.bf16 %v325
      %v539 = vunpack.c.l.bf16 %v326
      %v540 = vunpack.c.l.bf16 %v327
      %v541 = vunpack.c.l.bf16 %v328
      %v542 = vunpack.c.l.bf16 %v329
      %v543 = vmax.f32 %v517, %v530
      %v544 = vmax.f32 %v518, %v531
      %v545 = vmax.f32 %v519, %v532
      %v546 = vmax.f32 %v520, %v533
      %v547 = vmax.f32 %v521, %v534
      %v548 = vmax.f32 %v522, %v535
      %v549 = vmax.f32 %v523, %v536
      %v550 = vmax.f32 %v524, %v537
      %v551 = vmax.f32 %v525, %v538
      %v552 = vmax.f32 %v526, %v539
      %v553 = vmax.f32 %v527, %v540
      %v554 = vmax.f32 %v528, %v541
      %v555 = vmax.f32 %v529, %v542
      %556 = vst.msk [vmem:[#allocation3] sm:$0xff] %vm377, %v543
      %557 = vst.msk [vmem:[#allocation3 + $0x8] sm:$0xff] %vm377, %v544
      %558 = vst.msk [vmem:[#allocation3 + $0x10] sm:$0xff] %vm377, %v545
      %559 = vst.msk [vmem:[#allocation3 + $0x18] sm:$0xff] %vm377, %v546
      %560 = vst.msk [vmem:[#allocation3 + $0x20] sm:$0xff] %vm377, %v547
      %561 = vst.msk [vmem:[#allocation3 + $0x28] sm:$0xff] %vm377, %v548
      %562 = vst.msk [vmem:[#allocation3 + $0x30] sm:$0xff] %vm377, %v549
      %563 = vst.msk [vmem:[#allocation3 + $0x38] sm:$0xff] %vm377, %v550
      %564 = vst.msk [vmem:[#allocation3 + $0x40] sm:$0xff] %vm377, %v551
      %565 = vst.msk [vmem:[#allocation3 + $0x48] sm:$0xff] %vm377, %v552
      %566 = vst.msk [vmem:[#allocation3 + $0x50] sm:$0xff] %vm377, %v553
      %567 = vst.msk [vmem:[#allocation3 + $0x58] sm:$0xff] %vm377, %v554
      %568 = vst.msk [vmem:[#allocation3 + $0x60] sm:$0xff] %vm377, %v555
      %p569 = scmp.eq.s32.totalorder %s22, 8
      // Predicated region
      $region41: #{mixed6a_forward.4} parent=35 // pred_check
        %p570 = pneg %p569
      $region42: #{mixed6a_forward.4} parent=35 // pred_check_branch
        %572 = sbr.rel (%p570) target = $region44
      $region43: #{mixed6a_forward.4} parent=35 // pred_region
        %v573 = vld [vmem:[#allocation2] sm:$0xff]
        %v574 = vld [vmem:[#allocation2 + $0x8] sm:$0xff]
        %v575 = vld [vmem:[#allocation2 + $0x10] sm:$0xff]
        %v576 = vld [vmem:[#allocation2 + $0x18] sm:$0xff]
        %v577 = vld [vmem:[#allocation2 + $0x20] sm:$0xff]
        %v578 = vld [vmem:[#allocation2 + $0x28] sm:$0xff]
        %v579 = vld [vmem:[#allocation2 + $0x30] sm:$0xff]
        %v580 = vld [vmem:[#allocation2 + $0x38] sm:$0xff]
        %v581 = vld [vmem:[#allocation2 + $0x40] sm:$0xff]
        %v582 = vld [vmem:[#allocation2 + $0x48] sm:$0xff]
        %v583 = vld [vmem:[#allocation2 + $0x50] sm:$0xff]
        %v584 = vld [vmem:[#allocation2 + $0x58] sm:$0xff]
        %v585 = vld [vmem:[#allocation2 + $0x60] sm:$0xff]
        %v586 = vld [vmem:[%s2] sm:$0x1]
        %v588 = vlaneseq
        %v589 = vshrl.u32 %v588, 7
        %v590 = vsub.s32 0, %v589
        %v591 = vrot.slane %v586, %v590
        %v593 = vmul.f32 %v573, %v591
        %v594 = vmul.f32 %v574, %v591
        %v595 = vmul.f32 %v575, %v591
        %v596 = vmul.f32 %v576, %v591
        %v597 = vmul.f32 %v577, %v591
        %v598 = vmul.f32 %v578, %v591
        %v599 = vmul.f32 %v579, %v591
        %v600 = vmul.f32 %v580, %v591
        %v601 = vmul.f32 %v581, %v591
        %v602 = vmul.f32 %v582, %v591
        %v603 = vmul.f32 %v583, %v591
        %v604 = vmul.f32 %v584, %v591
        %v605 = vmul.f32 %v585, %v591
        %v606 = vld [vmem:[%s3] sm:$0x1]
        %v608 = vlaneseq
        %v609 = vshrl.u32 %v608, 7
        %v610 = vsub.s32 0, %v609
        %v611 = vrot.slane %v606, %v610
        %v613 = vadd.f32 %v593, %v611
        %v614 = vadd.f32 %v594, %v611
        %v615 = vadd.f32 %v595, %v611
        %v616 = vadd.f32 %v596, %v611
        %v617 = vadd.f32 %v597, %v611
        %v618 = vadd.f32 %v598, %v611
        %v619 = vadd.f32 %v599, %v611
        %v620 = vadd.f32 %v600, %v611
        %v621 = vadd.f32 %v601, %v611
        %v622 = vadd.f32 %v602, %v611
        %v623 = vadd.f32 %v603, %v611
        %v624 = vadd.f32 %v604, %v611
        %v625 = vadd.f32 %v605, %v611
        %v626 = vmax.f32 %v613, 0.0
        %v627 = vmax.f32 %v614, 0.0
        %v628 = vmax.f32 %v615, 0.0
        %v629 = vmax.f32 %v616, 0.0
        %v630 = vmax.f32 %v617, 0.0
        %v631 = vmax.f32 %v618, 0.0
        %v632 = vmax.f32 %v619, 0.0
        %v633 = vmax.f32 %v620, 0.0
        %v634 = vmax.f32 %v621, 0.0
        %v635 = vmax.f32 %v622, 0.0
        %v636 = vmax.f32 %v623, 0.0
        %v637 = vmax.f32 %v624, 0.0
        %v638 = vmax.f32 %v625, 0.0
        %639 = vst [vmem:[%s277] sm:$0xff] %v626
        %640 = vst [vmem:[%s277 + $0x8] sm:$0xff] %v627
        %641 = vst [vmem:[%s277 + $0x10] sm:$0xff] %v628
        %642 = vst [vmem:[%s277 + $0x18] sm:$0xff] %v629
        %643 = vst [vmem:[%s277 + $0x20] sm:$0xff] %v630
        %644 = vst [vmem:[%s277 + $0x28] sm:$0xff] %v631
        %645 = vst [vmem:[%s277 + $0x30] sm:$0xff] %v632
        %646 = vst [vmem:[%s277 + $0x38] sm:$0xff] %v633
        %647 = vst [vmem:[%s277 + $0x40] sm:$0xff] %v634
        %648 = vst [vmem:[%s277 + $0x48] sm:$0xff] %v635
        %649 = vst [vmem:[%s277 + $0x50] sm:$0xff] %v636
        %650 = vst [vmem:[%s277 + $0x58] sm:$0xff] %v637
        %651 = vst [vmem:[%s277 + $0x60] sm:$0xff] %v638
        %v652 = vld [vmem:[#allocation3] sm:$0xff]
        %v653 = vld [vmem:[#allocation3 + $0x8] sm:$0xff]
        %v654 = vld [vmem:[#allocation3 + $0x10] sm:$0xff]
        %v655 = vld [vmem:[#allocation3 + $0x18] sm:$0xff]
        %v656 = vld [vmem:[#allocation3 + $0x20] sm:$0xff]
        %v657 = vld [vmem:[#allocation3 + $0x28] sm:$0xff]
        %v658 = vld [vmem:[#allocation3 + $0x30] sm:$0xff]
        %v659 = vld [vmem:[#allocation3 + $0x38] sm:$0xff]
        %v660 = vld [vmem:[#allocation3 + $0x40] sm:$0xff]
        %v661 = vld [vmem:[#allocation3 + $0x48] sm:$0xff]
        %v662 = vld [vmem:[#allocation3 + $0x50] sm:$0xff]
        %v663 = vld [vmem:[#allocation3 + $0x58] sm:$0xff]
        %v664 = vld [vmem:[#allocation3 + $0x60] sm:$0xff]
        %665 = vst.msk [vmem:[%s283] sm:$0xff] %vm377, %v652
        %666 = vst.msk [vmem:[%s283 + $0x8] sm:$0xff] %vm377, %v653
        %667 = vst.msk [vmem:[%s283 + $0x10] sm:$0xff] %vm377, %v654
        %668 = vst.msk [vmem:[%s283 + $0x18] sm:$0xff] %vm377, %v655
        %669 = vst.msk [vmem:[%s283 + $0x20] sm:$0xff] %vm377, %v656
        %670 = vst.msk [vmem:[%s283 + $0x28] sm:$0xff] %vm377, %v657
        %671 = vst.msk [vmem:[%s283 + $0x30] sm:$0xff] %vm377, %v658
        %672 = vst.msk [vmem:[%s283 + $0x38] sm:$0xff] %vm377, %v659
        %673 = vst.msk [vmem:[%s283 + $0x40] sm:$0xff] %vm377, %v660
        %674 = vst.msk [vmem:[%s283 + $0x48] sm:$0xff] %vm377, %v661
        %675 = vst.msk [vmem:[%s283 + $0x50] sm:$0xff] %vm377, %v662
        %676 = vst.msk [vmem:[%s283 + $0x58] sm:$0xff] %vm377, %v663
        %677 = vst.msk [vmem:[%s283 + $0x60] sm:$0xff] %vm377, %v664
      $region44: #{mixed6a_forward.4} parent=35 // pred_fallthru
        _
      %s678 = smul.u32 13, %s21
      %p679 = scmp.lt.s32.totalorder %s678, 12
      %s680 = scalar_select %p679, %s678, 12
      %s681 = smul.addr %s680, 8
      %s682 = scalar_lea.vmem %s4, %s681
      %s683 = smul.u32 13, %s21
      %p684 = scmp.lt.s32.totalorder %s683, 12
      %s685 = scalar_select %p684, %s683, 12
      %s686 = smul.addr %s685, 8
      %s687 = scalar_lea.vmem %s5, %s686
      // Predicated region
      $region45: #{mixed6a_forward.4} parent=35 // pred_check
        %p688 = pneg %p143
      $region46: #{mixed6a_forward.4} parent=35 // pred_check_branch
        %690 = sbr.rel (%p688) target = $region48
      $region47: #{mixed6a_forward.4} parent=35 // pred_region
        %s691 = smul.u32 13, %s21
      $region48: #{mixed6a_forward.4} parent=35 // pred_fallthru
        _
      // Predicated region
      $region49: #{mixed6a_forward.4} parent=35 // pred_check
        %p692 = pneg %p169
      $region50: #{mixed6a_forward.4} parent=35 // pred_check_branch
        %694 = sbr.rel (%p692) target = $region52
      $region51: #{mixed6a_forward.4} parent=35 // pred_region
        %s695 = smul.u32 13, %s21
      $region52: #{mixed6a_forward.4} parent=35 // pred_fallthru
        _
      // Predicated region
      $region53: #{mixed6a_forward.4} parent=35 // pred_check
        %p696 = pneg %p143
      $region54: #{mixed6a_forward.4} parent=35 // pred_check_branch
        %698 = sbr.rel (%p696) target = $region56
      $region55: #{mixed6a_forward.4} parent=35 // pred_region
        %s699 = smul.u32 13, %s21
        %p700 = scmp.lt.s32.totalorder %s699, 12
        %s701 = scalar_select %p700, %s699, 12
        %s702 = smul.addr %s701, 8
        %s703 = scalar_lea.vmem %s4, %s702
      $region56: #{mixed6a_forward.4} parent=35 // pred_fallthru
        _
      // Predicated region
      $region57: #{mixed6a_forward.4} parent=35 // pred_check
        %p704 = pneg %p169
      $region58: #{mixed6a_forward.4} parent=35 // pred_check_branch
        %706 = sbr.rel (%p704) target = $region60
      $region59: #{mixed6a_forward.4} parent=35 // pred_region
        %s707 = smul.u32 13, %s21
        %p708 = scmp.lt.s32.totalorder %s707, 12
        %s709 = scalar_select %p708, %s707, 12
        %s710 = smul.addr %s709, 8
        %s711 = scalar_lea.vmem %s5, %s710
      $region60: #{mixed6a_forward.4} parent=35 // pred_fallthru
        _
    $region36: #{mixed6a_forward.4} parent=5 // pred_fallthru
      _
    %p712 = scmp.le.s32.totalorder 2, %s12
    // Predicated region
    $region61: #{mixed6a_forward.4} parent=5 // pred_check
      %p713 = pneg %p712
    $region62: #{mixed6a_forward.4} parent=5 // pred_check_branch
      %715 = sbr.rel (%p713) target = $region64
    $region63: #{mixed6a_forward.4} parent=5 // pred_region
      %s716 = ssub.s32 %s12, 2
    $region64: #{mixed6a_forward.4} parent=5 // pred_fallthru
      _
  $region6: #{mixed6a_forward.4} parent=0 // loop_footer
    %s16 = sadd.s32 1, %s12
  $region7: #{mixed6a_forward.4} parent=0 // loop_footer_branch
    %11 = sbr.rel target = $region3
  $region8: #{mixed6a_forward.4} parent=0 // loop_exit
    _

</llo_original>
